<compile_context>
chip_gen: v7x
topology: tpu7x:2x2x1
jax: 0.10.0
libtpu: 0.0.40
codegen_flags: <defaults>
</compile_context>

<pallas_src>
import functools

import numpy as np
import jax
import jax.numpy as jnp
from jax import lax
from jax.experimental import pallas as pl
from jax.experimental.pallas import tpu as pltpu


# ----------------------------------------------------------------------------
# Fused GLCN kernel
# ----------------------------------------------------------------------------
def _glcn_fused_kernel(box_num_ref,                      # scalar prefetch (SMEM)
                       x_ref, rel_ref, adj_ref,
                       alpha_w_ref, gl_proj_ref, lw_ref,
                       *rest,
                       num_layers, batch_tile, n_nodes,
                       negative_slope, compute_dtype):
    Bt, N = batch_tile, n_nodes
    layer_refs = rest[:5 * num_layers]
    newx_ref = rest[5 * num_layers]
    soft_ref = rest[5 * num_layers + 1]

    f32 = jnp.float32

    def mm(a, b):
        # MXU matmul; bf16 operands (native fast path on all TPU gens), f32 accumulate.
        return jnp.dot(a.astype(compute_dtype), b.astype(compute_dtype),
                       preferred_element_type=f32)

    Din0 = x_ref.shape[-1]
    F = rel_ref.shape[-1]
    L = gl_proj_ref.shape[-1]

    x2 = x_ref[...].reshape(Bt * N, Din0)          # batch folded into MXU M dim
    rel2 = rel_ref[...].reshape(Bt * N * N, F)

    # ---- alpha_transform: Linear(6, in_dim, bias=False), fused in ----------
    alpha2 = mm(rel2, alpha_w_ref[...])            # (Bt*N*N, Din0)  one matmul

    # ---- GraphLearningLayer (kept in f32: feeds exp / row normalization) ---
    xh2 = jnp.dot(x2, gl_proj_ref[...], preferred_element_type=f32)   # (Bt*N, L)
    xh3 = xh2.reshape(Bt, N, L)
    lw_sum = lw_ref[0, L]                          # sum(learn_w), precomputed in wrapper
    base = pl.program_id(0) * Bt
    ii = lax.broadcasted_iota(jnp.int32, (N, N), 0)
    jj = lax.broadcasted_iota(jnp.int32, (N, N), 1)

    for tb in range(Bt):                           # per-item (N,N) work (VPU-only)
        xh_b = xh3[tb]                             # (N, L)
        xh_bt = xh_b.T                             # (L, N)
        # Chunked L1 distance: intermediates stay at (N,N); no (N,N,L) tensor.
        dist = jnp.zeros((N, N), f32)
        for d in range(L):
            dist = dist + lw_ref[0, d] * jnp.abs(xh_b[:, d:d + 1] - xh_bt[d:d + 1, :])
        # dynamic box mask: adds -1 per channel (== -sum(lw)) where not(i<bn and j<bn)
        bn = box_num_ref[base + tb]
        invalid = jnp.logical_or(ii >= bn, jj >= bn)
        dist = jnp.where(invalid, dist - lw_sum, dist)

        out = jnp.where(dist >= 0, dist, negative_slope * dist)     # leaky_relu
        out = out - jnp.max(out, axis=-1, keepdims=True)
        sa = adj_ref[tb] * jnp.exp(out)
        soft_ref[tb] = sa / jnp.sum(sa, axis=-1, keepdims=True) + 1e-10

    adj_m = adj_ref[...] * soft_ref[...]           # (Bt, N, N): adjacency for the GCNs
    adj_m4 = adj_m[:, :, :, None]

    # ---- num_layers fused GCNLayers; H / alpha never leave VMEM ------------
    cur_x2 = x2                                    # (Bt*N, D)
    cur_alpha2 = alpha2                            # (Bt*N*N, D)
    for li in range(num_layers):
        wvi_ref, wvj_ref, bias_ref, wnode_ref, walpha_ref = \
            layer_refs[5 * li:5 * li + 5]
        Din = cur_x2.shape[-1]

        xi = mm(cur_x2, wvi_ref[...])              # (Bt*N, Din)
        xj = mm(cur_x2, wvj_ref[...])              # (Bt*N, Din)
        xi4 = xi.reshape(Bt, N, Din)[:, :, None, :]
        xj4 = xj.reshape(Bt, N, Din)[:, None, :, :]
        H4 = jnp.maximum(xi4 + xj4 + cur_alpha2.reshape(Bt, N, N, Din)
                         + bias_ref[...], 0.0)     # (Bt, N, N, Din)

        # AH[b,i,:] = sum_j adj_m[b,i,j] * H[b,i,j,:]   (VPU mul + sublane reduce)
        AH = jnp.sum(adj_m4 * H4, axis=2)          # (Bt, N, Din)
        cur_x2 = jnp.maximum(
            mm(AH.reshape(Bt * N, Din), wnode_ref[...]), 0.0)        # (Bt*N, Dout)

        if li + 1 < num_layers:
            # ONE (Bt*N*N, Din)@(Din, Dout) matmul; the last layer's new_alpha is
            # unused by GLCN.forward and is skipped.
            cur_alpha2 = jnp.maximum(
                mm(H4.reshape(Bt * N * N, Din), walpha_ref[...]), 0.0)

    newx_ref[...] = cur_x2.reshape(Bt, N, cur_x2.shape[-1])


# ----------------------------------------------------------------------------
# Wrapper
# ----------------------------------------------------------------------------
def _pick_batch_tile(B, N, max_width):
    """Batch items folded per grid step: fill MXU rows, bounded by a VMEM budget."""
    bt = max(1, min(B, max(1, 256 // max(N, 1))))
    # crude f32 per-item estimate: rel (lane-padded) + alpha + H + new_alpha + adj/dist
    per_item_bytes = N * N * (128 + 3 * max_width + 16) * 4
    budget = 20 * 1024 * 1024
    while bt > 1 and bt * per_item_bytes > budget:
        bt -= 1
    while B % bt != 0:
        bt -= 1
    return bt


def glcn_forward(params, x, rel_features, adj, box_num, *,
                 compute_dtype=jnp.bfloat16, batch_tile=None):
    B, N, Din = x.shape
    F = rel_features.shape[-1]
    L = params["gl_proj"].shape[1]
    num_layers = len(params["gcn"])
    Dout = params["gcn"][-1]["w_node"].shape[1]

    widths = [Din] + [p["w_node"].shape[1] for p in params["gcn"]]
    Bt = batch_tile if batch_tile is not None else _pick_batch_tile(B, N, max(widths))
    assert B % Bt == 0

    rel2 = rel_features.reshape(B, N * N, F)
    learn_w = params["gl_learn_w"].reshape(1, L).astype(jnp.float32)
    # append sum(learn_w) so the kernel never re-reduces it (hoisted XLU reduce)
    lw_ext = jnp.concatenate([learn_w, jnp.sum(learn_w, axis=1, keepdims=True)], axis=1)
    box_num_flat = box_num.reshape(B).astype(jnp.int32)

    flat_w, w_specs = [], []
    for p in params["gcn"]:
        d_in = p["w_vi"].shape[0]
        d_out = p["w_node"].shape[1]
        flat_w += [p["w_vi"], p["w_vj"], p["bias_h"].reshape(1, d_in),
                   p["w_node"], p["w_alpha"]]
        w_specs += [pl.BlockSpec((d_in, d_in), lambda t, bn: (0, 0)),
                    pl.BlockSpec((d_in, d_in), lambda t, bn: (0, 0)),
                    pl.BlockSpec((1, d_in), lambda t, bn: (0, 0)),
                    pl.BlockSpec((d_in, d_out), lambda t, bn: (0, 0)),
                    pl.BlockSpec((d_in, d_out), lambda t, bn: (0, 0))]

    grid_spec = pltpu.PrefetchScalarGridSpec(
        num_scalar_prefetch=1,
        grid=(B // Bt,),
        in_specs=[
            pl.BlockSpec((Bt, N, Din), lambda t, bn: (t, 0, 0)),      # x
            pl.BlockSpec((Bt, N * N, F), lambda t, bn: (t, 0, 0)),    # rel_features
            pl.BlockSpec((Bt, N, N), lambda t, bn: (t, 0, 0)),        # adj
            pl.BlockSpec((F, Din), lambda t, bn: (0, 0)),             # alpha_w
            pl.BlockSpec((Din, L), lambda t, bn: (0, 0)),             # gl projection
            pl.BlockSpec((1, L + 1), lambda t, bn: (0, 0)),           # learn_w (+sum)
        ] + w_specs,
        out_specs=(
            pl.BlockSpec((Bt, N, Dout), lambda t, bn: (t, 0, 0)),     # new_x
            pl.BlockSpec((Bt, N, N), lambda t, bn: (t, 0, 0)),        # soft_adj
        ),
    )
    kernel = functools.partial(
        _glcn_fused_kernel, num_layers=num_layers, batch_tile=Bt, n_nodes=N,
        negative_slope=0.01, compute_dtype=compute_dtype)

    new_x, soft_adj = pl.pallas_call(
        kernel,
        out_shape=(jax.ShapeDtypeStruct((B, N, Dout), jnp.float32),
                   jax.ShapeDtypeStruct((B, N, N), jnp.float32)),
        grid_spec=grid_spec,
        compiler_params=pltpu.CompilerParams(
            dimension_semantics=("parallel",),
            vmem_limit_bytes=32 * 1024 * 1024),
    )(box_num_flat, x, rel2, adj,
      params["alpha_w"], params["gl_proj"], lw_ext, *flat_w)

    gl_loss = None   # training-only branch (eval mode replicated)
    return new_x, soft_adj, gl_loss


# ----------------------------------------------------------------------------
# Deterministic parameter initialization (shapes from GLCN.__init__)
# ----------------------------------------------------------------------------
def init_params(key, in_dim, out_dim, learning_dim, num_layers=2):
    keys = jax.random.split(key, 3 + 5 * num_layers)

    def ku(k, shape, fan_in):  # kaiming_uniform(a=sqrt(5)) bound == 1/sqrt(fan_in)
        b = 1.0 / jnp.sqrt(jnp.float32(fan_in))
        return jax.random.uniform(k, shape, jnp.float32, -b, b)

    params = {
        "alpha_w": ku(keys[0], (6, in_dim), 6),                  # Linear(6, in_dim).weight.T
        "gl_proj": ku(keys[1], (in_dim, learning_dim), in_dim),  # Linear(in, learn).weight.T
        "gl_learn_w": jax.random.uniform(keys[2], (learning_dim,), jnp.float32, 0.0, 1.0),
        "gcn": [],
    }
    dims = []
    din, dout = in_dim, out_dim
    for _ in range(num_layers):
        dims.append((din, dout))
        din, dout = dout, dout
    idx = 3
    for (d_in, d_out) in dims:
        params["gcn"].append({
            "w_alpha": ku(keys[idx + 0], (d_in, d_out), d_in),
            "w_vi":    ku(keys[idx + 1], (d_in, d_in), d_in),
            "w_vj":    ku(keys[idx + 2], (d_in, d_in), d_in),
            "bias_h":  jax.random.uniform(keys[idx + 3], (d_in,), jnp.float32, 0.0, 1.0),
            "w_node":  ku(keys[idx + 4], (d_in, d_out), d_in),
        })
        idx += 5
    return params


# ----------------------------------------------------------------------------
# Pure numpy reference (mirrors the PyTorch math, f32)
# ----------------------------------------------------------------------------
def reference_forward(params, x, rel, adj, box_num):
    x = np.asarray(x); rel = np.asarray(rel); adj = np.asarray(adj)
    bn = np.asarray(box_num)
    alpha = rel @ np.asarray(params["alpha_w"])
    xh = x @ np.asarray(params["gl_proj"])
    lw = np.asarray(params["gl_learn_w"])
    B, N, L = xh.shape
    diff = np.abs(xh[:, :, None, :] - xh[:, None, :, :])
    ii = np.arange(N)[None, :, None]
    jj = np.arange(N)[None, None, :]
    valid = (ii < bn[:, None, None]) & (jj < bn[:, None, None])
    mask = np.where(valid, 0.0, -1.0)[..., None]
    dist = np.einsum('bijd,d->bij', diff + mask, lw)
    out = np.where(dist >= 0, dist, 0.01 * dist)
    out = out - out.max(-1, keepdims=True)
    sa = adj * np.exp(out)
    soft = sa / sa.sum(-1, keepdims=True) + 1e-10
    adj_m = adj * soft
    xx, al = x, alpha
    for p in params["gcn"]:
        xi = xx @ np.asarray(p["w_vi"])
        xj = xx @ np.asarray(p["w_vj"])
        H = np.maximum(xi[:, :, None, :] + xj[:, None, :, :] + al
                       + np.asarray(p["bias_h"]), 0.0)
        AH = np.einsum('bij,bijd->bid', adj_m, H)
        xx = np.maximum(AH @ np.asarray(p["w_node"]), 0.0)
        al = np.maximum(H @ np.asarray(p["w_alpha"]), 0.0)
    return xx, soft


if __name__ == "__main__":
    B, N = 2, 8
    in_dim, out_dim, learning_dim = 32, 16, 16

    key = jax.random.PRNGKey(0)
    kx, krel, kp = jax.random.split(key, 3)
    x = jax.random.normal(kx, (B, N, in_dim), jnp.float32)
    rel_features = jax.random.normal(krel, (B, N, N, 6), jnp.float32)
    adj = jnp.ones((B, N, N), jnp.float32)           # fully-connected adjacency
    box_num = jnp.array([N, N - 2], jnp.int32)       # flat (B,) box counts

    params = init_params(kp, in_dim, out_dim, learning_dim, num_layers=2)

    new_x, soft_adj, gl_loss = glcn_forward(params, x, rel_features, adj, box_num)
    jax.block_until_ready((new_x, soft_adj))

    ref_x, ref_soft = reference_forward(params, x, rel_features, adj, box_num)
    # soft_adj path is f32 in-kernel -> tight; new_x uses bf16 MXU operands
    # (f32 accumulation) per the perf review -> slightly wider tolerance.
    np.testing.assert_allclose(np.asarray(soft_adj), ref_soft, rtol=2e-2, atol=2e-2)
    np.testing.assert_allclose(np.asarray(new_x), ref_x, rtol=5e-2, atol=5e-2)

    print("KERNEL_OK")
</pallas_src>

<mosaic_0001>
module attributes {stable_mosaic.version = 11 : i64} {
  func.func @_glcn_fused_kernel(%arg0: i32, %arg1: memref<2xi32, #tpu.memory_space<smem>>, %arg2: memref<2x8x32xf32, #tpu.memory_space<vmem>>, %arg3: memref<2x64x6xf32, #tpu.memory_space<vmem>>, %arg4: memref<2x8x8xf32, #tpu.memory_space<vmem>>, %arg5: memref<6x32xf32, #tpu.memory_space<vmem>>, %arg6: memref<32x16xf32, #tpu.memory_space<vmem>>, %arg7: memref<1x17xf32, #tpu.memory_space<vmem>>, %arg8: memref<32x32xf32, #tpu.memory_space<vmem>>, %arg9: memref<32x32xf32, #tpu.memory_space<vmem>>, %arg10: memref<1x32xf32, #tpu.memory_space<vmem>>, %arg11: memref<32x16xf32, #tpu.memory_space<vmem>>, %arg12: memref<32x16xf32, #tpu.memory_space<vmem>>, %arg13: memref<16x16xf32, #tpu.memory_space<vmem>>, %arg14: memref<16x16xf32, #tpu.memory_space<vmem>>, %arg15: memref<1x16xf32, #tpu.memory_space<vmem>>, %arg16: memref<16x16xf32, #tpu.memory_space<vmem>>, %arg17: memref<16x16xf32, #tpu.memory_space<vmem>>, %arg18: memref<2x8x16xf32, #tpu.memory_space<vmem>>, %arg19: memref<2x8x8xf32, #tpu.memory_space<vmem>>) attributes {dimension_semantics = [#tpu.dimension_semantics<parallel>], iteration_bounds = array<i64: 1>, scalar_prefetch = 1 : i64, scratch_operands = 0 : i64, tpu.core_type = #tpu.core_type<tc>, window_params = [{transform_indices = @transform_0, window_bounds = array<i64: 2, 8, 32>}, {transform_indices = @transform_1, window_bounds = array<i64: 2, 64, 6>}, {transform_indices = @transform_2, window_bounds = array<i64: 2, 8, 8>}, {pipeline_mode = #tpu.pipeline_mode<synchronous>, transform_indices = @transform_3, window_bounds = array<i64: 6, 32>}, {pipeline_mode = #tpu.pipeline_mode<synchronous>, transform_indices = @transform_4, window_bounds = array<i64: 32, 16>}, {pipeline_mode = #tpu.pipeline_mode<synchronous>, transform_indices = @transform_5, window_bounds = array<i64: 1, 17>}, {pipeline_mode = #tpu.pipeline_mode<synchronous>, transform_indices = @transform_6, window_bounds = array<i64: 32, 32>}, {pipeline_mode = #tpu.pipeline_mode<synchronous>, transform_indices = @transform_7, window_bounds = array<i64: 32, 32>}, {pipeline_mode = #tpu.pipeline_mode<synchronous>, transform_indices = @transform_8, window_bounds = array<i64: 1, 32>}, {pipeline_mode = #tpu.pipeline_mode<synchronous>, transform_indices = @transform_9, window_bounds = array<i64: 32, 16>}, {pipeline_mode = #tpu.pipeline_mode<synchronous>, transform_indices = @transform_10, window_bounds = array<i64: 32, 16>}, {pipeline_mode = #tpu.pipeline_mode<synchronous>, transform_indices = @transform_11, window_bounds = array<i64: 16, 16>}, {pipeline_mode = #tpu.pipeline_mode<synchronous>, transform_indices = @transform_12, window_bounds = array<i64: 16, 16>}, {pipeline_mode = #tpu.pipeline_mode<synchronous>, transform_indices = @transform_13, window_bounds = array<i64: 1, 16>}, {pipeline_mode = #tpu.pipeline_mode<synchronous>, transform_indices = @transform_14, window_bounds = array<i64: 16, 16>}, {pipeline_mode = #tpu.pipeline_mode<synchronous>, transform_indices = @transform_15, window_bounds = array<i64: 16, 16>}, {transform_indices = @transform_16, window_bounds = array<i64: 2, 8, 16>}, {transform_indices = @transform_17, window_bounds = array<i64: 2, 8, 8>}]} {
    %c0 = arith.constant 0 : index
    %c0_0 = arith.constant 0 : index
    %c0_1 = arith.constant 0 : index
    %0 = vector.load %arg2[%c0, %c0_0, %c0_1] : memref<2x8x32xf32, #tpu.memory_space<vmem>>, vector<2x8x32xf32>
    %1 = vector.shape_cast %0 : vector<2x8x32xf32> to vector<16x32xf32>
    %c0_2 = arith.constant 0 : index
    %c0_3 = arith.constant 0 : index
    %c0_4 = arith.constant 0 : index
    %2 = vector.load %arg3[%c0_2, %c0_3, %c0_4] : memref<2x64x6xf32, #tpu.memory_space<vmem>>, vector<2x64x6xf32>
    %3 = vector.shape_cast %2 : vector<2x64x6xf32> to vector<128x6xf32>
    %c0_5 = arith.constant 0 : index
    %c0_6 = arith.constant 0 : index
    %4 = vector.load %arg5[%c0_5, %c0_6] : memref<6x32xf32, #tpu.memory_space<vmem>>, vector<6x32xf32>
    %5 = arith.truncf %3 : vector<128x6xf32> to vector<128x6xbf16>
    %6 = arith.truncf %4 : vector<6x32xf32> to vector<6x32xbf16>
    %cst = arith.constant dense<0.000000e+00> : vector<128x32xf32>
    %7 = tpu.matmul %5, %6, %cst {dimension_numbers = #tpu.dot_dimension_numbers<[1], [0], [0], [1], [0, 0, 1, 1], [], []>} : vector<128x6xbf16>, vector<6x32xbf16>, vector<128x32xf32> -> vector<128x32xf32>
    %c0_7 = arith.constant 0 : index
    %c0_8 = arith.constant 0 : index
    %8 = vector.load %arg6[%c0_7, %c0_8] : memref<32x16xf32, #tpu.memory_space<vmem>>, vector<32x16xf32>
    %cst_9 = arith.constant dense<0.000000e+00> : vector<16x16xf32>
    %9 = tpu.matmul %1, %8, %cst_9 {dimension_numbers = #tpu.dot_dimension_numbers<[1], [0], [0], [1], [0, 0, 1, 1], [], []>} : vector<16x32xf32>, vector<32x16xf32>, vector<16x16xf32> -> vector<16x16xf32>
    %10 = vector.shape_cast %9 : vector<16x16xf32> to vector<2x8x16xf32>
    %c0_10 = arith.constant 0 : index
    %c16 = arith.constant 16 : index
    %11 = vector.load %arg7[%c0_10, %c16] : memref<1x17xf32, #tpu.memory_space<vmem>>, vector<1x1xf32>
    %12 = vector.extract %11[0, 0] : f32 from vector<1x1xf32>
    %c2_i32 = arith.constant 2 : i32
    %13 = arith.muli %arg0, %c2_i32 : i32
    %14 = tpu.iota {dimensions = array<i32: 0>} : vector<8x8xi32>
    %15 = tpu.iota {dimensions = array<i32: 1>} : vector<8x8xi32>
    %16 = vector.extract_strided_slice %10 {offsets = [0, 0, 0], sizes = [1, 8, 16], strides = [1, 1, 1]} : vector<2x8x16xf32> to vector<1x8x16xf32>
    %17 = vector.shape_cast %16 : vector<1x8x16xf32> to vector<8x16xf32>
    %18 = tpu.transpose %17, [1, 0] : vector<8x16xf32> -> vector<16x8xf32>
    %cst_11 = arith.constant 0.000000e+00 : f32
    %19 = vector.broadcast %cst_11 : f32 to vector<8x8xf32>
    %c0_12 = arith.constant 0 : index
    %c0_13 = arith.constant 0 : index
    %20 = vector.load %arg7[%c0_12, %c0_13] : memref<1x17xf32, #tpu.memory_space<vmem>>, vector<1x1xf32>
    %21 = vector.extract %20[0, 0] : f32 from vector<1x1xf32>
    %22 = vector.extract_strided_slice %17 {offsets = [0, 0], sizes = [8, 1], strides = [1, 1]} : vector<8x16xf32> to vector<8x1xf32>
    %23 = vector.extract_strided_slice %18 {offsets = [0, 0], sizes = [1, 8], strides = [1, 1]} : vector<16x8xf32> to vector<1x8xf32>
    %24 = vector.broadcast %22 : vector<8x1xf32> to vector<8x8xf32>
    %25 = vector.broadcast %23 : vector<1x8xf32> to vector<8x8xf32>
    %26 = arith.subf %24, %25 : vector<8x8xf32>
    %27 = math.absf %26 : vector<8x8xf32>
    %28 = vector.broadcast %21 : f32 to vector<8x8xf32>
    %29 = arith.mulf %28, %27 : vector<8x8xf32>
    %30 = arith.addf %19, %29 : vector<8x8xf32>
    %c0_14 = arith.constant 0 : index
    %c1 = arith.constant 1 : index
    %31 = vector.load %arg7[%c0_14, %c1] : memref<1x17xf32, #tpu.memory_space<vmem>>, vector<1x1xf32>
    %32 = vector.extract %31[0, 0] : f32 from vector<1x1xf32>
    %33 = vector.extract_strided_slice %17 {offsets = [0, 1], sizes = [8, 1], strides = [1, 1]} : vector<8x16xf32> to vector<8x1xf32>
    %34 = vector.extract_strided_slice %18 {offsets = [1, 0], sizes = [1, 8], strides = [1, 1]} : vector<16x8xf32> to vector<1x8xf32>
    %35 = vector.broadcast %33 : vector<8x1xf32> to vector<8x8xf32>
    %36 = vector.broadcast %34 : vector<1x8xf32> to vector<8x8xf32>
    %37 = arith.subf %35, %36 : vector<8x8xf32>
    %38 = math.absf %37 : vector<8x8xf32>
    %39 = vector.broadcast %32 : f32 to vector<8x8xf32>
    %40 = arith.mulf %39, %38 : vector<8x8xf32>
    %41 = arith.addf %30, %40 : vector<8x8xf32>
    %c0_15 = arith.constant 0 : index
    %c2 = arith.constant 2 : index
    %42 = vector.load %arg7[%c0_15, %c2] : memref<1x17xf32, #tpu.memory_space<vmem>>, vector<1x1xf32>
    %43 = vector.extract %42[0, 0] : f32 from vector<1x1xf32>
    %44 = vector.extract_strided_slice %17 {offsets = [0, 2], sizes = [8, 1], strides = [1, 1]} : vector<8x16xf32> to vector<8x1xf32>
    %45 = vector.extract_strided_slice %18 {offsets = [2, 0], sizes = [1, 8], strides = [1, 1]} : vector<16x8xf32> to vector<1x8xf32>
    %46 = vector.broadcast %44 : vector<8x1xf32> to vector<8x8xf32>
    %47 = vector.broadcast %45 : vector<1x8xf32> to vector<8x8xf32>
    %48 = arith.subf %46, %47 : vector<8x8xf32>
    %49 = math.absf %48 : vector<8x8xf32>
    %50 = vector.broadcast %43 : f32 to vector<8x8xf32>
    %51 = arith.mulf %50, %49 : vector<8x8xf32>
    %52 = arith.addf %41, %51 : vector<8x8xf32>
    %c0_16 = arith.constant 0 : index
    %c3 = arith.constant 3 : index
    %53 = vector.load %arg7[%c0_16, %c3] : memref<1x17xf32, #tpu.memory_space<vmem>>, vector<1x1xf32>
    %54 = vector.extract %53[0, 0] : f32 from vector<1x1xf32>
    %55 = vector.extract_strided_slice %17 {offsets = [0, 3], sizes = [8, 1], strides = [1, 1]} : vector<8x16xf32> to vector<8x1xf32>
    %56 = vector.extract_strided_slice %18 {offsets = [3, 0], sizes = [1, 8], strides = [1, 1]} : vector<16x8xf32> to vector<1x8xf32>
    %57 = vector.broadcast %55 : vector<8x1xf32> to vector<8x8xf32>
    %58 = vector.broadcast %56 : vector<1x8xf32> to vector<8x8xf32>
    %59 = arith.subf %57, %58 : vector<8x8xf32>
    %60 = math.absf %59 : vector<8x8xf32>
    %61 = vector.broadcast %54 : f32 to vector<8x8xf32>
    %62 = arith.mulf %61, %60 : vector<8x8xf32>
    %63 = arith.addf %52, %62 : vector<8x8xf32>
    %c0_17 = arith.constant 0 : index
    %c4 = arith.constant 4 : index
    %64 = vector.load %arg7[%c0_17, %c4] : memref<1x17xf32, #tpu.memory_space<vmem>>, vector<1x1xf32>
    %65 = vector.extract %64[0, 0] : f32 from vector<1x1xf32>
    %66 = vector.extract_strided_slice %17 {offsets = [0, 4], sizes = [8, 1], strides = [1, 1]} : vector<8x16xf32> to vector<8x1xf32>
    %67 = vector.extract_strided_slice %18 {offsets = [4, 0], sizes = [1, 8], strides = [1, 1]} : vector<16x8xf32> to vector<1x8xf32>
    %68 = vector.broadcast %66 : vector<8x1xf32> to vector<8x8xf32>
    %69 = vector.broadcast %67 : vector<1x8xf32> to vector<8x8xf32>
    %70 = arith.subf %68, %69 : vector<8x8xf32>
    %71 = math.absf %70 : vector<8x8xf32>
    %72 = vector.broadcast %65 : f32 to vector<8x8xf32>
    %73 = arith.mulf %72, %71 : vector<8x8xf32>
    %74 = arith.addf %63, %73 : vector<8x8xf32>
    %c0_18 = arith.constant 0 : index
    %c5 = arith.constant 5 : index
    %75 = vector.load %arg7[%c0_18, %c5] : memref<1x17xf32, #tpu.memory_space<vmem>>, vector<1x1xf32>
    %76 = vector.extract %75[0, 0] : f32 from vector<1x1xf32>
    %77 = vector.extract_strided_slice %17 {offsets = [0, 5], sizes = [8, 1], strides = [1, 1]} : vector<8x16xf32> to vector<8x1xf32>
    %78 = vector.extract_strided_slice %18 {offsets = [5, 0], sizes = [1, 8], strides = [1, 1]} : vector<16x8xf32> to vector<1x8xf32>
    %79 = vector.broadcast %77 : vector<8x1xf32> to vector<8x8xf32>
    %80 = vector.broadcast %78 : vector<1x8xf32> to vector<8x8xf32>
    %81 = arith.subf %79, %80 : vector<8x8xf32>
    %82 = math.absf %81 : vector<8x8xf32>
    %83 = vector.broadcast %76 : f32 to vector<8x8xf32>
    %84 = arith.mulf %83, %82 : vector<8x8xf32>
    %85 = arith.addf %74, %84 : vector<8x8xf32>
    %c0_19 = arith.constant 0 : index
    %c6 = arith.constant 6 : index
    %86 = vector.load %arg7[%c0_19, %c6] : memref<1x17xf32, #tpu.memory_space<vmem>>, vector<1x1xf32>
    %87 = vector.extract %86[0, 0] : f32 from vector<1x1xf32>
    %88 = vector.extract_strided_slice %17 {offsets = [0, 6], sizes = [8, 1], strides = [1, 1]} : vector<8x16xf32> to vector<8x1xf32>
    %89 = vector.extract_strided_slice %18 {offsets = [6, 0], sizes = [1, 8], strides = [1, 1]} : vector<16x8xf32> to vector<1x8xf32>
    %90 = vector.broadcast %88 : vector<8x1xf32> to vector<8x8xf32>
    %91 = vector.broadcast %89 : vector<1x8xf32> to vector<8x8xf32>
    %92 = arith.subf %90, %91 : vector<8x8xf32>
    %93 = math.absf %92 : vector<8x8xf32>
    %94 = vector.broadcast %87 : f32 to vector<8x8xf32>
    %95 = arith.mulf %94, %93 : vector<8x8xf32>
    %96 = arith.addf %85, %95 : vector<8x8xf32>
    %c0_20 = arith.constant 0 : index
    %c7 = arith.constant 7 : index
    %97 = vector.load %arg7[%c0_20, %c7] : memref<1x17xf32, #tpu.memory_space<vmem>>, vector<1x1xf32>
    %98 = vector.extract %97[0, 0] : f32 from vector<1x1xf32>
    %99 = vector.extract_strided_slice %17 {offsets = [0, 7], sizes = [8, 1], strides = [1, 1]} : vector<8x16xf32> to vector<8x1xf32>
    %100 = vector.extract_strided_slice %18 {offsets = [7, 0], sizes = [1, 8], strides = [1, 1]} : vector<16x8xf32> to vector<1x8xf32>
    %101 = vector.broadcast %99 : vector<8x1xf32> to vector<8x8xf32>
    %102 = vector.broadcast %100 : vector<1x8xf32> to vector<8x8xf32>
    %103 = arith.subf %101, %102 : vector<8x8xf32>
    %104 = math.absf %103 : vector<8x8xf32>
    %105 = vector.broadcast %98 : f32 to vector<8x8xf32>
    %106 = arith.mulf %105, %104 : vector<8x8xf32>
    %107 = arith.addf %96, %106 : vector<8x8xf32>
    %c0_21 = arith.constant 0 : index
    %c8 = arith.constant 8 : index
    %108 = vector.load %arg7[%c0_21, %c8] : memref<1x17xf32, #tpu.memory_space<vmem>>, vector<1x1xf32>
    %109 = vector.extract %108[0, 0] : f32 from vector<1x1xf32>
    %110 = vector.extract_strided_slice %17 {offsets = [0, 8], sizes = [8, 1], strides = [1, 1]} : vector<8x16xf32> to vector<8x1xf32>
    %111 = vector.extract_strided_slice %18 {offsets = [8, 0], sizes = [1, 8], strides = [1, 1]} : vector<16x8xf32> to vector<1x8xf32>
    %112 = vector.broadcast %110 : vector<8x1xf32> to vector<8x8xf32>
    %113 = vector.broadcast %111 : vector<1x8xf32> to vector<8x8xf32>
    %114 = arith.subf %112, %113 : vector<8x8xf32>
    %115 = math.absf %114 : vector<8x8xf32>
    %116 = vector.broadcast %109 : f32 to vector<8x8xf32>
    %117 = arith.mulf %116, %115 : vector<8x8xf32>
    %118 = arith.addf %107, %117 : vector<8x8xf32>
    %c0_22 = arith.constant 0 : index
    %c9 = arith.constant 9 : index
    %119 = vector.load %arg7[%c0_22, %c9] : memref<1x17xf32, #tpu.memory_space<vmem>>, vector<1x1xf32>
    %120 = vector.extract %119[0, 0] : f32 from vector<1x1xf32>
    %121 = vector.extract_strided_slice %17 {offsets = [0, 9], sizes = [8, 1], strides = [1, 1]} : vector<8x16xf32> to vector<8x1xf32>
    %122 = vector.extract_strided_slice %18 {offsets = [9, 0], sizes = [1, 8], strides = [1, 1]} : vector<16x8xf32> to vector<1x8xf32>
    %123 = vector.broadcast %121 : vector<8x1xf32> to vector<8x8xf32>
    %124 = vector.broadcast %122 : vector<1x8xf32> to vector<8x8xf32>
    %125 = arith.subf %123, %124 : vector<8x8xf32>
    %126 = math.absf %125 : vector<8x8xf32>
    %127 = vector.broadcast %120 : f32 to vector<8x8xf32>
    %128 = arith.mulf %127, %126 : vector<8x8xf32>
    %129 = arith.addf %118, %128 : vector<8x8xf32>
    %c0_23 = arith.constant 0 : index
    %c10 = arith.constant 10 : index
    %130 = vector.load %arg7[%c0_23, %c10] : memref<1x17xf32, #tpu.memory_space<vmem>>, vector<1x1xf32>
    %131 = vector.extract %130[0, 0] : f32 from vector<1x1xf32>
    %132 = vector.extract_strided_slice %17 {offsets = [0, 10], sizes = [8, 1], strides = [1, 1]} : vector<8x16xf32> to vector<8x1xf32>
    %133 = vector.extract_strided_slice %18 {offsets = [10, 0], sizes = [1, 8], strides = [1, 1]} : vector<16x8xf32> to vector<1x8xf32>
    %134 = vector.broadcast %132 : vector<8x1xf32> to vector<8x8xf32>
    %135 = vector.broadcast %133 : vector<1x8xf32> to vector<8x8xf32>
    %136 = arith.subf %134, %135 : vector<8x8xf32>
    %137 = math.absf %136 : vector<8x8xf32>
    %138 = vector.broadcast %131 : f32 to vector<8x8xf32>
    %139 = arith.mulf %138, %137 : vector<8x8xf32>
    %140 = arith.addf %129, %139 : vector<8x8xf32>
    %c0_24 = arith.constant 0 : index
    %c11 = arith.constant 11 : index
    %141 = vector.load %arg7[%c0_24, %c11] : memref<1x17xf32, #tpu.memory_space<vmem>>, vector<1x1xf32>
    %142 = vector.extract %141[0, 0] : f32 from vector<1x1xf32>
    %143 = vector.extract_strided_slice %17 {offsets = [0, 11], sizes = [8, 1], strides = [1, 1]} : vector<8x16xf32> to vector<8x1xf32>
    %144 = vector.extract_strided_slice %18 {offsets = [11, 0], sizes = [1, 8], strides = [1, 1]} : vector<16x8xf32> to vector<1x8xf32>
    %145 = vector.broadcast %143 : vector<8x1xf32> to vector<8x8xf32>
    %146 = vector.broadcast %144 : vector<1x8xf32> to vector<8x8xf32>
    %147 = arith.subf %145, %146 : vector<8x8xf32>
    %148 = math.absf %147 : vector<8x8xf32>
    %149 = vector.broadcast %142 : f32 to vector<8x8xf32>
    %150 = arith.mulf %149, %148 : vector<8x8xf32>
    %151 = arith.addf %140, %150 : vector<8x8xf32>
    %c0_25 = arith.constant 0 : index
    %c12 = arith.constant 12 : index
    %152 = vector.load %arg7[%c0_25, %c12] : memref<1x17xf32, #tpu.memory_space<vmem>>, vector<1x1xf32>
    %153 = vector.extract %152[0, 0] : f32 from vector<1x1xf32>
    %154 = vector.extract_strided_slice %17 {offsets = [0, 12], sizes = [8, 1], strides = [1, 1]} : vector<8x16xf32> to vector<8x1xf32>
    %155 = vector.extract_strided_slice %18 {offsets = [12, 0], sizes = [1, 8], strides = [1, 1]} : vector<16x8xf32> to vector<1x8xf32>
    %156 = vector.broadcast %154 : vector<8x1xf32> to vector<8x8xf32>
    %157 = vector.broadcast %155 : vector<1x8xf32> to vector<8x8xf32>
    %158 = arith.subf %156, %157 : vector<8x8xf32>
    %159 = math.absf %158 : vector<8x8xf32>
    %160 = vector.broadcast %153 : f32 to vector<8x8xf32>
    %161 = arith.mulf %160, %159 : vector<8x8xf32>
    %162 = arith.addf %151, %161 : vector<8x8xf32>
    %c0_26 = arith.constant 0 : index
    %c13 = arith.constant 13 : index
    %163 = vector.load %arg7[%c0_26, %c13] : memref<1x17xf32, #tpu.memory_space<vmem>>, vector<1x1xf32>
    %164 = vector.extract %163[0, 0] : f32 from vector<1x1xf32>
    %165 = vector.extract_strided_slice %17 {offsets = [0, 13], sizes = [8, 1], strides = [1, 1]} : vector<8x16xf32> to vector<8x1xf32>
    %166 = vector.extract_strided_slice %18 {offsets = [13, 0], sizes = [1, 8], strides = [1, 1]} : vector<16x8xf32> to vector<1x8xf32>
    %167 = vector.broadcast %165 : vector<8x1xf32> to vector<8x8xf32>
    %168 = vector.broadcast %166 : vector<1x8xf32> to vector<8x8xf32>
    %169 = arith.subf %167, %168 : vector<8x8xf32>
    %170 = math.absf %169 : vector<8x8xf32>
    %171 = vector.broadcast %164 : f32 to vector<8x8xf32>
    %172 = arith.mulf %171, %170 : vector<8x8xf32>
    %173 = arith.addf %162, %172 : vector<8x8xf32>
    %c0_27 = arith.constant 0 : index
    %c14 = arith.constant 14 : index
    %174 = vector.load %arg7[%c0_27, %c14] : memref<1x17xf32, #tpu.memory_space<vmem>>, vector<1x1xf32>
    %175 = vector.extract %174[0, 0] : f32 from vector<1x1xf32>
    %176 = vector.extract_strided_slice %17 {offsets = [0, 14], sizes = [8, 1], strides = [1, 1]} : vector<8x16xf32> to vector<8x1xf32>
    %177 = vector.extract_strided_slice %18 {offsets = [14, 0], sizes = [1, 8], strides = [1, 1]} : vector<16x8xf32> to vector<1x8xf32>
    %178 = vector.broadcast %176 : vector<8x1xf32> to vector<8x8xf32>
    %179 = vector.broadcast %177 : vector<1x8xf32> to vector<8x8xf32>
    %180 = arith.subf %178, %179 : vector<8x8xf32>
    %181 = math.absf %180 : vector<8x8xf32>
    %182 = vector.broadcast %175 : f32 to vector<8x8xf32>
    %183 = arith.mulf %182, %181 : vector<8x8xf32>
    %184 = arith.addf %173, %183 : vector<8x8xf32>
    %c0_28 = arith.constant 0 : index
    %c15 = arith.constant 15 : index
    %185 = vector.load %arg7[%c0_28, %c15] : memref<1x17xf32, #tpu.memory_space<vmem>>, vector<1x1xf32>
    %186 = vector.extract %185[0, 0] : f32 from vector<1x1xf32>
    %187 = vector.extract_strided_slice %17 {offsets = [0, 15], sizes = [8, 1], strides = [1, 1]} : vector<8x16xf32> to vector<8x1xf32>
    %188 = vector.extract_strided_slice %18 {offsets = [15, 0], sizes = [1, 8], strides = [1, 1]} : vector<16x8xf32> to vector<1x8xf32>
    %189 = vector.broadcast %187 : vector<8x1xf32> to vector<8x8xf32>
    %190 = vector.broadcast %188 : vector<1x8xf32> to vector<8x8xf32>
    %191 = arith.subf %189, %190 : vector<8x8xf32>
    %192 = math.absf %191 : vector<8x8xf32>
    %193 = vector.broadcast %186 : f32 to vector<8x8xf32>
    %194 = arith.mulf %193, %192 : vector<8x8xf32>
    %195 = arith.addf %184, %194 : vector<8x8xf32>
    %c0_i32 = arith.constant 0 : i32
    %196 = arith.addi %13, %c0_i32 : i32
    %197 = arith.index_cast %196 : i32 to index
    %198 = memref.load %arg1[%197] : memref<2xi32, #tpu.memory_space<smem>>
    %199 = vector.broadcast %198 : i32 to vector<8x8xi32>
    %200 = arith.cmpi sge, %14, %199 : vector<8x8xi32>
    %201 = vector.broadcast %198 : i32 to vector<8x8xi32>
    %202 = arith.cmpi sge, %15, %201 : vector<8x8xi32>
    %203 = arith.ori %200, %202 : vector<8x8xi1>
    %204 = vector.broadcast %12 : f32 to vector<8x8xf32>
    %205 = arith.subf %195, %204 : vector<8x8xf32>
    %206 = arith.select %203, %205, %195 : vector<8x8xi1>, vector<8x8xf32>
    %cst_29 = arith.constant 0.000000e+00 : f32
    %207 = vector.broadcast %cst_29 : f32 to vector<8x8xf32>
    %208 = arith.cmpf oge, %206, %207 : vector<8x8xf32>
    %cst_30 = arith.constant 0.00999999977 : f32
    %209 = vector.broadcast %cst_30 : f32 to vector<8x8xf32>
    %210 = arith.mulf %209, %206 : vector<8x8xf32>
    %211 = arith.select %208, %206, %210 : vector<8x8xi1>, vector<8x8xf32>
    %cst_31 = arith.constant dense<0xFF800000> : vector<8xf32>
    %212 = vector.multi_reduction <maximumf>, %211, %cst_31 [1] : vector<8x8xf32> to vector<8xf32>
    %213 = vector.shape_cast %212 : vector<8xf32> to vector<8x1xf32>
    %214 = vector.broadcast %213 : vector<8x1xf32> to vector<8x8xf32>
    %215 = arith.subf %211, %214 : vector<8x8xf32>
    %c0_32 = arith.constant 0 : index
    %c0_33 = arith.constant 0 : index
    %c0_34 = arith.constant 0 : index
    %216 = vector.load %arg4[%c0_32, %c0_33, %c0_34] : memref<2x8x8xf32, #tpu.memory_space<vmem>>, vector<1x8x8xf32>
    %217 = vector.shape_cast %216 : vector<1x8x8xf32> to vector<8x8xf32>
    %218 = math.exp %215 : vector<8x8xf32>
    %219 = arith.mulf %217, %218 : vector<8x8xf32>
    %cst_35 = arith.constant dense<0.000000e+00> : vector<8xf32>
    %220 = vector.multi_reduction <add>, %219, %cst_35 [1] : vector<8x8xf32> to vector<8xf32>
    %221 = vector.shape_cast %220 : vector<8xf32> to vector<8x1xf32>
    %222 = vector.broadcast %221 : vector<8x1xf32> to vector<8x8xf32>
    %223 = arith.divf %219, %222 : vector<8x8xf32>
    %cst_36 = arith.constant 1.000000e-10 : f32
    %224 = vector.broadcast %cst_36 : f32 to vector<8x8xf32>
    %225 = arith.addf %223, %224 : vector<8x8xf32>
    %c0_37 = arith.constant 0 : index
    %c0_38 = arith.constant 0 : index
    %c0_39 = arith.constant 0 : index
    %226 = vector.load %arg19[%c0_37, %c0_38, %c0_39] : memref<2x8x8xf32, #tpu.memory_space<vmem>>, vector<1x8x8xf32>
    %227 = vector.shape_cast %226 : vector<1x8x8xf32> to vector<8x8xf32>
    %228 = vector.shape_cast %225 : vector<8x8xf32> to vector<1x8x8xf32>
    tpu.vector_store %arg19[%c0_37, %c0_38, %c0_39], %228 {strides = array<i32>} : memref<2x8x8xf32, #tpu.memory_space<vmem>>, vector<1x8x8xf32>,
    %229 = vector.extract_strided_slice %10 {offsets = [1, 0, 0], sizes = [1, 8, 16], strides = [1, 1, 1]} : vector<2x8x16xf32> to vector<1x8x16xf32>
    %230 = vector.shape_cast %229 : vector<1x8x16xf32> to vector<8x16xf32>
    %231 = tpu.transpose %230, [1, 0] : vector<8x16xf32> -> vector<16x8xf32>
    %cst_40 = arith.constant 0.000000e+00 : f32
    %232 = vector.broadcast %cst_40 : f32 to vector<8x8xf32>
    %c0_41 = arith.constant 0 : index
    %c0_42 = arith.constant 0 : index
    %233 = vector.load %arg7[%c0_41, %c0_42] : memref<1x17xf32, #tpu.memory_space<vmem>>, vector<1x1xf32>
    %234 = vector.extract %233[0, 0] : f32 from vector<1x1xf32>
    %235 = vector.extract_strided_slice %230 {offsets = [0, 0], sizes = [8, 1], strides = [1, 1]} : vector<8x16xf32> to vector<8x1xf32>
    %236 = vector.extract_strided_slice %231 {offsets = [0, 0], sizes = [1, 8], strides = [1, 1]} : vector<16x8xf32> to vector<1x8xf32>
    %237 = vector.broadcast %235 : vector<8x1xf32> to vector<8x8xf32>
    %238 = vector.broadcast %236 : vector<1x8xf32> to vector<8x8xf32>
    %239 = arith.subf %237, %238 : vector<8x8xf32>
    %240 = math.absf %239 : vector<8x8xf32>
    %241 = vector.broadcast %234 : f32 to vector<8x8xf32>
    %242 = arith.mulf %241, %240 : vector<8x8xf32>
    %243 = arith.addf %232, %242 : vector<8x8xf32>
    %c0_43 = arith.constant 0 : index
    %c1_44 = arith.constant 1 : index
    %244 = vector.load %arg7[%c0_43, %c1_44] : memref<1x17xf32, #tpu.memory_space<vmem>>, vector<1x1xf32>
    %245 = vector.extract %244[0, 0] : f32 from vector<1x1xf32>
    %246 = vector.extract_strided_slice %230 {offsets = [0, 1], sizes = [8, 1], strides = [1, 1]} : vector<8x16xf32> to vector<8x1xf32>
    %247 = vector.extract_strided_slice %231 {offsets = [1, 0], sizes = [1, 8], strides = [1, 1]} : vector<16x8xf32> to vector<1x8xf32>
    %248 = vector.broadcast %246 : vector<8x1xf32> to vector<8x8xf32>
    %249 = vector.broadcast %247 : vector<1x8xf32> to vector<8x8xf32>
    %250 = arith.subf %248, %249 : vector<8x8xf32>
    %251 = math.absf %250 : vector<8x8xf32>
    %252 = vector.broadcast %245 : f32 to vector<8x8xf32>
    %253 = arith.mulf %252, %251 : vector<8x8xf32>
    %254 = arith.addf %243, %253 : vector<8x8xf32>
    %c0_45 = arith.constant 0 : index
    %c2_46 = arith.constant 2 : index
    %255 = vector.load %arg7[%c0_45, %c2_46] : memref<1x17xf32, #tpu.memory_space<vmem>>, vector<1x1xf32>
    %256 = vector.extract %255[0, 0] : f32 from vector<1x1xf32>
    %257 = vector.extract_strided_slice %230 {offsets = [0, 2], sizes = [8, 1], strides = [1, 1]} : vector<8x16xf32> to vector<8x1xf32>
    %258 = vector.extract_strided_slice %231 {offsets = [2, 0], sizes = [1, 8], strides = [1, 1]} : vector<16x8xf32> to vector<1x8xf32>
    %259 = vector.broadcast %257 : vector<8x1xf32> to vector<8x8xf32>
    %260 = vector.broadcast %258 : vector<1x8xf32> to vector<8x8xf32>
    %261 = arith.subf %259, %260 : vector<8x8xf32>
    %262 = math.absf %261 : vector<8x8xf32>
    %263 = vector.broadcast %256 : f32 to vector<8x8xf32>
    %264 = arith.mulf %263, %262 : vector<8x8xf32>
    %265 = arith.addf %254, %264 : vector<8x8xf32>
    %c0_47 = arith.constant 0 : index
    %c3_48 = arith.constant 3 : index
    %266 = vector.load %arg7[%c0_47, %c3_48] : memref<1x17xf32, #tpu.memory_space<vmem>>, vector<1x1xf32>
    %267 = vector.extract %266[0, 0] : f32 from vector<1x1xf32>
    %268 = vector.extract_strided_slice %230 {offsets = [0, 3], sizes = [8, 1], strides = [1, 1]} : vector<8x16xf32> to vector<8x1xf32>
    %269 = vector.extract_strided_slice %231 {offsets = [3, 0], sizes = [1, 8], strides = [1, 1]} : vector<16x8xf32> to vector<1x8xf32>
    %270 = vector.broadcast %268 : vector<8x1xf32> to vector<8x8xf32>
    %271 = vector.broadcast %269 : vector<1x8xf32> to vector<8x8xf32>
    %272 = arith.subf %270, %271 : vector<8x8xf32>
    %273 = math.absf %272 : vector<8x8xf32>
    %274 = vector.broadcast %267 : f32 to vector<8x8xf32>
    %275 = arith.mulf %274, %273 : vector<8x8xf32>
    %276 = arith.addf %265, %275 : vector<8x8xf32>
    %c0_49 = arith.constant 0 : index
    %c4_50 = arith.constant 4 : index
    %277 = vector.load %arg7[%c0_49, %c4_50] : memref<1x17xf32, #tpu.memory_space<vmem>>, vector<1x1xf32>
    %278 = vector.extract %277[0, 0] : f32 from vector<1x1xf32>
    %279 = vector.extract_strided_slice %230 {offsets = [0, 4], sizes = [8, 1], strides = [1, 1]} : vector<8x16xf32> to vector<8x1xf32>
    %280 = vector.extract_strided_slice %231 {offsets = [4, 0], sizes = [1, 8], strides = [1, 1]} : vector<16x8xf32> to vector<1x8xf32>
    %281 = vector.broadcast %279 : vector<8x1xf32> to vector<8x8xf32>
    %282 = vector.broadcast %280 : vector<1x8xf32> to vector<8x8xf32>
    %283 = arith.subf %281, %282 : vector<8x8xf32>
    %284 = math.absf %283 : vector<8x8xf32>
    %285 = vector.broadcast %278 : f32 to vector<8x8xf32>
    %286 = arith.mulf %285, %284 : vector<8x8xf32>
    %287 = arith.addf %276, %286 : vector<8x8xf32>
    %c0_51 = arith.constant 0 : index
    %c5_52 = arith.constant 5 : index
    %288 = vector.load %arg7[%c0_51, %c5_52] : memref<1x17xf32, #tpu.memory_space<vmem>>, vector<1x1xf32>
    %289 = vector.extract %288[0, 0] : f32 from vector<1x1xf32>
    %290 = vector.extract_strided_slice %230 {offsets = [0, 5], sizes = [8, 1], strides = [1, 1]} : vector<8x16xf32> to vector<8x1xf32>
    %291 = vector.extract_strided_slice %231 {offsets = [5, 0], sizes = [1, 8], strides = [1, 1]} : vector<16x8xf32> to vector<1x8xf32>
    %292 = vector.broadcast %290 : vector<8x1xf32> to vector<8x8xf32>
    %293 = vector.broadcast %291 : vector<1x8xf32> to vector<8x8xf32>
    %294 = arith.subf %292, %293 : vector<8x8xf32>
    %295 = math.absf %294 : vector<8x8xf32>
    %296 = vector.broadcast %289 : f32 to vector<8x8xf32>
    %297 = arith.mulf %296, %295 : vector<8x8xf32>
    %298 = arith.addf %287, %297 : vector<8x8xf32>
    %c0_53 = arith.constant 0 : index
    %c6_54 = arith.constant 6 : index
    %299 = vector.load %arg7[%c0_53, %c6_54] : memref<1x17xf32, #tpu.memory_space<vmem>>, vector<1x1xf32>
    %300 = vector.extract %299[0, 0] : f32 from vector<1x1xf32>
    %301 = vector.extract_strided_slice %230 {offsets = [0, 6], sizes = [8, 1], strides = [1, 1]} : vector<8x16xf32> to vector<8x1xf32>
    %302 = vector.extract_strided_slice %231 {offsets = [6, 0], sizes = [1, 8], strides = [1, 1]} : vector<16x8xf32> to vector<1x8xf32>
    %303 = vector.broadcast %301 : vector<8x1xf32> to vector<8x8xf32>
    %304 = vector.broadcast %302 : vector<1x8xf32> to vector<8x8xf32>
    %305 = arith.subf %303, %304 : vector<8x8xf32>
    %306 = math.absf %305 : vector<8x8xf32>
    %307 = vector.broadcast %300 : f32 to vector<8x8xf32>
    %308 = arith.mulf %307, %306 : vector<8x8xf32>
    %309 = arith.addf %298, %308 : vector<8x8xf32>
    %c0_55 = arith.constant 0 : index
    %c7_56 = arith.constant 7 : index
    %310 = vector.load %arg7[%c0_55, %c7_56] : memref<1x17xf32, #tpu.memory_space<vmem>>, vector<1x1xf32>
    %311 = vector.extract %310[0, 0] : f32 from vector<1x1xf32>
    %312 = vector.extract_strided_slice %230 {offsets = [0, 7], sizes = [8, 1], strides = [1, 1]} : vector<8x16xf32> to vector<8x1xf32>
    %313 = vector.extract_strided_slice %231 {offsets = [7, 0], sizes = [1, 8], strides = [1, 1]} : vector<16x8xf32> to vector<1x8xf32>
    %314 = vector.broadcast %312 : vector<8x1xf32> to vector<8x8xf32>
    %315 = vector.broadcast %313 : vector<1x8xf32> to vector<8x8xf32>
    %316 = arith.subf %314, %315 : vector<8x8xf32>
    %317 = math.absf %316 : vector<8x8xf32>
    %318 = vector.broadcast %311 : f32 to vector<8x8xf32>
    %319 = arith.mulf %318, %317 : vector<8x8xf32>
    %320 = arith.addf %309, %319 : vector<8x8xf32>
    %c0_57 = arith.constant 0 : index
    %c8_58 = arith.constant 8 : index
    %321 = vector.load %arg7[%c0_57, %c8_58] : memref<1x17xf32, #tpu.memory_space<vmem>>, vector<1x1xf32>
    %322 = vector.extract %321[0, 0] : f32 from vector<1x1xf32>
    %323 = vector.extract_strided_slice %230 {offsets = [0, 8], sizes = [8, 1], strides = [1, 1]} : vector<8x16xf32> to vector<8x1xf32>
    %324 = vector.extract_strided_slice %231 {offsets = [8, 0], sizes = [1, 8], strides = [1, 1]} : vector<16x8xf32> to vector<1x8xf32>
    %325 = vector.broadcast %323 : vector<8x1xf32> to vector<8x8xf32>
    %326 = vector.broadcast %324 : vector<1x8xf32> to vector<8x8xf32>
    %327 = arith.subf %325, %326 : vector<8x8xf32>
    %328 = math.absf %327 : vector<8x8xf32>
    %329 = vector.broadcast %322 : f32 to vector<8x8xf32>
    %330 = arith.mulf %329, %328 : vector<8x8xf32>
    %331 = arith.addf %320, %330 : vector<8x8xf32>
    %c0_59 = arith.constant 0 : index
    %c9_60 = arith.constant 9 : index
    %332 = vector.load %arg7[%c0_59, %c9_60] : memref<1x17xf32, #tpu.memory_space<vmem>>, vector<1x1xf32>
    %333 = vector.extract %332[0, 0] : f32 from vector<1x1xf32>
    %334 = vector.extract_strided_slice %230 {offsets = [0, 9], sizes = [8, 1], strides = [1, 1]} : vector<8x16xf32> to vector<8x1xf32>
    %335 = vector.extract_strided_slice %231 {offsets = [9, 0], sizes = [1, 8], strides = [1, 1]} : vector<16x8xf32> to vector<1x8xf32>
    %336 = vector.broadcast %334 : vector<8x1xf32> to vector<8x8xf32>
    %337 = vector.broadcast %335 : vector<1x8xf32> to vector<8x8xf32>
    %338 = arith.subf %336, %337 : vector<8x8xf32>
    %339 = math.absf %338 : vector<8x8xf32>
    %340 = vector.broadcast %333 : f32 to vector<8x8xf32>
    %341 = arith.mulf %340, %339 : vector<8x8xf32>
    %342 = arith.addf %331, %341 : vector<8x8xf32>
    %c0_61 = arith.constant 0 : index
    %c10_62 = arith.constant 10 : index
    %343 = vector.load %arg7[%c0_61, %c10_62] : memref<1x17xf32, #tpu.memory_space<vmem>>, vector<1x1xf32>
    %344 = vector.extract %343[0, 0] : f32 from vector<1x1xf32>
    %345 = vector.extract_strided_slice %230 {offsets = [0, 10], sizes = [8, 1], strides = [1, 1]} : vector<8x16xf32> to vector<8x1xf32>
    %346 = vector.extract_strided_slice %231 {offsets = [10, 0], sizes = [1, 8], strides = [1, 1]} : vector<16x8xf32> to vector<1x8xf32>
    %347 = vector.broadcast %345 : vector<8x1xf32> to vector<8x8xf32>
    %348 = vector.broadcast %346 : vector<1x8xf32> to vector<8x8xf32>
    %349 = arith.subf %347, %348 : vector<8x8xf32>
    %350 = math.absf %349 : vector<8x8xf32>
    %351 = vector.broadcast %344 : f32 to vector<8x8xf32>
    %352 = arith.mulf %351, %350 : vector<8x8xf32>
    %353 = arith.addf %342, %352 : vector<8x8xf32>
    %c0_63 = arith.constant 0 : index
    %c11_64 = arith.constant 11 : index
    %354 = vector.load %arg7[%c0_63, %c11_64] : memref<1x17xf32, #tpu.memory_space<vmem>>, vector<1x1xf32>
    %355 = vector.extract %354[0, 0] : f32 from vector<1x1xf32>
    %356 = vector.extract_strided_slice %230 {offsets = [0, 11], sizes = [8, 1], strides = [1, 1]} : vector<8x16xf32> to vector<8x1xf32>
    %357 = vector.extract_strided_slice %231 {offsets = [11, 0], sizes = [1, 8], strides = [1, 1]} : vector<16x8xf32> to vector<1x8xf32>
    %358 = vector.broadcast %356 : vector<8x1xf32> to vector<8x8xf32>
    %359 = vector.broadcast %357 : vector<1x8xf32> to vector<8x8xf32>
    %360 = arith.subf %358, %359 : vector<8x8xf32>
    %361 = math.absf %360 : vector<8x8xf32>
    %362 = vector.broadcast %355 : f32 to vector<8x8xf32>
    %363 = arith.mulf %362, %361 : vector<8x8xf32>
    %364 = arith.addf %353, %363 : vector<8x8xf32>
    %c0_65 = arith.constant 0 : index
    %c12_66 = arith.constant 12 : index
    %365 = vector.load %arg7[%c0_65, %c12_66] : memref<1x17xf32, #tpu.memory_space<vmem>>, vector<1x1xf32>
    %366 = vector.extract %365[0, 0] : f32 from vector<1x1xf32>
    %367 = vector.extract_strided_slice %230 {offsets = [0, 12], sizes = [8, 1], strides = [1, 1]} : vector<8x16xf32> to vector<8x1xf32>
    %368 = vector.extract_strided_slice %231 {offsets = [12, 0], sizes = [1, 8], strides = [1, 1]} : vector<16x8xf32> to vector<1x8xf32>
    %369 = vector.broadcast %367 : vector<8x1xf32> to vector<8x8xf32>
    %370 = vector.broadcast %368 : vector<1x8xf32> to vector<8x8xf32>
    %371 = arith.subf %369, %370 : vector<8x8xf32>
    %372 = math.absf %371 : vector<8x8xf32>
    %373 = vector.broadcast %366 : f32 to vector<8x8xf32>
    %374 = arith.mulf %373, %372 : vector<8x8xf32>
    %375 = arith.addf %364, %374 : vector<8x8xf32>
    %c0_67 = arith.constant 0 : index
    %c13_68 = arith.constant 13 : index
    %376 = vector.load %arg7[%c0_67, %c13_68] : memref<1x17xf32, #tpu.memory_space<vmem>>, vector<1x1xf32>
    %377 = vector.extract %376[0, 0] : f32 from vector<1x1xf32>
    %378 = vector.extract_strided_slice %230 {offsets = [0, 13], sizes = [8, 1], strides = [1, 1]} : vector<8x16xf32> to vector<8x1xf32>
    %379 = vector.extract_strided_slice %231 {offsets = [13, 0], sizes = [1, 8], strides = [1, 1]} : vector<16x8xf32> to vector<1x8xf32>
    %380 = vector.broadcast %378 : vector<8x1xf32> to vector<8x8xf32>
    %381 = vector.broadcast %379 : vector<1x8xf32> to vector<8x8xf32>
    %382 = arith.subf %380, %381 : vector<8x8xf32>
    %383 = math.absf %382 : vector<8x8xf32>
    %384 = vector.broadcast %377 : f32 to vector<8x8xf32>
    %385 = arith.mulf %384, %383 : vector<8x8xf32>
    %386 = arith.addf %375, %385 : vector<8x8xf32>
    %c0_69 = arith.constant 0 : index
    %c14_70 = arith.constant 14 : index
    %387 = vector.load %arg7[%c0_69, %c14_70] : memref<1x17xf32, #tpu.memory_space<vmem>>, vector<1x1xf32>
    %388 = vector.extract %387[0, 0] : f32 from vector<1x1xf32>
    %389 = vector.extract_strided_slice %230 {offsets = [0, 14], sizes = [8, 1], strides = [1, 1]} : vector<8x16xf32> to vector<8x1xf32>
    %390 = vector.extract_strided_slice %231 {offsets = [14, 0], sizes = [1, 8], strides = [1, 1]} : vector<16x8xf32> to vector<1x8xf32>
    %391 = vector.broadcast %389 : vector<8x1xf32> to vector<8x8xf32>
    %392 = vector.broadcast %390 : vector<1x8xf32> to vector<8x8xf32>
    %393 = arith.subf %391, %392 : vector<8x8xf32>
    %394 = math.absf %393 : vector<8x8xf32>
    %395 = vector.broadcast %388 : f32 to vector<8x8xf32>
    %396 = arith.mulf %395, %394 : vector<8x8xf32>
    %397 = arith.addf %386, %396 : vector<8x8xf32>
    %c0_71 = arith.constant 0 : index
    %c15_72 = arith.constant 15 : index
    %398 = vector.load %arg7[%c0_71, %c15_72] : memref<1x17xf32, #tpu.memory_space<vmem>>, vector<1x1xf32>
    %399 = vector.extract %398[0, 0] : f32 from vector<1x1xf32>
    %400 = vector.extract_strided_slice %230 {offsets = [0, 15], sizes = [8, 1], strides = [1, 1]} : vector<8x16xf32> to vector<8x1xf32>
    %401 = vector.extract_strided_slice %231 {offsets = [15, 0], sizes = [1, 8], strides = [1, 1]} : vector<16x8xf32> to vector<1x8xf32>
    %402 = vector.broadcast %400 : vector<8x1xf32> to vector<8x8xf32>
    %403 = vector.broadcast %401 : vector<1x8xf32> to vector<8x8xf32>
    %404 = arith.subf %402, %403 : vector<8x8xf32>
    %405 = math.absf %404 : vector<8x8xf32>
    %406 = vector.broadcast %399 : f32 to vector<8x8xf32>
    %407 = arith.mulf %406, %405 : vector<8x8xf32>
    %408 = arith.addf %397, %407 : vector<8x8xf32>
    %c1_i32 = arith.constant 1 : i32
    %409 = arith.addi %13, %c1_i32 : i32
    %410 = arith.index_cast %409 : i32 to index
    %411 = memref.load %arg1[%410] : memref<2xi32, #tpu.memory_space<smem>>
    %412 = vector.broadcast %411 : i32 to vector<8x8xi32>
    %413 = arith.cmpi sge, %14, %412 : vector<8x8xi32>
    %414 = vector.broadcast %411 : i32 to vector<8x8xi32>
    %415 = arith.cmpi sge, %15, %414 : vector<8x8xi32>
    %416 = arith.ori %413, %415 : vector<8x8xi1>
    %417 = vector.broadcast %12 : f32 to vector<8x8xf32>
    %418 = arith.subf %408, %417 : vector<8x8xf32>
    %419 = arith.select %416, %418, %408 : vector<8x8xi1>, vector<8x8xf32>
    %cst_73 = arith.constant 0.000000e+00 : f32
    %420 = vector.broadcast %cst_73 : f32 to vector<8x8xf32>
    %421 = arith.cmpf oge, %419, %420 : vector<8x8xf32>
    %cst_74 = arith.constant 0.00999999977 : f32
    %422 = vector.broadcast %cst_74 : f32 to vector<8x8xf32>
    %423 = arith.mulf %422, %419 : vector<8x8xf32>
    %424 = arith.select %421, %419, %423 : vector<8x8xi1>, vector<8x8xf32>
    %cst_75 = arith.constant dense<0xFF800000> : vector<8xf32>
    %425 = vector.multi_reduction <maximumf>, %424, %cst_75 [1] : vector<8x8xf32> to vector<8xf32>
    %426 = vector.shape_cast %425 : vector<8xf32> to vector<8x1xf32>
    %427 = vector.broadcast %426 : vector<8x1xf32> to vector<8x8xf32>
    %428 = arith.subf %424, %427 : vector<8x8xf32>
    %c1_76 = arith.constant 1 : index
    %c0_77 = arith.constant 0 : index
    %c0_78 = arith.constant 0 : index
    %429 = vector.load %arg4[%c1_76, %c0_77, %c0_78] : memref<2x8x8xf32, #tpu.memory_space<vmem>>, vector<1x8x8xf32>
    %430 = vector.shape_cast %429 : vector<1x8x8xf32> to vector<8x8xf32>
    %431 = math.exp %428 : vector<8x8xf32>
    %432 = arith.mulf %430, %431 : vector<8x8xf32>
    %cst_79 = arith.constant dense<0.000000e+00> : vector<8xf32>
    %433 = vector.multi_reduction <add>, %432, %cst_79 [1] : vector<8x8xf32> to vector<8xf32>
    %434 = vector.shape_cast %433 : vector<8xf32> to vector<8x1xf32>
    %435 = vector.broadcast %434 : vector<8x1xf32> to vector<8x8xf32>
    %436 = arith.divf %432, %435 : vector<8x8xf32>
    %cst_80 = arith.constant 1.000000e-10 : f32
    %437 = vector.broadcast %cst_80 : f32 to vector<8x8xf32>
    %438 = arith.addf %436, %437 : vector<8x8xf32>
    %c1_81 = arith.constant 1 : index
    %c0_82 = arith.constant 0 : index
    %c0_83 = arith.constant 0 : index
    %439 = vector.load %arg19[%c1_81, %c0_82, %c0_83] : memref<2x8x8xf32, #tpu.memory_space<vmem>>, vector<1x8x8xf32>
    %440 = vector.shape_cast %439 : vector<1x8x8xf32> to vector<8x8xf32>
    %441 = vector.shape_cast %438 : vector<8x8xf32> to vector<1x8x8xf32>
    tpu.vector_store %arg19[%c1_81, %c0_82, %c0_83], %441 {strides = array<i32>} : memref<2x8x8xf32, #tpu.memory_space<vmem>>, vector<1x8x8xf32>,
    %c0_84 = arith.constant 0 : index
    %c0_85 = arith.constant 0 : index
    %c0_86 = arith.constant 0 : index
    %442 = vector.load %arg4[%c0_84, %c0_85, %c0_86] : memref<2x8x8xf32, #tpu.memory_space<vmem>>, vector<2x8x8xf32>
    %c0_87 = arith.constant 0 : index
    %c0_88 = arith.constant 0 : index
    %c0_89 = arith.constant 0 : index
    %443 = vector.load %arg19[%c0_87, %c0_88, %c0_89] : memref<2x8x8xf32, #tpu.memory_space<vmem>>, vector<2x8x8xf32>
    %444 = arith.mulf %442, %443 : vector<2x8x8xf32>
    %445 = vector.shape_cast %444 : vector<2x8x8xf32> to vector<2x8x8x1xf32>
    %c0_90 = arith.constant 0 : index
    %c0_91 = arith.constant 0 : index
    %446 = vector.load %arg8[%c0_90, %c0_91] : memref<32x32xf32, #tpu.memory_space<vmem>>, vector<32x32xf32>
    %447 = arith.truncf %1 : vector<16x32xf32> to vector<16x32xbf16>
    %448 = arith.truncf %446 : vector<32x32xf32> to vector<32x32xbf16>
    %cst_92 = arith.constant dense<0.000000e+00> : vector<16x32xf32>
    %449 = tpu.matmul %447, %448, %cst_92 {dimension_numbers = #tpu.dot_dimension_numbers<[1], [0], [0], [1], [0, 0, 1, 1], [], []>} : vector<16x32xbf16>, vector<32x32xbf16>, vector<16x32xf32> -> vector<16x32xf32>
    %c0_93 = arith.constant 0 : index
    %c0_94 = arith.constant 0 : index
    %450 = vector.load %arg9[%c0_93, %c0_94] : memref<32x32xf32, #tpu.memory_space<vmem>>, vector<32x32xf32>
    %451 = arith.truncf %1 : vector<16x32xf32> to vector<16x32xbf16>
    %452 = arith.truncf %450 : vector<32x32xf32> to vector<32x32xbf16>
    %cst_95 = arith.constant dense<0.000000e+00> : vector<16x32xf32>
    %453 = tpu.matmul %451, %452, %cst_95 {dimension_numbers = #tpu.dot_dimension_numbers<[1], [0], [0], [1], [0, 0, 1, 1], [], []>} : vector<16x32xbf16>, vector<32x32xbf16>, vector<16x32xf32> -> vector<16x32xf32>
    %454 = vector.shape_cast %449 : vector<16x32xf32> to vector<2x8x32xf32>
    %455 = vector.shape_cast %454 : vector<2x8x32xf32> to vector<2x8x1x32xf32>
    %456 = vector.shape_cast %453 : vector<16x32xf32> to vector<2x8x32xf32>
    %457 = vector.shape_cast %456 : vector<2x8x32xf32> to vector<2x1x8x32xf32>
    %458 = vector.broadcast %455 : vector<2x8x1x32xf32> to vector<2x8x8x32xf32>
    %459 = vector.broadcast %457 : vector<2x1x8x32xf32> to vector<2x8x8x32xf32>
    %460 = arith.addf %458, %459 : vector<2x8x8x32xf32>
    %461 = vector.shape_cast %7 : vector<128x32xf32> to vector<2x8x8x32xf32>
    %462 = arith.addf %460, %461 : vector<2x8x8x32xf32>
    %c0_96 = arith.constant 0 : index
    %c0_97 = arith.constant 0 : index
    %463 = vector.load %arg10[%c0_96, %c0_97] : memref<1x32xf32, #tpu.memory_space<vmem>>, vector<1x32xf32>
    %464 = vector.shape_cast %463 : vector<1x32xf32> to vector<1x1x1x32xf32>
    %465 = vector.broadcast %464 : vector<1x1x1x32xf32> to vector<2x8x8x32xf32>
    %466 = arith.addf %462, %465 : vector<2x8x8x32xf32>
    %cst_98 = arith.constant 0.000000e+00 : f32
    %467 = vector.broadcast %cst_98 : f32 to vector<2x8x8x32xf32>
    %468 = arith.maximumf %466, %467 : vector<2x8x8x32xf32>
    %469 = vector.broadcast %445 : vector<2x8x8x1xf32> to vector<2x8x8x32xf32>
    %470 = arith.mulf %469, %468 : vector<2x8x8x32xf32>
    %cst_99 = arith.constant dense<0.000000e+00> : vector<2x8x32xf32>
    %471 = vector.multi_reduction <add>, %470, %cst_99 [2] : vector<2x8x8x32xf32> to vector<2x8x32xf32>
    %472 = vector.shape_cast %471 : vector<2x8x32xf32> to vector<16x32xf32>
    %c0_100 = arith.constant 0 : index
    %c0_101 = arith.constant 0 : index
    %473 = vector.load %arg11[%c0_100, %c0_101] : memref<32x16xf32, #tpu.memory_space<vmem>>, vector<32x16xf32>
    %474 = arith.truncf %472 : vector<16x32xf32> to vector<16x32xbf16>
    %475 = arith.truncf %473 : vector<32x16xf32> to vector<32x16xbf16>
    %cst_102 = arith.constant dense<0.000000e+00> : vector<16x16xf32>
    %476 = tpu.matmul %474, %475, %cst_102 {dimension_numbers = #tpu.dot_dimension_numbers<[1], [0], [0], [1], [0, 0, 1, 1], [], []>} : vector<16x32xbf16>, vector<32x16xbf16>, vector<16x16xf32> -> vector<16x16xf32>
    %cst_103 = arith.constant 0.000000e+00 : f32
    %477 = vector.broadcast %cst_103 : f32 to vector<16x16xf32>
    %478 = arith.maximumf %476, %477 : vector<16x16xf32>
    %479 = vector.shape_cast %468 : vector<2x8x8x32xf32> to vector<128x32xf32>
    %c0_104 = arith.constant 0 : index
    %c0_105 = arith.constant 0 : index
    %480 = vector.load %arg12[%c0_104, %c0_105] : memref<32x16xf32, #tpu.memory_space<vmem>>, vector<32x16xf32>
    %481 = arith.truncf %479 : vector<128x32xf32> to vector<128x32xbf16>
    %482 = arith.truncf %480 : vector<32x16xf32> to vector<32x16xbf16>
    %cst_106 = arith.constant dense<0.000000e+00> : vector<128x16xf32>
    %483 = tpu.matmul %481, %482, %cst_106 {dimension_numbers = #tpu.dot_dimension_numbers<[1], [0], [0], [1], [0, 0, 1, 1], [], []>} : vector<128x32xbf16>, vector<32x16xbf16>, vector<128x16xf32> -> vector<128x16xf32>
    %cst_107 = arith.constant 0.000000e+00 : f32
    %484 = vector.broadcast %cst_107 : f32 to vector<128x16xf32>
    %485 = arith.maximumf %483, %484 : vector<128x16xf32>
    %c0_108 = arith.constant 0 : index
    %c0_109 = arith.constant 0 : index
    %486 = vector.load %arg13[%c0_108, %c0_109] : memref<16x16xf32, #tpu.memory_space<vmem>>, vector<16x16xf32>
    %487 = arith.truncf %478 : vector<16x16xf32> to vector<16x16xbf16>
    %488 = arith.truncf %486 : vector<16x16xf32> to vector<16x16xbf16>
    %cst_110 = arith.constant dense<0.000000e+00> : vector<16x16xf32>
    %489 = tpu.matmul %487, %488, %cst_110 {dimension_numbers = #tpu.dot_dimension_numbers<[1], [0], [0], [1], [0, 0, 1, 1], [], []>} : vector<16x16xbf16>, vector<16x16xbf16>, vector<16x16xf32> -> vector<16x16xf32>
    %c0_111 = arith.constant 0 : index
    %c0_112 = arith.constant 0 : index
    %490 = vector.load %arg14[%c0_111, %c0_112] : memref<16x16xf32, #tpu.memory_space<vmem>>, vector<16x16xf32>
    %491 = arith.truncf %478 : vector<16x16xf32> to vector<16x16xbf16>
    %492 = arith.truncf %490 : vector<16x16xf32> to vector<16x16xbf16>
    %cst_113 = arith.constant dense<0.000000e+00> : vector<16x16xf32>
    %493 = tpu.matmul %491, %492, %cst_113 {dimension_numbers = #tpu.dot_dimension_numbers<[1], [0], [0], [1], [0, 0, 1, 1], [], []>} : vector<16x16xbf16>, vector<16x16xbf16>, vector<16x16xf32> -> vector<16x16xf32>
    %494 = vector.shape_cast %489 : vector<16x16xf32> to vector<2x8x16xf32>
    %495 = vector.shape_cast %494 : vector<2x8x16xf32> to vector<2x8x1x16xf32>
    %496 = vector.shape_cast %493 : vector<16x16xf32> to vector<2x8x16xf32>
    %497 = vector.shape_cast %496 : vector<2x8x16xf32> to vector<2x1x8x16xf32>
    %498 = vector.broadcast %495 : vector<2x8x1x16xf32> to vector<2x8x8x16xf32>
    %499 = vector.broadcast %497 : vector<2x1x8x16xf32> to vector<2x8x8x16xf32>
    %500 = arith.addf %498, %499 : vector<2x8x8x16xf32>
    %501 = vector.shape_cast %485 : vector<128x16xf32> to vector<2x8x8x16xf32>
    %502 = arith.addf %500, %501 : vector<2x8x8x16xf32>
    %c0_114 = arith.constant 0 : index
    %c0_115 = arith.constant 0 : index
    %503 = vector.load %arg15[%c0_114, %c0_115] : memref<1x16xf32, #tpu.memory_space<vmem>>, vector<1x16xf32>
    %504 = vector.shape_cast %503 : vector<1x16xf32> to vector<1x1x1x16xf32>
    %505 = vector.broadcast %504 : vector<1x1x1x16xf32> to vector<2x8x8x16xf32>
    %506 = arith.addf %502, %505 : vector<2x8x8x16xf32>
    %cst_116 = arith.constant 0.000000e+00 : f32
    %507 = vector.broadcast %cst_116 : f32 to vector<2x8x8x16xf32>
    %508 = arith.maximumf %506, %507 : vector<2x8x8x16xf32>
    %509 = vector.broadcast %445 : vector<2x8x8x1xf32> to vector<2x8x8x16xf32>
    %510 = arith.mulf %509, %508 : vector<2x8x8x16xf32>
    %cst_117 = arith.constant dense<0.000000e+00> : vector<2x8x16xf32>
    %511 = vector.multi_reduction <add>, %510, %cst_117 [2] : vector<2x8x8x16xf32> to vector<2x8x16xf32>
    %512 = vector.shape_cast %511 : vector<2x8x16xf32> to vector<16x16xf32>
    %c0_118 = arith.constant 0 : index
    %c0_119 = arith.constant 0 : index
    %513 = vector.load %arg16[%c0_118, %c0_119] : memref<16x16xf32, #tpu.memory_space<vmem>>, vector<16x16xf32>
    %514 = arith.truncf %512 : vector<16x16xf32> to vector<16x16xbf16>
    %515 = arith.truncf %513 : vector<16x16xf32> to vector<16x16xbf16>
    %cst_120 = arith.constant dense<0.000000e+00> : vector<16x16xf32>
    %516 = tpu.matmul %514, %515, %cst_120 {dimension_numbers = #tpu.dot_dimension_numbers<[1], [0], [0], [1], [0, 0, 1, 1], [], []>} : vector<16x16xbf16>, vector<16x16xbf16>, vector<16x16xf32> -> vector<16x16xf32>
    %cst_121 = arith.constant 0.000000e+00 : f32
    %517 = vector.broadcast %cst_121 : f32 to vector<16x16xf32>
    %518 = arith.maximumf %516, %517 : vector<16x16xf32>
    %519 = vector.shape_cast %518 : vector<16x16xf32> to vector<2x8x16xf32>
    %c0_122 = arith.constant 0 : index
    %c0_123 = arith.constant 0 : index
    %c0_124 = arith.constant 0 : index
    %520 = vector.load %arg18[%c0_122, %c0_123, %c0_124] : memref<2x8x16xf32, #tpu.memory_space<vmem>>, vector<2x8x16xf32>
    tpu.vector_store %arg18[%c0_122, %c0_123, %c0_124], %519 {strides = array<i32>} : memref<2x8x16xf32, #tpu.memory_space<vmem>>, vector<2x8x16xf32>,
    return
  }
  func.func @transform_0(%arg0: i32, %arg1: memref<2xi32, #tpu.memory_space<smem>>) -> (i32, i32, i32) {
    %c0_i32 = arith.constant 0 : i32
    %c0_i32_0 = arith.constant 0 : i32
    %c0_i32_1 = arith.constant 0 : i32
    return %arg0, %c0_i32, %c0_i32_0 : i32, i32, i32
  }
  func.func @transform_1(%arg0: i32, %arg1: memref<2xi32, #tpu.memory_space<smem>>) -> (i32, i32, i32) {
    %c0_i32 = arith.constant 0 : i32
    %c0_i32_0 = arith.constant 0 : i32
    %c0_i32_1 = arith.constant 0 : i32
    return %arg0, %c0_i32, %c0_i32_0 : i32, i32, i32
  }
  func.func @transform_2(%arg0: i32, %arg1: memref<2xi32, #tpu.memory_space<smem>>) -> (i32, i32, i32) {
    %c0_i32 = arith.constant 0 : i32
    %c0_i32_0 = arith.constant 0 : i32
    %c0_i32_1 = arith.constant 0 : i32
    return %arg0, %c0_i32, %c0_i32_0 : i32, i32, i32
  }
  func.func @transform_3(%arg0: i32, %arg1: memref<2xi32, #tpu.memory_space<smem>>) -> (i32, i32) {
    %c0_i32 = arith.constant 0 : i32
    %c0_i32_0 = arith.constant 0 : i32
    %c0_i32_1 = arith.constant 0 : i32
    return %c0_i32, %c0_i32_0 : i32, i32
  }
  func.func @transform_4(%arg0: i32, %arg1: memref<2xi32, #tpu.memory_space<smem>>) -> (i32, i32) {
    %c0_i32 = arith.constant 0 : i32
    %c0_i32_0 = arith.constant 0 : i32
    %c0_i32_1 = arith.constant 0 : i32
    return %c0_i32, %c0_i32_0 : i32, i32
  }
  func.func @transform_5(%arg0: i32, %arg1: memref<2xi32, #tpu.memory_space<smem>>) -> (i32, i32) {
    %c0_i32 = arith.constant 0 : i32
    %c0_i32_0 = arith.constant 0 : i32
    %c0_i32_1 = arith.constant 0 : i32
    return %c0_i32, %c0_i32_0 : i32, i32
  }
  func.func @transform_6(%arg0: i32, %arg1: memref<2xi32, #tpu.memory_space<smem>>) -> (i32, i32) {
    %c0_i32 = arith.constant 0 : i32
    %c0_i32_0 = arith.constant 0 : i32
    %c0_i32_1 = arith.constant 0 : i32
    return %c0_i32, %c0_i32_0 : i32, i32
  }
  func.func @transform_7(%arg0: i32, %arg1: memref<2xi32, #tpu.memory_space<smem>>) -> (i32, i32) {
    %c0_i32 = arith.constant 0 : i32
    %c0_i32_0 = arith.constant 0 : i32
    %c0_i32_1 = arith.constant 0 : i32
    return %c0_i32, %c0_i32_0 : i32, i32
  }
  func.func @transform_8(%arg0: i32, %arg1: memref<2xi32, #tpu.memory_space<smem>>) -> (i32, i32) {
    %c0_i32 = arith.constant 0 : i32
    %c0_i32_0 = arith.constant 0 : i32
    %c0_i32_1 = arith.constant 0 : i32
    return %c0_i32, %c0_i32_0 : i32, i32
  }
  func.func @transform_9(%arg0: i32, %arg1: memref<2xi32, #tpu.memory_space<smem>>) -> (i32, i32) {
    %c0_i32 = arith.constant 0 : i32
    %c0_i32_0 = arith.constant 0 : i32
    %c0_i32_1 = arith.constant 0 : i32
    return %c0_i32, %c0_i32_0 : i32, i32
  }
  func.func @transform_10(%arg0: i32, %arg1: memref<2xi32, #tpu.memory_space<smem>>) -> (i32, i32) {
    %c0_i32 = arith.constant 0 : i32
    %c0_i32_0 = arith.constant 0 : i32
    %c0_i32_1 = arith.constant 0 : i32
    return %c0_i32, %c0_i32_0 : i32, i32
  }
  func.func @transform_11(%arg0: i32, %arg1: memref<2xi32, #tpu.memory_space<smem>>) -> (i32, i32) {
    %c0_i32 = arith.constant 0 : i32
    %c0_i32_0 = arith.constant 0 : i32
    %c0_i32_1 = arith.constant 0 : i32
    return %c0_i32, %c0_i32_0 : i32, i32
  }
  func.func @transform_12(%arg0: i32, %arg1: memref<2xi32, #tpu.memory_space<smem>>) -> (i32, i32) {
    %c0_i32 = arith.constant 0 : i32
    %c0_i32_0 = arith.constant 0 : i32
    %c0_i32_1 = arith.constant 0 : i32
    return %c0_i32, %c0_i32_0 : i32, i32
  }
  func.func @transform_13(%arg0: i32, %arg1: memref<2xi32, #tpu.memory_space<smem>>) -> (i32, i32) {
    %c0_i32 = arith.constant 0 : i32
    %c0_i32_0 = arith.constant 0 : i32
    %c0_i32_1 = arith.constant 0 : i32
    return %c0_i32, %c0_i32_0 : i32, i32
  }
  func.func @transform_14(%arg0: i32, %arg1: memref<2xi32, #tpu.memory_space<smem>>) -> (i32, i32) {
    %c0_i32 = arith.constant 0 : i32
    %c0_i32_0 = arith.constant 0 : i32
    %c0_i32_1 = arith.constant 0 : i32
    return %c0_i32, %c0_i32_0 : i32, i32
  }
  func.func @transform_15(%arg0: i32, %arg1: memref<2xi32, #tpu.memory_space<smem>>) -> (i32, i32) {
    %c0_i32 = arith.constant 0 : i32
    %c0_i32_0 = arith.constant 0 : i32
    %c0_i32_1 = arith.constant 0 : i32
    return %c0_i32, %c0_i32_0 : i32, i32
  }
  func.func @transform_16(%arg0: i32, %arg1: memref<2xi32, #tpu.memory_space<smem>>) -> (i32, i32, i32) {
    %c0_i32 = arith.constant 0 : i32
    %c0_i32_0 = arith.constant 0 : i32
    %c0_i32_1 = arith.constant 0 : i32
    return %arg0, %c0_i32, %c0_i32_0 : i32, i32, i32
  }
  func.func @transform_17(%arg0: i32, %arg1: memref<2xi32, #tpu.memory_space<smem>>) -> (i32, i32, i32) {
    %c0_i32 = arith.constant 0 : i32
    %c0_i32_0 = arith.constant 0 : i32
    %c0_i32_1 = arith.constant 0 : i32
    return %arg0, %c0_i32, %c0_i32_0 : i32, i32, i32
  }
}

</mosaic_0001>

<llo_original>
// kernel: tpu_custom_call.1
$region0: #{tpu_custom_call.1}
  #allocation0 [shape = 'u32[]', space=smem, size = 0x4, offset = 0x4, fixed_abs, tag = 'smem constant byte address 0x4 - core index']
  #allocation1 [shape = 'u32[144,128]{1,0:T(1,128)}', space=vmem, size = 0x12000, scoped, tag = 'internal scratch']
  #allocation2 [shape = 's32[1]{0}', space=sflag, size = 0x4, scoped, tag = 'scoped memory for tpu_custom_call.1']
  #allocation3 [shape = 'u8[512]{0}', space=smem, size = 0x200, scoped, tag = 'prefetched SMEM operand 0']
  %s0 = inlined_call_operand.vmem [shape: s32[2], index: 0, kind: input, shape index: {}]
  %s1 = inlined_call_operand.vmem [shape: f32[2,8,32], index: 1, kind: input, shape index: {}]
  %s2 = inlined_call_operand.vmem [shape: f32[2,64,6], index: 2, kind: input, shape index: {}]
  %s3 = inlined_call_operand.vmem [shape: f32[2,8,8], index: 3, kind: input, shape index: {}]
  %s4 = inlined_call_operand.vmem [shape: f32[6,32], index: 4, kind: input, shape index: {}]
  %s5 = inlined_call_operand.vmem [shape: f32[32,16], index: 5, kind: input, shape index: {}]
  %s6 = inlined_call_operand.vmem [shape: f32[1,17], index: 6, kind: input, shape index: {}]
  %s7 = inlined_call_operand.vmem [shape: f32[32,32], index: 7, kind: input, shape index: {}]
  %s8 = inlined_call_operand.vmem [shape: f32[32,32], index: 8, kind: input, shape index: {}]
  %s9 = inlined_call_operand.vmem [shape: f32[1,32], index: 9, kind: input, shape index: {}]
  %s10 = inlined_call_operand.vmem [shape: f32[32,16], index: 10, kind: input, shape index: {}]
  %s11 = inlined_call_operand.vmem [shape: f32[32,16], index: 11, kind: input, shape index: {}]
  %s12 = inlined_call_operand.vmem [shape: f32[16,16], index: 12, kind: input, shape index: {}]
  %s13 = inlined_call_operand.vmem [shape: f32[16,16], index: 13, kind: input, shape index: {}]
  %s14 = inlined_call_operand.vmem [shape: f32[1,16], index: 14, kind: input, shape index: {}]
  %s15 = inlined_call_operand.vmem [shape: f32[16,16], index: 15, kind: input, shape index: {}]
  %s16 = inlined_call_operand.vmem [shape: f32[16,16], index: 16, kind: input, shape index: {}]
  %s17 = inlined_call_operand.hbm [shape: f32[2,8,16], index: 17, kind: output, shape index: {0}]
  %s18 = inlined_call_operand.hbm [shape: f32[2,8,8], index: 18, kind: output, shape index: {1}]
  %19 = xla_tuple %s17, %s18
  %s20 = sld [smem:[#allocation0]]
  $region82: #{tpu_custom_call.1} parent=0
    _
  %s22 = ssub.s32 1, %s20
  %s23 = scalar_select 0, %s22, %s20
  %s24 = sshll.u32 %s0, 4
  %s25 = int_to_ptr.vmem [resolvable:$true] %s24
  %27 = dma.vmem_to_smem %s25, 16, [#allocation3], [#allocation2]
  %28 = dma.done [#allocation2], 16
  %29 = sfence
  $region1: #{tpu_custom_call.1} parent=0
    #allocation4 [shape = 'u8[8192]{0}', space=vmem, size = 0x2000, scoped, tag = 'output window, operand 0, single buffered']
    #allocation5 [shape = 's32[1]{0}', space=sflag, size = 0x4, scoped, tag = 'scoped memory for tpu_custom_call.1']
    #allocation6 [shape = 'u8[8192]{0}', space=vmem, size = 0x2000, scoped, tag = 'output window, operand 1, single buffered']
    #allocation7 [shape = 's32[1]{0}', space=sflag, size = 0x4, scoped, tag = 'scoped memory for tpu_custom_call.1']
    %30 = vsyncpa [#allocation5], 0
    %31 = vsyncpa [#allocation7], 0
    // Predicated region
    $region2: #{tpu_custom_call.1} parent=1 // pred_check
      _
    $region3: #{tpu_custom_call.1} parent=1 // pred_check_branch
      %33 = sbr.rel (0) target = $region5
    $region4: #{tpu_custom_call.1} parent=1 // pred_region
      _
    $region5: #{tpu_custom_call.1} parent=1 // pred_fallthru
      _
    // Predicated region
    $region6: #{tpu_custom_call.1} parent=1 // pred_check
      _
    $region7: #{tpu_custom_call.1} parent=1 // pred_check_branch
      %35 = sbr.rel (0) target = $region9
    $region8: #{tpu_custom_call.1} parent=1 // pred_region
      _
    $region9: #{tpu_custom_call.1} parent=1 // pred_fallthru
      _
    // Predicated region
    $region10: #{tpu_custom_call.1} parent=1 // pred_check
      _
    $region11: #{tpu_custom_call.1} parent=1 // pred_check_branch
      %37 = sbr.rel (0) target = $region13
    $region12: #{tpu_custom_call.1} parent=1 // pred_region
      _
    $region13: #{tpu_custom_call.1} parent=1 // pred_fallthru
      _
    // Predicated region
    $region14: #{tpu_custom_call.1} parent=1 // pred_check
      _
    $region15: #{tpu_custom_call.1} parent=1 // pred_check_branch
      %39 = sbr.rel (0) target = $region17
    $region16: #{tpu_custom_call.1} parent=1 // pred_region
      _
    $region17: #{tpu_custom_call.1} parent=1 // pred_fallthru
      _
    // Predicated region
    $region18: #{tpu_custom_call.1} parent=1 // pred_check
      _
    $region19: #{tpu_custom_call.1} parent=1 // pred_check_branch
      %41 = sbr.rel (0) target = $region21
    $region20: #{tpu_custom_call.1} parent=1 // pred_region
      _
    $region21: #{tpu_custom_call.1} parent=1 // pred_fallthru
      _
    // Predicated region
    $region22: #{tpu_custom_call.1} parent=1 // pred_check
      _
    $region23: #{tpu_custom_call.1} parent=1 // pred_check_branch
      %43 = sbr.rel (0) target = $region25
    $region24: #{tpu_custom_call.1} parent=1 // pred_region
      _
    $region25: #{tpu_custom_call.1} parent=1 // pred_fallthru
      _
    // Predicated region
    $region26: #{tpu_custom_call.1} parent=1 // pred_check
      _
    $region27: #{tpu_custom_call.1} parent=1 // pred_check_branch
      %45 = sbr.rel (0) target = $region29
    $region28: #{tpu_custom_call.1} parent=1 // pred_region
      _
    $region29: #{tpu_custom_call.1} parent=1 // pred_fallthru
      _
    // Predicated region
    $region30: #{tpu_custom_call.1} parent=1 // pred_check
      _
    $region31: #{tpu_custom_call.1} parent=1 // pred_check_branch
      %47 = sbr.rel (0) target = $region33
    $region32: #{tpu_custom_call.1} parent=1 // pred_region
      _
    $region33: #{tpu_custom_call.1} parent=1 // pred_fallthru
      _
    // Predicated region
    $region34: #{tpu_custom_call.1} parent=1 // pred_check
      _
    $region35: #{tpu_custom_call.1} parent=1 // pred_check_branch
      %49 = sbr.rel (0) target = $region37
    $region36: #{tpu_custom_call.1} parent=1 // pred_region
      _
    $region37: #{tpu_custom_call.1} parent=1 // pred_fallthru
      _
    // Predicated region
    $region38: #{tpu_custom_call.1} parent=1 // pred_check
      _
    $region39: #{tpu_custom_call.1} parent=1 // pred_check_branch
      %51 = sbr.rel (0) target = $region41
    $region40: #{tpu_custom_call.1} parent=1 // pred_region
      _
    $region41: #{tpu_custom_call.1} parent=1 // pred_fallthru
      _
    // Predicated region
    $region42: #{tpu_custom_call.1} parent=1 // pred_check
      _
    $region43: #{tpu_custom_call.1} parent=1 // pred_check_branch
      %53 = sbr.rel (0) target = $region45
    $region44: #{tpu_custom_call.1} parent=1 // pred_region
      _
    $region45: #{tpu_custom_call.1} parent=1 // pred_fallthru
      _
    // Predicated region
    $region46: #{tpu_custom_call.1} parent=1 // pred_check
      _
    $region47: #{tpu_custom_call.1} parent=1 // pred_check_branch
      %55 = sbr.rel (0) target = $region49
    $region48: #{tpu_custom_call.1} parent=1 // pred_region
      _
    $region49: #{tpu_custom_call.1} parent=1 // pred_fallthru
      _
    // Predicated region
    $region50: #{tpu_custom_call.1} parent=1 // pred_check
      _
    $region51: #{tpu_custom_call.1} parent=1 // pred_check_branch
      %57 = sbr.rel (0) target = $region53
    $region52: #{tpu_custom_call.1} parent=1 // pred_region
      _
    $region53: #{tpu_custom_call.1} parent=1 // pred_fallthru
      _
    // Predicated region
    $region54: #{tpu_custom_call.1} parent=1 // pred_check
      _
    $region55: #{tpu_custom_call.1} parent=1 // pred_check_branch
      %59 = sbr.rel (0) target = $region57
    $region56: #{tpu_custom_call.1} parent=1 // pred_region
      _
    $region57: #{tpu_custom_call.1} parent=1 // pred_fallthru
      _
    // Predicated region
    $region58: #{tpu_custom_call.1} parent=1 // pred_check
      _
    $region59: #{tpu_custom_call.1} parent=1 // pred_check_branch
      %61 = sbr.rel (0) target = $region61
    $region60: #{tpu_custom_call.1} parent=1 // pred_region
      _
    $region61: #{tpu_custom_call.1} parent=1 // pred_fallthru
      _
    // Predicated region
    $region62: #{tpu_custom_call.1} parent=1 // pred_check
      _
    $region63: #{tpu_custom_call.1} parent=1 // pred_check_branch
      %63 = sbr.rel (0) target = $region65
    $region64: #{tpu_custom_call.1} parent=1 // pred_region
      _
    $region65: #{tpu_custom_call.1} parent=1 // pred_fallthru
      _
    %v65 = vld [vmem:[%s1] sm:$0xff]
    %v66 = vld [vmem:[%s1 + $0x8] sm:$0xff]
    %v67 = vld [vmem:[%s2] sm:$0xff]
    %v68 = vld [vmem:[%s2 + $0x8] sm:$0xff]
    %v69 = vld [vmem:[%s2 + $0x10] sm:$0xff]
    %v70 = vld [vmem:[%s2 + $0x18] sm:$0xff]
    %v71 = vld [vmem:[%s2 + $0x20] sm:$0xff]
    %v72 = vld [vmem:[%s2 + $0x28] sm:$0xff]
    %v73 = vld [vmem:[%s2 + $0x30] sm:$0xff]
    %v74 = vld [vmem:[%s2 + $0x38] sm:$0xff]
    %v75 = vld [vmem:[%s2 + $0x40] sm:$0xff]
    %v76 = vld [vmem:[%s2 + $0x48] sm:$0xff]
    %v77 = vld [vmem:[%s2 + $0x50] sm:$0xff]
    %v78 = vld [vmem:[%s2 + $0x58] sm:$0xff]
    %v79 = vld [vmem:[%s2 + $0x60] sm:$0xff]
    %v80 = vld [vmem:[%s2 + $0x68] sm:$0xff]
    %v81 = vld [vmem:[%s2 + $0x70] sm:$0xff]
    %v82 = vld [vmem:[%s2 + $0x78] sm:$0xff]
    %v83 = vld [vmem:[%s4] sm:$0x3f]
    %v84 = vpack.c.bf16 %v68, %v67
    %v85 = vpack.c.bf16 %v70, %v69
    %v86 = vpack.c.bf16 %v72, %v71
    %v87 = vpack.c.bf16 %v74, %v73
    %v88 = vpack.c.bf16 %v76, %v75
    %v89 = vpack.c.bf16 %v78, %v77
    %v90 = vpack.c.bf16 %v80, %v79
    %v91 = vpack.c.bf16 %v82, %v81
    %v92 = vpack.c.bf16 %v83, %v83
    %vm93 = vcmask 48128
    %v95 = vsel %vm93, %v84, 0
    %v98 = vsel %vm93, %v85, 0
    %v101 = vsel %vm93, %v86, 0
    %v104 = vsel %vm93, %v87, 0
    %v107 = vsel %vm93, %v88, 0
    %v110 = vsel %vm93, %v89, 0
    %v113 = vsel %vm93, %v90, 0
    %v116 = vsel %vm93, %v91, 0
    %vm118 = vcmask 1042432
    %v120 = vsel %vm118, %v92, 0
    %122 = vmatprep.subr.bf16.mxu0 0
    %123 = vmatpush1.bf16.msra.mxu0 %v120
    %124 = vmatprep.subr.bf16.mxu0 0
    %125 = vmatpush1.bf16.msra.mxu0 0
    %126 = vmatprep.subr.bf16.mxu0 0
    %127 = vmatpush1.bf16.msra.mxu0 0
    %128 = vmatprep.subr.bf16.mxu0 0
    %129 = vmatpush1.bf16.msra.mxu0 0
    %130 = vmatprep.subr.bf16.mxu0 0
    %131 = vmatpush1.bf16.msra.mxu0 0
    %132 = vmatprep.subr.bf16.mxu0 0
    %133 = vmatpush1.bf16.msra.mxu0 0
    %134 = vmatprep.subr.bf16.mxu0 0
    %135 = vmatpush1.bf16.msra.mxu0 0
    %136 = vmatprep.subr.bf16.mxu0 0
    %137 = vmatpush1.bf16.msra.mxu0 0
    %138 = vmatprep.subr.bf16.mxu0 0
    %139 = vmatpush1.bf16.msra.mxu0 0
    %140 = vmatprep.subr.bf16.mxu0 0
    %141 = vmatpush1.bf16.msra.mxu0 0
    %142 = vmatprep.subr.bf16.mxu0 0
    %143 = vmatpush1.bf16.msra.mxu0 0
    %144 = vmatprep.subr.bf16.mxu0 0
    %145 = vmatpush1.bf16.msra.mxu0 0
    %146 = vmatprep.subr.bf16.mxu0 0
    %147 = vmatpush1.bf16.msra.mxu0 0
    %148 = vmatprep.subr.bf16.mxu0 0
    %149 = vmatpush1.bf16.msra.mxu0 0
    %150 = vmatprep.subr.bf16.mxu0 0
    %151 = vmatpush1.bf16.msra.mxu0 0
    %152 = vmatprep.subr.bf16.mxu0 0
    %153 = vmatpush1.bf16.msra.mxu0 0
    %154 = vmatprep.mubr.bf16.mxu0 0
    %155 = vmatmul.mubr.bf16.gmra.mrb[0].mxu0 %v95
    %v156 = vpop.f32.mrb[0].mxu0
    %v157 = vadd.f32 0.0, %v156
    %v158 = vpop.f32.mrb[0].mxu0
    %v159 = vpop.f32.mrb[0].mxu0
    %v160 = vadd.f32 0.0, %v159
    %v161 = vpop.f32.mrb[0].mxu0
    %162 = vmatprep.mubr.bf16.mxu0 0
    %163 = vmatmul.mubr.bf16.gmra.mrb[0].mxu0 %v98
    %v164 = vpop.f32.mrb[0].mxu0
    %v165 = vadd.f32 0.0, %v164
    %v166 = vpop.f32.mrb[0].mxu0
    %v167 = vpop.f32.mrb[0].mxu0
    %v168 = vadd.f32 0.0, %v167
    %v169 = vpop.f32.mrb[0].mxu0
    %170 = vmatprep.mubr.bf16.mxu0 0
    %171 = vmatmul.mubr.bf16.gmra.mrb[0].mxu0 %v101
    %v172 = vpop.f32.mrb[0].mxu0
    %v173 = vadd.f32 0.0, %v172
    %v174 = vpop.f32.mrb[0].mxu0
    %v175 = vpop.f32.mrb[0].mxu0
    %v176 = vadd.f32 0.0, %v175
    %v177 = vpop.f32.mrb[0].mxu0
    %178 = vmatprep.mubr.bf16.mxu0 0
    %179 = vmatmul.mubr.bf16.gmra.mrb[0].mxu0 %v104
    %v180 = vpop.f32.mrb[0].mxu0
    %v181 = vadd.f32 0.0, %v180
    %v182 = vpop.f32.mrb[0].mxu0
    %v183 = vpop.f32.mrb[0].mxu0
    %v184 = vadd.f32 0.0, %v183
    %v185 = vpop.f32.mrb[0].mxu0
    %186 = vmatprep.mubr.bf16.mxu0 0
    %187 = vmatmul.mubr.bf16.gmra.mrb[0].mxu0 %v107
    %v188 = vpop.f32.mrb[0].mxu0
    %v189 = vadd.f32 0.0, %v188
    %v190 = vpop.f32.mrb[0].mxu0
    %v191 = vpop.f32.mrb[0].mxu0
    %v192 = vadd.f32 0.0, %v191
    %v193 = vpop.f32.mrb[0].mxu0
    %194 = vmatprep.mubr.bf16.mxu0 0
    %195 = vmatmul.mubr.bf16.gmra.mrb[0].mxu0 %v110
    %v196 = vpop.f32.mrb[0].mxu0
    %v197 = vadd.f32 0.0, %v196
    %v198 = vpop.f32.mrb[0].mxu0
    %v199 = vpop.f32.mrb[0].mxu0
    %v200 = vadd.f32 0.0, %v199
    %v201 = vpop.f32.mrb[0].mxu0
    %202 = vmatprep.mubr.bf16.mxu0 0
    %203 = vmatmul.mubr.bf16.gmra.mrb[0].mxu0 %v113
    %v204 = vpop.f32.mrb[0].mxu0
    %v205 = vadd.f32 0.0, %v204
    %v206 = vpop.f32.mrb[0].mxu0
    %v207 = vpop.f32.mrb[0].mxu0
    %v208 = vadd.f32 0.0, %v207
    %v209 = vpop.f32.mrb[0].mxu0
    %210 = vmatprep.mubr.bf16.mxu0 0
    %211 = vmatmul.mubr.bf16.gmra.mrb[0].mxu0 %v116
    %v212 = vpop.f32.mrb[0].mxu0
    %v213 = vadd.f32 0.0, %v212
    %v214 = vpop.f32.mrb[0].mxu0
    %v215 = vpop.f32.mrb[0].mxu0
    %v216 = vadd.f32 0.0, %v215
    %v217 = vpop.f32.mrb[0].mxu0
    %218 = vdwg.mxu0
    %v219 = vld [vmem:[%s5] sm:$0xff]
    %v220 = vld [vmem:[%s5 + $0x8] sm:$0xff]
    %v221 = vld [vmem:[%s5 + $0x10] sm:$0xff]
    %v222 = vld [vmem:[%s5 + $0x18] sm:$0xff]
    %vm223 = vcmask 261120
    %v225 = vsel %vm223, %v65, 0
    %v228 = vsel %vm223, %v66, 0
    %230 = vmatprep.subr.mxu0 0.0
    %231 = vmatpush1.msra.mxu0 %v219
    %232 = vmatprep.subr.mxu0 0.0
    %233 = vmatpush1.msra.mxu0 %v220
    %234 = vmatprep.subr.mxu0 0.0
    %235 = vmatpush1.msra.mxu0 %v221
    %236 = vmatprep.subr.mxu0 0.0
    %237 = vmatpush1.msra.mxu0 %v222
    %238 = vmatprep.subr.mxu0 0.0
    %239 = vmatpush1.msra.mxu0 0.0
    %240 = vmatprep.subr.mxu0 0.0
    %241 = vmatpush1.msra.mxu0 0.0
    %242 = vmatprep.subr.mxu0 0.0
    %243 = vmatpush1.msra.mxu0 0.0
    %244 = vmatprep.subr.mxu0 0.0
    %245 = vmatpush1.msra.mxu0 0.0
    %246 = vmatprep.subr.mxu0 0.0
    %247 = vmatpush1.msra.mxu0 0.0
    %248 = vmatprep.subr.mxu0 0.0
    %249 = vmatpush1.msra.mxu0 0.0
    %250 = vmatprep.subr.mxu0 0.0
    %251 = vmatpush1.msra.mxu0 0.0
    %252 = vmatprep.subr.mxu0 0.0
    %253 = vmatpush1.msra.mxu0 0.0
    %254 = vmatprep.subr.mxu0 0.0
    %255 = vmatpush1.msra.mxu0 0.0
    %256 = vmatprep.subr.mxu0 0.0
    %257 = vmatpush1.msra.mxu0 0.0
    %258 = vmatprep.subr.mxu0 0.0
    %259 = vmatpush1.msra.mxu0 0.0
    %260 = vmatprep.subr.mxu0 0.0
    %261 = vmatpush1.msra.mxu0 0.0
    %262 = vmatprep.subr.mxu0 0.0
    %263 = vmatpush1.msra.mxu0 0.0
    %264 = vmatprep.subr.mxu0 0.0
    %265 = vmatpush1.msra.mxu0 0.0
    %266 = vmatprep.subr.mxu0 0.0
    %267 = vmatpush1.msra.mxu0 0.0
    %268 = vmatprep.subr.mxu0 0.0
    %269 = vmatpush1.msra.mxu0 0.0
    %270 = vmatprep.subr.mxu0 0.0
    %271 = vmatpush1.msra.mxu0 0.0
    %272 = vmatprep.subr.mxu0 0.0
    %273 = vmatpush1.msra.mxu0 0.0
    %274 = vmatprep.subr.mxu0 0.0
    %275 = vmatpush1.msra.mxu0 0.0
    %276 = vmatprep.subr.mxu0 0.0
    %277 = vmatpush1.msra.mxu0 0.0
    %278 = vmatprep.subr.mxu0 0.0
    %279 = vmatpush1.msra.mxu0 0.0
    %280 = vmatprep.subr.mxu0 0.0
    %281 = vmatpush1.msra.mxu0 0.0
    %282 = vmatprep.subr.mxu0 0.0
    %283 = vmatpush1.msra.mxu0 0.0
    %284 = vmatprep.subr.mxu0 0.0
    %285 = vmatpush1.msra.mxu0 0.0
    %286 = vmatprep.subr.mxu0 0.0
    %287 = vmatpush1.msra.mxu0 0.0
    %288 = vmatprep.subr.mxu0 0.0
    %289 = vmatpush1.msra.mxu0 0.0
    %290 = vmatprep.subr.mxu0 0.0
    %291 = vmatpush1.msra.mxu0 0.0
    %292 = vmatprep.subr.mxu0 0.0
    %293 = vmatpush1.msra.mxu0 0.0
    %294 = vmatprep.mubr.f32.mxu0 0.0
    %295 = vmatmul.mubr.f32.gmra.mrb[0].mxu0 %v225
    %v296 = vpop.f32.mrb[0].mxu0
    %v297 = vadd.f32 0.0, %v296
    %v298 = vpop.f32.mrb[0].mxu0
    %299 = vmatprep.mubr.f32.mxu0 0.0
    %300 = vmatmul.mubr.f32.gmra.mrb[0].mxu0 %v228
    %v301 = vpop.f32.mrb[0].mxu0
    %v302 = vadd.f32 0.0, %v301
    %v303 = vpop.f32.mrb[0].mxu0
    %304 = vdwg.mxu0
    %v305 = vld [vmem:[%s6] sm:$0x1]
    %307 = vrot.lane.b32.xlu0 %v305, 112
    %v308 = vpop.permute.xlu0 %307
    %s310 = vtos %v308
    %s311 = smul.u32 0, 2
    %v312 = vlaneseq
    %v313 = vshrl.u32 %v312, 7
    %v314 = vlaneseq
    %v315 = vand.u32 %v314, 127
    %316 = vxpose.xlu0.b32.start [1/16] %v297, 128
    %317 = vxpose.xlu0.b32.cont [2/16] 0.0, 128
    %318 = vxpose.xlu0.b32.cont [3/16] 0.0, 128
    %319 = vxpose.xlu0.b32.cont [4/16] 0.0, 128
    %320 = vxpose.xlu0.b32.cont [5/16] 0.0, 128
    %321 = vxpose.xlu0.b32.cont [6/16] 0.0, 128
    %322 = vxpose.xlu0.b32.cont [7/16] 0.0, 128
    %323 = vxpose.xlu0.b32.cont [8/16] 0.0, 128
    %324 = vxpose.xlu0.b32.cont [9/16] 0.0, 128
    %325 = vxpose.xlu0.b32.cont [10/16] 0.0, 128
    %326 = vxpose.xlu0.b32.cont [11/16] 0.0, 128
    %327 = vxpose.xlu0.b32.cont [12/16] 0.0, 128
    %328 = vxpose.xlu0.b32.cont [13/16] 0.0, 128
    %329 = vxpose.xlu0.b32.cont [14/16] 0.0, 128
    %330 = vxpose.xlu0.b32.cont [15/16] 0.0, 128
    %331 = vxpose.xlu0.b32.end [16/16] 0.0, 128
    %v332 = vpop.trf.xlu0
    %v333 = vpop.trf.xlu0
    %v334 = vpop.trf.xlu0
    %v335 = vpop.trf.xlu0
    %v336 = vpop.trf.xlu0
    %v337 = vpop.trf.xlu0
    %v338 = vpop.trf.xlu0
    %v339 = vpop.trf.xlu0
    %v340 = vpop.trf.xlu0
    %v341 = vpop.trf.xlu0
    %v342 = vpop.trf.xlu0
    %v343 = vpop.trf.xlu0
    %v344 = vpop.trf.xlu0
    %v345 = vpop.trf.xlu0
    %v346 = vpop.trf.xlu0
    %v347 = vpop.trf.xlu0
    %s348 = vtos %v305
    %350 = vset.pattern.permute.xlu0 0
    %351 = vperm.xlu0 %350, %v297
    %v352 = vpop.permute.xlu0 %351
    %v354 = vlaneseq
    %v355 = vshrl.u32 %v354, 7
    %v356 = vsub.s32 0, %v355
    %v357 = vrot.slane %v332, %v356
    %v358 = vsub.f32 %v352, %v357
    %v359 = vand.u32 2147483647, %v358
    %v360 = vstv %s348
    %v361 = vmul.f32 %v360, %v359
    %v362 = vadd.f32 %v361, 0.0
    %363 = vrot.lane.b32.xlu0 %v305, 127
    %v364 = vpop.permute.xlu0 %363
    %s366 = vtos %v364
    %367 = vset.pattern.permute.xlu0 1
    %368 = vperm.xlu0 %367, %v297
    %v369 = vpop.permute.xlu0 %368
    %v371 = vlaneseq
    %v372 = vshrl.u32 %v371, 7
    %v373 = vsub.s32 1, %v372
    %v374 = vrot.slane %v332, %v373
    %v375 = vsub.f32 %v369, %v374
    %v376 = vand.u32 2147483647, %v375
    %v377 = vstv %s366
    %v378 = vmul.f32 %v377, %v376
    %v379 = vadd.f32 %v362, %v378
    %380 = vrot.lane.b32.xlu0 %v305, 126
    %v381 = vpop.permute.xlu0 %380
    %s383 = vtos %v381
    %384 = vset.pattern.permute.xlu0 2
    %385 = vperm.xlu0 %384, %v297
    %v386 = vpop.permute.xlu0 %385
    %v388 = vlaneseq
    %v389 = vshrl.u32 %v388, 7
    %v390 = vsub.s32 2, %v389
    %v391 = vrot.slane %v332, %v390
    %v392 = vsub.f32 %v386, %v391
    %v393 = vand.u32 2147483647, %v392
    %v394 = vstv %s383
    %v395 = vmul.f32 %v394, %v393
    %v396 = vadd.f32 %v379, %v395
    %397 = vrot.lane.b32.xlu0 %v305, 125
    %v398 = vpop.permute.xlu0 %397
    %s400 = vtos %v398
    %401 = vset.pattern.permute.xlu0 3
    %402 = vperm.xlu0 %401, %v297
    %v403 = vpop.permute.xlu0 %402
    %v405 = vlaneseq
    %v406 = vshrl.u32 %v405, 7
    %v407 = vsub.s32 3, %v406
    %v408 = vrot.slane %v332, %v407
    %v409 = vsub.f32 %v403, %v408
    %v410 = vand.u32 2147483647, %v409
    %v411 = vstv %s400
    %v412 = vmul.f32 %v411, %v410
    %v413 = vadd.f32 %v396, %v412
    %414 = vrot.lane.b32.xlu0 %v305, 124
    %v415 = vpop.permute.xlu0 %414
    %s417 = vtos %v415
    %418 = vset.pattern.permute.xlu0 4
    %419 = vperm.xlu0 %418, %v297
    %v420 = vpop.permute.xlu0 %419
    %v422 = vlaneseq
    %v423 = vshrl.u32 %v422, 7
    %v424 = vsub.s32 4, %v423
    %v425 = vrot.slane %v332, %v424
    %v426 = vsub.f32 %v420, %v425
    %v427 = vand.u32 2147483647, %v426
    %v428 = vstv %s417
    %v429 = vmul.f32 %v428, %v427
    %v430 = vadd.f32 %v413, %v429
    %431 = vrot.lane.b32.xlu0 %v305, 123
    %v432 = vpop.permute.xlu0 %431
    %s434 = vtos %v432
    %435 = vset.pattern.permute.xlu0 5
    %436 = vperm.xlu0 %435, %v297
    %v437 = vpop.permute.xlu0 %436
    %v439 = vlaneseq
    %v440 = vshrl.u32 %v439, 7
    %v441 = vsub.s32 5, %v440
    %v442 = vrot.slane %v332, %v441
    %v443 = vsub.f32 %v437, %v442
    %v444 = vand.u32 2147483647, %v443
    %v445 = vstv %s434
    %v446 = vmul.f32 %v445, %v444
    %v447 = vadd.f32 %v430, %v446
    %448 = vrot.lane.b32.xlu0 %v305, 122
    %v449 = vpop.permute.xlu0 %448
    %s451 = vtos %v449
    %452 = vset.pattern.permute.xlu0 6
    %453 = vperm.xlu0 %452, %v297
    %v454 = vpop.permute.xlu0 %453
    %v456 = vlaneseq
    %v457 = vshrl.u32 %v456, 7
    %v458 = vsub.s32 6, %v457
    %v459 = vrot.slane %v332, %v458
    %v460 = vsub.f32 %v454, %v459
    %v461 = vand.u32 2147483647, %v460
    %v462 = vstv %s451
    %v463 = vmul.f32 %v462, %v461
    %v464 = vadd.f32 %v447, %v463
    %465 = vrot.lane.b32.xlu0 %v305, 121
    %v466 = vpop.permute.xlu0 %465
    %s468 = vtos %v466
    %469 = vset.pattern.permute.xlu0 7
    %470 = vperm.xlu0 %469, %v297
    %v471 = vpop.permute.xlu0 %470
    %v473 = vlaneseq
    %v474 = vshrl.u32 %v473, 7
    %v475 = vsub.s32 7, %v474
    %v476 = vrot.slane %v332, %v475
    %v477 = vsub.f32 %v471, %v476
    %v478 = vand.u32 2147483647, %v477
    %v479 = vstv %s468
    %v480 = vmul.f32 %v479, %v478
    %v481 = vadd.f32 %v464, %v480
    %482 = vrot.lane.b32.xlu0 %v305, 120
    %v483 = vpop.permute.xlu0 %482
    %s485 = vtos %v483
    %486 = vset.pattern.permute.xlu0 8
    %487 = vperm.xlu0 %486, %v297
    %v488 = vpop.permute.xlu0 %487
    %v490 = vlaneseq
    %v491 = vshrl.u32 %v490, 7
    %v492 = vsub.s32 0, %v491
    %v493 = vrot.slane %v333, %v492
    %v494 = vsub.f32 %v488, %v493
    %v495 = vand.u32 2147483647, %v494
    %v496 = vstv %s485
    %v497 = vmul.f32 %v496, %v495
    %v498 = vadd.f32 %v481, %v497
    %499 = vrot.lane.b32.xlu0 %v305, 119
    %v500 = vpop.permute.xlu0 %499
    %s502 = vtos %v500
    %503 = vset.pattern.permute.xlu0 9
    %504 = vperm.xlu0 %503, %v297
    %v505 = vpop.permute.xlu0 %504
    %v507 = vlaneseq
    %v508 = vshrl.u32 %v507, 7
    %v509 = vsub.s32 1, %v508
    %v510 = vrot.slane %v333, %v509
    %v511 = vsub.f32 %v505, %v510
    %v512 = vand.u32 2147483647, %v511
    %v513 = vstv %s502
    %v514 = vmul.f32 %v513, %v512
    %v515 = vadd.f32 %v498, %v514
    %516 = vrot.lane.b32.xlu0 %v305, 118
    %v517 = vpop.permute.xlu0 %516
    %s519 = vtos %v517
    %520 = vset.pattern.permute.xlu0 10
    %521 = vperm.xlu0 %520, %v297
    %v522 = vpop.permute.xlu0 %521
    %v524 = vlaneseq
    %v525 = vshrl.u32 %v524, 7
    %v526 = vsub.s32 2, %v525
    %v527 = vrot.slane %v333, %v526
    %v528 = vsub.f32 %v522, %v527
    %v529 = vand.u32 2147483647, %v528
    %v530 = vstv %s519
    %v531 = vmul.f32 %v530, %v529
    %v532 = vadd.f32 %v515, %v531
    %533 = vrot.lane.b32.xlu0 %v305, 117
    %v534 = vpop.permute.xlu0 %533
    %s536 = vtos %v534
    %537 = vset.pattern.permute.xlu0 11
    %538 = vperm.xlu0 %537, %v297
    %v539 = vpop.permute.xlu0 %538
    %v541 = vlaneseq
    %v542 = vshrl.u32 %v541, 7
    %v543 = vsub.s32 3, %v542
    %v544 = vrot.slane %v333, %v543
    %v545 = vsub.f32 %v539, %v544
    %v546 = vand.u32 2147483647, %v545
    %v547 = vstv %s536
    %v548 = vmul.f32 %v547, %v546
    %v549 = vadd.f32 %v532, %v548
    %550 = vrot.lane.b32.xlu0 %v305, 116
    %v551 = vpop.permute.xlu0 %550
    %s553 = vtos %v551
    %554 = vset.pattern.permute.xlu0 12
    %555 = vperm.xlu0 %554, %v297
    %v556 = vpop.permute.xlu0 %555
    %v558 = vlaneseq
    %v559 = vshrl.u32 %v558, 7
    %v560 = vsub.s32 4, %v559
    %v561 = vrot.slane %v333, %v560
    %v562 = vsub.f32 %v556, %v561
    %v563 = vand.u32 2147483647, %v562
    %v564 = vstv %s553
    %v565 = vmul.f32 %v564, %v563
    %v566 = vadd.f32 %v549, %v565
    %567 = vrot.lane.b32.xlu0 %v305, 115
    %v568 = vpop.permute.xlu0 %567
    %s570 = vtos %v568
    %571 = vset.pattern.permute.xlu0 13
    %572 = vperm.xlu0 %571, %v297
    %v573 = vpop.permute.xlu0 %572
    %v575 = vlaneseq
    %v576 = vshrl.u32 %v575, 7
    %v577 = vsub.s32 5, %v576
    %v578 = vrot.slane %v333, %v577
    %v579 = vsub.f32 %v573, %v578
    %v580 = vand.u32 2147483647, %v579
    %v581 = vstv %s570
    %v582 = vmul.f32 %v581, %v580
    %v583 = vadd.f32 %v566, %v582
    %584 = vrot.lane.b32.xlu0 %v305, 114
    %v585 = vpop.permute.xlu0 %584
    %s587 = vtos %v585
    %588 = vset.pattern.permute.xlu0 14
    %589 = vperm.xlu0 %588, %v297
    %v590 = vpop.permute.xlu0 %589
    %v592 = vlaneseq
    %v593 = vshrl.u32 %v592, 7
    %v594 = vsub.s32 6, %v593
    %v595 = vrot.slane %v333, %v594
    %v596 = vsub.f32 %v590, %v595
    %v597 = vand.u32 2147483647, %v596
    %v598 = vstv %s587
    %v599 = vmul.f32 %v598, %v597
    %v600 = vadd.f32 %v583, %v599
    %601 = vrot.lane.b32.xlu0 %v305, 113
    %v602 = vpop.permute.xlu0 %601
    %s604 = vtos %v602
    %605 = vset.pattern.permute.xlu0 15
    %606 = vperm.xlu0 %605, %v297
    %v607 = vpop.permute.xlu0 %606
    %v609 = vlaneseq
    %v610 = vshrl.u32 %v609, 7
    %v611 = vsub.s32 7, %v610
    %v612 = vrot.slane %v333, %v611
    %v613 = vsub.f32 %v607, %v612
    %v614 = vand.u32 2147483647, %v613
    %v615 = vstv %s604
    %v616 = vmul.f32 %v615, %v614
    %v617 = vadd.f32 %v600, %v616
    %s618 = sld [smem:[#allocation3 + %s311]]
    %v619 = vstv %s618
    %vm620 = vcmp.ge.s32.totalorder %v313, %v619
    %vm621 = vcmp.ge.s32.totalorder %v315, %v619
    %vm622 = vmor %vm620, %vm621
    %v623 = vstv %s310
    %v624 = vsub.f32 %v617, %v623
    %v625 = vsel %vm622, %v624, %v617
    %vm626 = vcmp.ge.f32.partialorder %v625, 0.0
    %v627 = vmul.f32 %v625, 0.01
    %v628 = vsel %vm626, %v625, %v627
    %vm629 = vcmask 64512
    %v630 = vsel %vm629, %v628, -inf
    %631 = vmax.xlane.f32.xlu0 %v630
    %v632 = vpop.xlane.xlu0 %631
    %v633 = vsub.f32 %v628, %v632
    %v634 = vld [vmem:[%s3] sm:$0xff]
    %v635 = vmul.f32 %v633, 1.442695
    %v636 = vpow.pop %v635
    %v637 = vmul.f32 %v634, %v636
    %v638 = vsel %vm629, %v637, 0.0
    %639 = vadd.xlane.f32.xlu0 %v638
    %v640 = vpop.xlane.xlu0 %639
    %v641 = vrcp.pop %v640
    %v642 = vmul.f32 %v637, %v641
    %v643 = vadd.f32 %v642, 1e-10
    %644 = vst.msk [vmem:[#allocation6] sm:$0xff] %vm629, %v643
    %645 = vxpose.xlu0.b32.start [1/16] %v302, 128
    %646 = vxpose.xlu0.b32.cont [2/16] 0.0, 128
    %647 = vxpose.xlu0.b32.cont [3/16] 0.0, 128
    %648 = vxpose.xlu0.b32.cont [4/16] 0.0, 128
    %649 = vxpose.xlu0.b32.cont [5/16] 0.0, 128
    %650 = vxpose.xlu0.b32.cont [6/16] 0.0, 128
    %651 = vxpose.xlu0.b32.cont [7/16] 0.0, 128
    %652 = vxpose.xlu0.b32.cont [8/16] 0.0, 128
    %653 = vxpose.xlu0.b32.cont [9/16] 0.0, 128
    %654 = vxpose.xlu0.b32.cont [10/16] 0.0, 128
    %655 = vxpose.xlu0.b32.cont [11/16] 0.0, 128
    %656 = vxpose.xlu0.b32.cont [12/16] 0.0, 128
    %657 = vxpose.xlu0.b32.cont [13/16] 0.0, 128
    %658 = vxpose.xlu0.b32.cont [14/16] 0.0, 128
    %659 = vxpose.xlu0.b32.cont [15/16] 0.0, 128
    %660 = vxpose.xlu0.b32.end [16/16] 0.0, 128
    %v661 = vpop.trf.xlu0
    %v662 = vpop.trf.xlu0
    %v663 = vpop.trf.xlu0
    %v664 = vpop.trf.xlu0
    %v665 = vpop.trf.xlu0
    %v666 = vpop.trf.xlu0
    %v667 = vpop.trf.xlu0
    %v668 = vpop.trf.xlu0
    %v669 = vpop.trf.xlu0
    %v670 = vpop.trf.xlu0
    %v671 = vpop.trf.xlu0
    %v672 = vpop.trf.xlu0
    %v673 = vpop.trf.xlu0
    %v674 = vpop.trf.xlu0
    %v675 = vpop.trf.xlu0
    %v676 = vpop.trf.xlu0
    %v677 = vld [vmem:[%s6] sm:$0x1]
    %s678 = vtos %v677
    %680 = vset.pattern.permute.xlu0 0
    %681 = vperm.xlu0 %680, %v302
    %v682 = vpop.permute.xlu0 %681
    %v684 = vlaneseq
    %v685 = vshrl.u32 %v684, 7
    %v686 = vsub.s32 0, %v685
    %v687 = vrot.slane %v661, %v686
    %v688 = vsub.f32 %v682, %v687
    %v689 = vand.u32 2147483647, %v688
    %v690 = vstv %s678
    %v691 = vmul.f32 %v690, %v689
    %v692 = vadd.f32 %v691, 0.0
    %694 = vrot.lane.b32.xlu0 %v677, 127
    %v695 = vpop.permute.xlu0 %694
    %s697 = vtos %v695
    %698 = vset.pattern.permute.xlu0 1
    %699 = vperm.xlu0 %698, %v302
    %v700 = vpop.permute.xlu0 %699
    %v702 = vlaneseq
    %v703 = vshrl.u32 %v702, 7
    %v704 = vsub.s32 1, %v703
    %v705 = vrot.slane %v661, %v704
    %v706 = vsub.f32 %v700, %v705
    %v707 = vand.u32 2147483647, %v706
    %v708 = vstv %s697
    %v709 = vmul.f32 %v708, %v707
    %v710 = vadd.f32 %v692, %v709
    %711 = vrot.lane.b32.xlu0 %v677, 126
    %v712 = vpop.permute.xlu0 %711
    %s714 = vtos %v712
    %715 = vset.pattern.permute.xlu0 2
    %716 = vperm.xlu0 %715, %v302
    %v717 = vpop.permute.xlu0 %716
    %v719 = vlaneseq
    %v720 = vshrl.u32 %v719, 7
    %v721 = vsub.s32 2, %v720
    %v722 = vrot.slane %v661, %v721
    %v723 = vsub.f32 %v717, %v722
    %v724 = vand.u32 2147483647, %v723
    %v725 = vstv %s714
    %v726 = vmul.f32 %v725, %v724
    %v727 = vadd.f32 %v710, %v726
    %728 = vrot.lane.b32.xlu0 %v677, 125
    %v729 = vpop.permute.xlu0 %728
    %s731 = vtos %v729
    %732 = vset.pattern.permute.xlu0 3
    %733 = vperm.xlu0 %732, %v302
    %v734 = vpop.permute.xlu0 %733
    %v736 = vlaneseq
    %v737 = vshrl.u32 %v736, 7
    %v738 = vsub.s32 3, %v737
    %v739 = vrot.slane %v661, %v738
    %v740 = vsub.f32 %v734, %v739
    %v741 = vand.u32 2147483647, %v740
    %v742 = vstv %s731
    %v743 = vmul.f32 %v742, %v741
    %v744 = vadd.f32 %v727, %v743
    %745 = vrot.lane.b32.xlu0 %v677, 124
    %v746 = vpop.permute.xlu0 %745
    %s748 = vtos %v746
    %749 = vset.pattern.permute.xlu0 4
    %750 = vperm.xlu0 %749, %v302
    %v751 = vpop.permute.xlu0 %750
    %v753 = vlaneseq
    %v754 = vshrl.u32 %v753, 7
    %v755 = vsub.s32 4, %v754
    %v756 = vrot.slane %v661, %v755
    %v757 = vsub.f32 %v751, %v756
    %v758 = vand.u32 2147483647, %v757
    %v759 = vstv %s748
    %v760 = vmul.f32 %v759, %v758
    %v761 = vadd.f32 %v744, %v760
    %762 = vrot.lane.b32.xlu0 %v677, 123
    %v763 = vpop.permute.xlu0 %762
    %s765 = vtos %v763
    %766 = vset.pattern.permute.xlu0 5
    %767 = vperm.xlu0 %766, %v302
    %v768 = vpop.permute.xlu0 %767
    %v770 = vlaneseq
    %v771 = vshrl.u32 %v770, 7
    %v772 = vsub.s32 5, %v771
    %v773 = vrot.slane %v661, %v772
    %v774 = vsub.f32 %v768, %v773
    %v775 = vand.u32 2147483647, %v774
    %v776 = vstv %s765
    %v777 = vmul.f32 %v776, %v775
    %v778 = vadd.f32 %v761, %v777
    %779 = vrot.lane.b32.xlu0 %v677, 122
    %v780 = vpop.permute.xlu0 %779
    %s782 = vtos %v780
    %783 = vset.pattern.permute.xlu0 6
    %784 = vperm.xlu0 %783, %v302
    %v785 = vpop.permute.xlu0 %784
    %v787 = vlaneseq
    %v788 = vshrl.u32 %v787, 7
    %v789 = vsub.s32 6, %v788
    %v790 = vrot.slane %v661, %v789
    %v791 = vsub.f32 %v785, %v790
    %v792 = vand.u32 2147483647, %v791
    %v793 = vstv %s782
    %v794 = vmul.f32 %v793, %v792
    %v795 = vadd.f32 %v778, %v794
    %796 = vrot.lane.b32.xlu0 %v677, 121
    %v797 = vpop.permute.xlu0 %796
    %s799 = vtos %v797
    %800 = vset.pattern.permute.xlu0 7
    %801 = vperm.xlu0 %800, %v302
    %v802 = vpop.permute.xlu0 %801
    %v804 = vlaneseq
    %v805 = vshrl.u32 %v804, 7
    %v806 = vsub.s32 7, %v805
    %v807 = vrot.slane %v661, %v806
    %v808 = vsub.f32 %v802, %v807
    %v809 = vand.u32 2147483647, %v808
    %v810 = vstv %s799
    %v811 = vmul.f32 %v810, %v809
    %v812 = vadd.f32 %v795, %v811
    %813 = vrot.lane.b32.xlu0 %v677, 120
    %v814 = vpop.permute.xlu0 %813
    %s816 = vtos %v814
    %817 = vset.pattern.permute.xlu0 8
    %818 = vperm.xlu0 %817, %v302
    %v819 = vpop.permute.xlu0 %818
    %v821 = vlaneseq
    %v822 = vshrl.u32 %v821, 7
    %v823 = vsub.s32 0, %v822
    %v824 = vrot.slane %v662, %v823
    %v825 = vsub.f32 %v819, %v824
    %v826 = vand.u32 2147483647, %v825
    %v827 = vstv %s816
    %v828 = vmul.f32 %v827, %v826
    %v829 = vadd.f32 %v812, %v828
    %830 = vrot.lane.b32.xlu0 %v677, 119
    %v831 = vpop.permute.xlu0 %830
    %s833 = vtos %v831
    %834 = vset.pattern.permute.xlu0 9
    %835 = vperm.xlu0 %834, %v302
    %v836 = vpop.permute.xlu0 %835
    %v838 = vlaneseq
    %v839 = vshrl.u32 %v838, 7
    %v840 = vsub.s32 1, %v839
    %v841 = vrot.slane %v662, %v840
    %v842 = vsub.f32 %v836, %v841
    %v843 = vand.u32 2147483647, %v842
    %v844 = vstv %s833
    %v845 = vmul.f32 %v844, %v843
    %v846 = vadd.f32 %v829, %v845
    %847 = vrot.lane.b32.xlu0 %v677, 118
    %v848 = vpop.permute.xlu0 %847
    %s850 = vtos %v848
    %851 = vset.pattern.permute.xlu0 10
    %852 = vperm.xlu0 %851, %v302
    %v853 = vpop.permute.xlu0 %852
    %v855 = vlaneseq
    %v856 = vshrl.u32 %v855, 7
    %v857 = vsub.s32 2, %v856
    %v858 = vrot.slane %v662, %v857
    %v859 = vsub.f32 %v853, %v858
    %v860 = vand.u32 2147483647, %v859
    %v861 = vstv %s850
    %v862 = vmul.f32 %v861, %v860
    %v863 = vadd.f32 %v846, %v862
    %864 = vrot.lane.b32.xlu0 %v677, 117
    %v865 = vpop.permute.xlu0 %864
    %s867 = vtos %v865
    %868 = vset.pattern.permute.xlu0 11
    %869 = vperm.xlu0 %868, %v302
    %v870 = vpop.permute.xlu0 %869
    %v872 = vlaneseq
    %v873 = vshrl.u32 %v872, 7
    %v874 = vsub.s32 3, %v873
    %v875 = vrot.slane %v662, %v874
    %v876 = vsub.f32 %v870, %v875
    %v877 = vand.u32 2147483647, %v876
    %v878 = vstv %s867
    %v879 = vmul.f32 %v878, %v877
    %v880 = vadd.f32 %v863, %v879
    %881 = vrot.lane.b32.xlu0 %v677, 116
    %v882 = vpop.permute.xlu0 %881
    %s884 = vtos %v882
    %885 = vset.pattern.permute.xlu0 12
    %886 = vperm.xlu0 %885, %v302
    %v887 = vpop.permute.xlu0 %886
    %v889 = vlaneseq
    %v890 = vshrl.u32 %v889, 7
    %v891 = vsub.s32 4, %v890
    %v892 = vrot.slane %v662, %v891
    %v893 = vsub.f32 %v887, %v892
    %v894 = vand.u32 2147483647, %v893
    %v895 = vstv %s884
    %v896 = vmul.f32 %v895, %v894
    %v897 = vadd.f32 %v880, %v896
    %898 = vrot.lane.b32.xlu0 %v677, 115
    %v899 = vpop.permute.xlu0 %898
    %s901 = vtos %v899
    %902 = vset.pattern.permute.xlu0 13
    %903 = vperm.xlu0 %902, %v302
    %v904 = vpop.permute.xlu0 %903
    %v906 = vlaneseq
    %v907 = vshrl.u32 %v906, 7
    %v908 = vsub.s32 5, %v907
    %v909 = vrot.slane %v662, %v908
    %v910 = vsub.f32 %v904, %v909
    %v911 = vand.u32 2147483647, %v910
    %v912 = vstv %s901
    %v913 = vmul.f32 %v912, %v911
    %v914 = vadd.f32 %v897, %v913
    %915 = vrot.lane.b32.xlu0 %v677, 114
    %v916 = vpop.permute.xlu0 %915
    %s918 = vtos %v916
    %919 = vset.pattern.permute.xlu0 14
    %920 = vperm.xlu0 %919, %v302
    %v921 = vpop.permute.xlu0 %920
    %v923 = vlaneseq
    %v924 = vshrl.u32 %v923, 7
    %v925 = vsub.s32 6, %v924
    %v926 = vrot.slane %v662, %v925
    %v927 = vsub.f32 %v921, %v926
    %v928 = vand.u32 2147483647, %v927
    %v929 = vstv %s918
    %v930 = vmul.f32 %v929, %v928
    %v931 = vadd.f32 %v914, %v930
    %932 = vrot.lane.b32.xlu0 %v677, 113
    %v933 = vpop.permute.xlu0 %932
    %s935 = vtos %v933
    %936 = vset.pattern.permute.xlu0 15
    %937 = vperm.xlu0 %936, %v302
    %v938 = vpop.permute.xlu0 %937
    %v940 = vlaneseq
    %v941 = vshrl.u32 %v940, 7
    %v942 = vsub.s32 7, %v941
    %v943 = vrot.slane %v662, %v942
    %v944 = vsub.f32 %v938, %v943
    %v945 = vand.u32 2147483647, %v944
    %v946 = vstv %s935
    %v947 = vmul.f32 %v946, %v945
    %v948 = vadd.f32 %v931, %v947
    %s949 = sadd.s32 %s311, 1
    %s950 = sld [smem:[#allocation3 + %s949]]
    %v951 = vstv %s950
    %vm952 = vcmp.ge.s32.totalorder %v313, %v951
    %vm953 = vcmp.ge.s32.totalorder %v315, %v951
    %vm954 = vmor %vm952, %vm953
    %v955 = vsub.f32 %v948, %v623
    %v956 = vsel %vm954, %v955, %v948
    %vm957 = vcmp.ge.f32.partialorder %v956, 0.0
    %v958 = vmul.f32 %v956, 0.01
    %v959 = vsel %vm957, %v956, %v958
    %v960 = vsel %vm629, %v959, -inf
    %961 = vmax.xlane.f32.xlu0 %v960
    %v962 = vpop.xlane.xlu0 %961
    %v963 = vsub.f32 %v959, %v962
    %s964 = scalar_lea.vmem %s3, 8
    %v965 = vld [vmem:[%s964] sm:$0xff]
    %v966 = vmul.f32 %v963, 1.442695
    %v967 = vpow.pop %v966
    %v968 = vmul.f32 %v965, %v967
    %v969 = vsel %vm629, %v968, 0.0
    %970 = vadd.xlane.f32.xlu0 %v969
    %v971 = vpop.xlane.xlu0 %970
    %v972 = vrcp.pop %v971
    %v973 = vmul.f32 %v968, %v972
    %v974 = vadd.f32 %v973, 1e-10
    %s975 = scalar_lea.vmem [#allocation6], 8
    %976 = vst.msk [vmem:[%s975] sm:$0xff] %vm629, %v974
    %v977 = vld [vmem:[%s3] sm:$0xff]
    %v978 = vld [vmem:[%s3 + $0x8] sm:$0xff]
    %v979 = vld [vmem:[#allocation6] sm:$0xff]
    %v980 = vld [vmem:[#allocation6 + $0x8] sm:$0xff]
    %v981 = vmul.f32 %v977, %v979
    %v982 = vmul.f32 %v978, %v980
    %v983 = vlaneseq
    %v984 = vshrl.u32 %v983, 7
    %v985 = vsub.s32 0, %v984
    %v986 = vrot.slane %v981, %v985
    %988 = vbcast.lane.b32.xlu0 %v986, 256
    %v989 = vpop.permute.xlu0 %988
    %v990 = vlaneseq
    %v991 = vshrl.u32 %v990, 7
    %v992 = vsub.s32 1, %v991
    %v993 = vrot.slane %v981, %v992
    %995 = vbcast.lane.b32.xlu0 %v993, 256
    %v996 = vpop.permute.xlu0 %995
    %v997 = vlaneseq
    %v998 = vshrl.u32 %v997, 7
    %v999 = vsub.s32 2, %v998
    %v1000 = vrot.slane %v981, %v999
    %1002 = vbcast.lane.b32.xlu0 %v1000, 256
    %v1003 = vpop.permute.xlu0 %1002
    %v1004 = vlaneseq
    %v1005 = vshrl.u32 %v1004, 7
    %v1006 = vsub.s32 3, %v1005
    %v1007 = vrot.slane %v981, %v1006
    %1009 = vbcast.lane.b32.xlu0 %v1007, 256
    %v1010 = vpop.permute.xlu0 %1009
    %v1011 = vlaneseq
    %v1012 = vshrl.u32 %v1011, 7
    %v1013 = vsub.s32 4, %v1012
    %v1014 = vrot.slane %v981, %v1013
    %1016 = vbcast.lane.b32.xlu0 %v1014, 256
    %v1017 = vpop.permute.xlu0 %1016
    %v1018 = vlaneseq
    %v1019 = vshrl.u32 %v1018, 7
    %v1020 = vsub.s32 5, %v1019
    %v1021 = vrot.slane %v981, %v1020
    %1023 = vbcast.lane.b32.xlu0 %v1021, 256
    %v1024 = vpop.permute.xlu0 %1023
    %v1025 = vlaneseq
    %v1026 = vshrl.u32 %v1025, 7
    %v1027 = vsub.s32 6, %v1026
    %v1028 = vrot.slane %v981, %v1027
    %1030 = vbcast.lane.b32.xlu0 %v1028, 256
    %v1031 = vpop.permute.xlu0 %1030
    %v1032 = vlaneseq
    %v1033 = vshrl.u32 %v1032, 7
    %v1034 = vsub.s32 7, %v1033
    %v1035 = vrot.slane %v981, %v1034
    %1037 = vbcast.lane.b32.xlu0 %v1035, 256
    %v1038 = vpop.permute.xlu0 %1037
    %v1039 = vlaneseq
    %v1040 = vshrl.u32 %v1039, 7
    %v1041 = vsub.s32 0, %v1040
    %v1042 = vrot.slane %v982, %v1041
    %1044 = vbcast.lane.b32.xlu0 %v1042, 256
    %v1045 = vpop.permute.xlu0 %1044
    %v1046 = vlaneseq
    %v1047 = vshrl.u32 %v1046, 7
    %v1048 = vsub.s32 1, %v1047
    %v1049 = vrot.slane %v982, %v1048
    %1051 = vbcast.lane.b32.xlu0 %v1049, 256
    %v1052 = vpop.permute.xlu0 %1051
    %v1053 = vlaneseq
    %v1054 = vshrl.u32 %v1053, 7
    %v1055 = vsub.s32 2, %v1054
    %v1056 = vrot.slane %v982, %v1055
    %1058 = vbcast.lane.b32.xlu0 %v1056, 256
    %v1059 = vpop.permute.xlu0 %1058
    %v1060 = vlaneseq
    %v1061 = vshrl.u32 %v1060, 7
    %v1062 = vsub.s32 3, %v1061
    %v1063 = vrot.slane %v982, %v1062
    %1065 = vbcast.lane.b32.xlu0 %v1063, 256
    %v1066 = vpop.permute.xlu0 %1065
    %v1067 = vlaneseq
    %v1068 = vshrl.u32 %v1067, 7
    %v1069 = vsub.s32 4, %v1068
    %v1070 = vrot.slane %v982, %v1069
    %1072 = vbcast.lane.b32.xlu0 %v1070, 256
    %v1073 = vpop.permute.xlu0 %1072
    %v1074 = vlaneseq
    %v1075 = vshrl.u32 %v1074, 7
    %v1076 = vsub.s32 5, %v1075
    %v1077 = vrot.slane %v982, %v1076
    %1079 = vbcast.lane.b32.xlu0 %v1077, 256
    %v1080 = vpop.permute.xlu0 %1079
    %v1081 = vlaneseq
    %v1082 = vshrl.u32 %v1081, 7
    %v1083 = vsub.s32 6, %v1082
    %v1084 = vrot.slane %v982, %v1083
    %1086 = vbcast.lane.b32.xlu0 %v1084, 256
    %v1087 = vpop.permute.xlu0 %1086
    %v1088 = vlaneseq
    %v1089 = vshrl.u32 %v1088, 7
    %v1090 = vsub.s32 7, %v1089
    %v1091 = vrot.slane %v982, %v1090
    %1093 = vbcast.lane.b32.xlu0 %v1091, 256
    %v1094 = vpop.permute.xlu0 %1093
    %v1095 = vld [vmem:[%s7] sm:$0xff]
    %v1096 = vld [vmem:[%s7 + $0x8] sm:$0xff]
    %v1097 = vld [vmem:[%s7 + $0x10] sm:$0xff]
    %v1098 = vld [vmem:[%s7 + $0x18] sm:$0xff]
    %v1099 = vpack.c.bf16 %v66, %v65
    %v1100 = vpack.c.bf16 %v1096, %v1095
    %v1101 = vpack.c.bf16 %v1098, %v1097
    %v1103 = vsel %vm223, %v1099, 0
    %1105 = vmatprep.subr.bf16.mxu0 0
    %1106 = vmatpush1.bf16.msra.mxu0 %v1100
    %1107 = vmatprep.subr.bf16.mxu0 0
    %1108 = vmatpush1.bf16.msra.mxu0 %v1101
    %1109 = vmatprep.subr.bf16.mxu0 0
    %1110 = vmatpush1.bf16.msra.mxu0 0
    %1111 = vmatprep.subr.bf16.mxu0 0
    %1112 = vmatpush1.bf16.msra.mxu0 0
    %1113 = vmatprep.subr.bf16.mxu0 0
    %1114 = vmatpush1.bf16.msra.mxu0 0
    %1115 = vmatprep.subr.bf16.mxu0 0
    %1116 = vmatpush1.bf16.msra.mxu0 0
    %1117 = vmatprep.subr.bf16.mxu0 0
    %1118 = vmatpush1.bf16.msra.mxu0 0
    %1119 = vmatprep.subr.bf16.mxu0 0
    %1120 = vmatpush1.bf16.msra.mxu0 0
    %1121 = vmatprep.subr.bf16.mxu0 0
    %1122 = vmatpush1.bf16.msra.mxu0 0
    %1123 = vmatprep.subr.bf16.mxu0 0
    %1124 = vmatpush1.bf16.msra.mxu0 0
    %1125 = vmatprep.subr.bf16.mxu0 0
    %1126 = vmatpush1.bf16.msra.mxu0 0
    %1127 = vmatprep.subr.bf16.mxu0 0
    %1128 = vmatpush1.bf16.msra.mxu0 0
    %1129 = vmatprep.subr.bf16.mxu0 0
    %1130 = vmatpush1.bf16.msra.mxu0 0
    %1131 = vmatprep.subr.bf16.mxu0 0
    %1132 = vmatpush1.bf16.msra.mxu0 0
    %1133 = vmatprep.subr.bf16.mxu0 0
    %1134 = vmatpush1.bf16.msra.mxu0 0
    %1135 = vmatprep.subr.bf16.mxu0 0
    %1136 = vmatpush1.bf16.msra.mxu0 0
    %1137 = vmatprep.mubr.bf16.mxu0 0
    %1138 = vmatmul.mubr.bf16.gmra.mrb[0].mxu0 %v1103
    %v1139 = vpop.f32.mrb[0].mxu0
    %v1140 = vadd.f32 0.0, %v1139
    %v1141 = vpop.f32.mrb[0].mxu0
    %v1142 = vpop.f32.mrb[0].mxu0
    %v1143 = vadd.f32 0.0, %v1142
    %v1144 = vpop.f32.mrb[0].mxu0
    %1145 = vdwg.mxu0
    %v1146 = vld [vmem:[%s8] sm:$0xff]
    %v1147 = vld [vmem:[%s8 + $0x8] sm:$0xff]
    %v1148 = vld [vmem:[%s8 + $0x10] sm:$0xff]
    %v1149 = vld [vmem:[%s8 + $0x18] sm:$0xff]
    %v1150 = vpack.c.bf16 %v1147, %v1146
    %v1151 = vpack.c.bf16 %v1149, %v1148
    %1152 = vmatprep.subr.bf16.mxu0 0
    %1153 = vmatpush1.bf16.msra.mxu0 %v1150
    %1154 = vmatprep.subr.bf16.mxu0 0
    %1155 = vmatpush1.bf16.msra.mxu0 %v1151
    %1156 = vmatprep.subr.bf16.mxu0 0
    %1157 = vmatpush1.bf16.msra.mxu0 0
    %1158 = vmatprep.subr.bf16.mxu0 0
    %1159 = vmatpush1.bf16.msra.mxu0 0
    %1160 = vmatprep.subr.bf16.mxu0 0
    %1161 = vmatpush1.bf16.msra.mxu0 0
    %1162 = vmatprep.subr.bf16.mxu0 0
    %1163 = vmatpush1.bf16.msra.mxu0 0
    %1164 = vmatprep.subr.bf16.mxu0 0
    %1165 = vmatpush1.bf16.msra.mxu0 0
    %1166 = vmatprep.subr.bf16.mxu0 0
    %1167 = vmatpush1.bf16.msra.mxu0 0
    %1168 = vmatprep.subr.bf16.mxu0 0
    %1169 = vmatpush1.bf16.msra.mxu0 0
    %1170 = vmatprep.subr.bf16.mxu0 0
    %1171 = vmatpush1.bf16.msra.mxu0 0
    %1172 = vmatprep.subr.bf16.mxu0 0
    %1173 = vmatpush1.bf16.msra.mxu0 0
    %1174 = vmatprep.subr.bf16.mxu0 0
    %1175 = vmatpush1.bf16.msra.mxu0 0
    %1176 = vmatprep.subr.bf16.mxu0 0
    %1177 = vmatpush1.bf16.msra.mxu0 0
    %1178 = vmatprep.subr.bf16.mxu0 0
    %1179 = vmatpush1.bf16.msra.mxu0 0
    %1180 = vmatprep.subr.bf16.mxu0 0
    %1181 = vmatpush1.bf16.msra.mxu0 0
    %1182 = vmatprep.subr.bf16.mxu0 0
    %1183 = vmatpush1.bf16.msra.mxu0 0
    %1184 = vmatprep.mubr.bf16.mxu0 0
    %1185 = vmatmul.mubr.bf16.gmra.mrb[0].mxu0 %v1103
    %v1186 = vpop.f32.mrb[0].mxu0
    %v1187 = vadd.f32 0.0, %v1186
    %v1188 = vpop.f32.mrb[0].mxu0
    %v1189 = vpop.f32.mrb[0].mxu0
    %v1190 = vadd.f32 0.0, %v1189
    %v1191 = vpop.f32.mrb[0].mxu0
    %1192 = vdwg.mxu0
    %v1195 = vcombine.high %v1140, %v1140
    %v1197 = vunpack.c.l.s4 1966171168
    %v1198 = vunpack.c.0.s8 %v1197
    %v1199 = vlaneseq
    %v1200 = vshrl.u32 %v1199, 7
    %v1201 = vsub.s32 %v1198, %v1200
    %v1202 = vrot.slane %v1140, %v1201
    %v1204 = vunpack.c.l.s4 1966171168
    %v1205 = vunpack.c.0.s8 %v1204
    %v1206 = vlaneseq
    %v1207 = vshrl.u32 %v1206, 7
    %v1208 = vsub.s32 %v1205, %v1207
    %v1209 = vrot.slane %v1195, %v1208
    %v1210 = vcombine.high %v1202, %v1202
    %v1211 = vcombine.high %v1209, %v1209
    %v1213 = vunpack.c.l.s4 1966171168
    %v1214 = vunpack.c.0.s8 %v1213
    %v1215 = vlaneseq
    %v1216 = vshrl.u32 %v1215, 7
    %v1217 = vsub.s32 %v1214, %v1216
    %v1218 = vrot.slane %v1202, %v1217
    %v1220 = vunpack.c.l.s4 1966171168
    %v1221 = vunpack.c.0.s8 %v1220
    %v1222 = vlaneseq
    %v1223 = vshrl.u32 %v1222, 7
    %v1224 = vsub.s32 %v1221, %v1223
    %v1225 = vrot.slane %v1209, %v1224
    %v1227 = vunpack.c.l.s4 1966171168
    %v1228 = vunpack.c.0.s8 %v1227
    %v1229 = vlaneseq
    %v1230 = vshrl.u32 %v1229, 7
    %v1231 = vsub.s32 %v1228, %v1230
    %v1232 = vrot.slane %v1210, %v1231
    %v1234 = vunpack.c.l.s4 1966171168
    %v1235 = vunpack.c.0.s8 %v1234
    %v1236 = vlaneseq
    %v1237 = vshrl.u32 %v1236, 7
    %v1238 = vsub.s32 %v1235, %v1237
    %v1239 = vrot.slane %v1211, %v1238
    %v1240 = vcombine.high %v1218, %v1218
    %v1241 = vcombine.high %v1225, %v1225
    %v1242 = vcombine.high %v1232, %v1232
    %v1243 = vcombine.high %v1239, %v1239
    %v1244 = vcombine.high %v1143, %v1143
    %v1246 = vunpack.c.l.s4 1966171168
    %v1247 = vunpack.c.0.s8 %v1246
    %v1248 = vlaneseq
    %v1249 = vshrl.u32 %v1248, 7
    %v1250 = vsub.s32 %v1247, %v1249
    %v1251 = vrot.slane %v1143, %v1250
    %v1253 = vunpack.c.l.s4 1966171168
    %v1254 = vunpack.c.0.s8 %v1253
    %v1255 = vlaneseq
    %v1256 = vshrl.u32 %v1255, 7
    %v1257 = vsub.s32 %v1254, %v1256
    %v1258 = vrot.slane %v1244, %v1257
    %v1259 = vcombine.high %v1251, %v1251
    %v1260 = vcombine.high %v1258, %v1258
    %v1262 = vunpack.c.l.s4 1966171168
    %v1263 = vunpack.c.0.s8 %v1262
    %v1264 = vlaneseq
    %v1265 = vshrl.u32 %v1264, 7
    %v1266 = vsub.s32 %v1263, %v1265
    %v1267 = vrot.slane %v1251, %v1266
    %v1269 = vunpack.c.l.s4 1966171168
    %v1270 = vunpack.c.0.s8 %v1269
    %v1271 = vlaneseq
    %v1272 = vshrl.u32 %v1271, 7
    %v1273 = vsub.s32 %v1270, %v1272
    %v1274 = vrot.slane %v1258, %v1273
    %v1276 = vunpack.c.l.s4 1966171168
    %v1277 = vunpack.c.0.s8 %v1276
    %v1278 = vlaneseq
    %v1279 = vshrl.u32 %v1278, 7
    %v1280 = vsub.s32 %v1277, %v1279
    %v1281 = vrot.slane %v1259, %v1280
    %v1283 = vunpack.c.l.s4 1966171168
    %v1284 = vunpack.c.0.s8 %v1283
    %v1285 = vlaneseq
    %v1286 = vshrl.u32 %v1285, 7
    %v1287 = vsub.s32 %v1284, %v1286
    %v1288 = vrot.slane %v1260, %v1287
    %v1289 = vcombine.high %v1267, %v1267
    %v1290 = vcombine.high %v1274, %v1274
    %v1291 = vcombine.high %v1281, %v1281
    %v1292 = vcombine.high %v1288, %v1288
    %v1293 = vlaneseq
    %v1294 = vshrl.u32 %v1293, 7
    %v1295 = vsub.s32 0, %v1294
    %v1296 = vrot.slane %v1218, %v1295
    %v1297 = vlaneseq
    %v1298 = vshrl.u32 %v1297, 7
    %v1299 = vsub.s32 0, %v1298
    %v1300 = vrot.slane %v1232, %v1299
    %v1301 = vlaneseq
    %v1302 = vshrl.u32 %v1301, 7
    %v1303 = vsub.s32 0, %v1302
    %v1304 = vrot.slane %v1240, %v1303
    %v1305 = vlaneseq
    %v1306 = vshrl.u32 %v1305, 7
    %v1307 = vsub.s32 0, %v1306
    %v1308 = vrot.slane %v1242, %v1307
    %v1309 = vlaneseq
    %v1310 = vshrl.u32 %v1309, 7
    %v1311 = vsub.s32 0, %v1310
    %v1312 = vrot.slane %v1225, %v1311
    %v1313 = vlaneseq
    %v1314 = vshrl.u32 %v1313, 7
    %v1315 = vsub.s32 0, %v1314
    %v1316 = vrot.slane %v1239, %v1315
    %v1317 = vlaneseq
    %v1318 = vshrl.u32 %v1317, 7
    %v1319 = vsub.s32 0, %v1318
    %v1320 = vrot.slane %v1241, %v1319
    %v1321 = vlaneseq
    %v1322 = vshrl.u32 %v1321, 7
    %v1323 = vsub.s32 0, %v1322
    %v1324 = vrot.slane %v1243, %v1323
    %v1325 = vlaneseq
    %v1326 = vshrl.u32 %v1325, 7
    %v1327 = vsub.s32 0, %v1326
    %v1328 = vrot.slane %v1267, %v1327
    %v1329 = vlaneseq
    %v1330 = vshrl.u32 %v1329, 7
    %v1331 = vsub.s32 0, %v1330
    %v1332 = vrot.slane %v1281, %v1331
    %v1333 = vlaneseq
    %v1334 = vshrl.u32 %v1333, 7
    %v1335 = vsub.s32 0, %v1334
    %v1336 = vrot.slane %v1289, %v1335
    %v1337 = vlaneseq
    %v1338 = vshrl.u32 %v1337, 7
    %v1339 = vsub.s32 0, %v1338
    %v1340 = vrot.slane %v1291, %v1339
    %v1341 = vlaneseq
    %v1342 = vshrl.u32 %v1341, 7
    %v1343 = vsub.s32 0, %v1342
    %v1344 = vrot.slane %v1274, %v1343
    %v1345 = vlaneseq
    %v1346 = vshrl.u32 %v1345, 7
    %v1347 = vsub.s32 0, %v1346
    %v1348 = vrot.slane %v1288, %v1347
    %v1349 = vlaneseq
    %v1350 = vshrl.u32 %v1349, 7
    %v1351 = vsub.s32 0, %v1350
    %v1352 = vrot.slane %v1290, %v1351
    %v1353 = vlaneseq
    %v1354 = vshrl.u32 %v1353, 7
    %v1355 = vsub.s32 0, %v1354
    %v1356 = vrot.slane %v1292, %v1355
    %v1373 = vadd.f32 %v1296, %v1187
    %v1374 = vadd.f32 %v1300, %v1187
    %v1375 = vadd.f32 %v1304, %v1187
    %v1376 = vadd.f32 %v1308, %v1187
    %v1377 = vadd.f32 %v1312, %v1187
    %v1378 = vadd.f32 %v1316, %v1187
    %v1379 = vadd.f32 %v1320, %v1187
    %v1380 = vadd.f32 %v1324, %v1187
    %v1381 = vadd.f32 %v1328, %v1190
    %v1382 = vadd.f32 %v1332, %v1190
    %v1383 = vadd.f32 %v1336, %v1190
    %v1384 = vadd.f32 %v1340, %v1190
    %v1385 = vadd.f32 %v1344, %v1190
    %v1386 = vadd.f32 %v1348, %v1190
    %v1387 = vadd.f32 %v1352, %v1190
    %v1388 = vadd.f32 %v1356, %v1190
    %v1389 = vadd.f32 %v1373, %v157
    %v1390 = vadd.f32 %v1374, %v160
    %v1391 = vadd.f32 %v1375, %v165
    %v1392 = vadd.f32 %v1376, %v168
    %v1393 = vadd.f32 %v1377, %v173
    %v1394 = vadd.f32 %v1378, %v176
    %v1395 = vadd.f32 %v1379, %v181
    %v1396 = vadd.f32 %v1380, %v184
    %v1397 = vadd.f32 %v1381, %v189
    %v1398 = vadd.f32 %v1382, %v192
    %v1399 = vadd.f32 %v1383, %v197
    %v1400 = vadd.f32 %v1384, %v200
    %v1401 = vadd.f32 %v1385, %v205
    %v1402 = vadd.f32 %v1386, %v208
    %v1403 = vadd.f32 %v1387, %v213
    %v1404 = vadd.f32 %v1388, %v216
    %v1405 = vld [vmem:[%s9] sm:$0x1]
    %v1407 = vlaneseq
    %v1408 = vshrl.u32 %v1407, 7
    %v1409 = vsub.s32 0, %v1408
    %v1410 = vrot.slane %v1405, %v1409
    %v1412 = vadd.f32 %v1389, %v1410
    %v1413 = vadd.f32 %v1390, %v1410
    %v1414 = vadd.f32 %v1391, %v1410
    %v1415 = vadd.f32 %v1392, %v1410
    %v1416 = vadd.f32 %v1393, %v1410
    %v1417 = vadd.f32 %v1394, %v1410
    %v1418 = vadd.f32 %v1395, %v1410
    %v1419 = vadd.f32 %v1396, %v1410
    %v1420 = vadd.f32 %v1397, %v1410
    %v1421 = vadd.f32 %v1398, %v1410
    %v1422 = vadd.f32 %v1399, %v1410
    %v1423 = vadd.f32 %v1400, %v1410
    %v1424 = vadd.f32 %v1401, %v1410
    %v1425 = vadd.f32 %v1402, %v1410
    %v1426 = vadd.f32 %v1403, %v1410
    %v1427 = vadd.f32 %v1404, %v1410
    %v1428 = vmax.f32 %v1412, 0.0
    %v1429 = vmax.f32 %v1413, 0.0
    %v1430 = vmax.f32 %v1414, 0.0
    %v1431 = vmax.f32 %v1415, 0.0
    %v1432 = vmax.f32 %v1416, 0.0
    %v1433 = vmax.f32 %v1417, 0.0
    %v1434 = vmax.f32 %v1418, 0.0
    %v1435 = vmax.f32 %v1419, 0.0
    %v1436 = vmax.f32 %v1420, 0.0
    %v1437 = vmax.f32 %v1421, 0.0
    %v1438 = vmax.f32 %v1422, 0.0
    %v1439 = vmax.f32 %v1423, 0.0
    %v1440 = vmax.f32 %v1424, 0.0
    %v1441 = vmax.f32 %v1425, 0.0
    %v1442 = vmax.f32 %v1426, 0.0
    %v1443 = vmax.f32 %v1427, 0.0
    %v1444 = vmul.f32 %v989, %v1428
    %v1445 = vmul.f32 %v996, %v1429
    %v1446 = vmul.f32 %v1003, %v1430
    %v1447 = vmul.f32 %v1010, %v1431
    %v1448 = vmul.f32 %v1017, %v1432
    %v1449 = vmul.f32 %v1024, %v1433
    %v1450 = vmul.f32 %v1031, %v1434
    %v1451 = vmul.f32 %v1038, %v1435
    %v1452 = vmul.f32 %v1045, %v1436
    %v1453 = vmul.f32 %v1052, %v1437
    %v1454 = vmul.f32 %v1059, %v1438
    %v1455 = vmul.f32 %v1066, %v1439
    %v1456 = vmul.f32 %v1073, %v1440
    %v1457 = vmul.f32 %v1080, %v1441
    %v1458 = vmul.f32 %v1087, %v1442
    %v1459 = vmul.f32 %v1094, %v1443
    %v1460 = vsel %vm223, %v1444, 0.0
    %v1461 = vrot.slane %v1460, 4
    %v1462 = vadd.f32 %v1460, %v1461
    %v1463 = vrot.slane %v1462, 2
    %v1464 = vadd.f32 %v1462, %v1463
    %v1465 = vrot.slane %v1464, 1
    %v1466 = vadd.f32 %v1464, %v1465
    %v1467 = vsel %vm223, %v1445, 0.0
    %v1468 = vrot.slane %v1467, 4
    %v1469 = vadd.f32 %v1467, %v1468
    %v1470 = vrot.slane %v1469, 2
    %v1471 = vadd.f32 %v1469, %v1470
    %v1472 = vrot.slane %v1471, 1
    %v1473 = vadd.f32 %v1471, %v1472
    %v1474 = vsel %vm223, %v1446, 0.0
    %v1475 = vrot.slane %v1474, 4
    %v1476 = vadd.f32 %v1474, %v1475
    %v1477 = vrot.slane %v1476, 2
    %v1478 = vadd.f32 %v1476, %v1477
    %v1479 = vrot.slane %v1478, 1
    %v1480 = vadd.f32 %v1478, %v1479
    %v1481 = vsel %vm223, %v1447, 0.0
    %v1482 = vrot.slane %v1481, 4
    %v1483 = vadd.f32 %v1481, %v1482
    %v1484 = vrot.slane %v1483, 2
    %v1485 = vadd.f32 %v1483, %v1484
    %v1486 = vrot.slane %v1485, 1
    %v1487 = vadd.f32 %v1485, %v1486
    %v1488 = vsel %vm223, %v1448, 0.0
    %v1489 = vrot.slane %v1488, 4
    %v1490 = vadd.f32 %v1488, %v1489
    %v1491 = vrot.slane %v1490, 2
    %v1492 = vadd.f32 %v1490, %v1491
    %v1493 = vrot.slane %v1492, 1
    %v1494 = vadd.f32 %v1492, %v1493
    %v1495 = vsel %vm223, %v1449, 0.0
    %v1496 = vrot.slane %v1495, 4
    %v1497 = vadd.f32 %v1495, %v1496
    %v1498 = vrot.slane %v1497, 2
    %v1499 = vadd.f32 %v1497, %v1498
    %v1500 = vrot.slane %v1499, 1
    %v1501 = vadd.f32 %v1499, %v1500
    %v1502 = vsel %vm223, %v1450, 0.0
    %v1503 = vrot.slane %v1502, 4
    %v1504 = vadd.f32 %v1502, %v1503
    %v1505 = vrot.slane %v1504, 2
    %v1506 = vadd.f32 %v1504, %v1505
    %v1507 = vrot.slane %v1506, 1
    %v1508 = vadd.f32 %v1506, %v1507
    %v1509 = vsel %vm223, %v1451, 0.0
    %v1510 = vrot.slane %v1509, 4
    %v1511 = vadd.f32 %v1509, %v1510
    %v1512 = vrot.slane %v1511, 2
    %v1513 = vadd.f32 %v1511, %v1512
    %v1514 = vrot.slane %v1513, 1
    %v1515 = vadd.f32 %v1513, %v1514
    %v1516 = vsel %vm223, %v1452, 0.0
    %v1517 = vrot.slane %v1516, 4
    %v1518 = vadd.f32 %v1516, %v1517
    %v1519 = vrot.slane %v1518, 2
    %v1520 = vadd.f32 %v1518, %v1519
    %v1521 = vrot.slane %v1520, 1
    %v1522 = vadd.f32 %v1520, %v1521
    %v1523 = vsel %vm223, %v1453, 0.0
    %v1524 = vrot.slane %v1523, 4
    %v1525 = vadd.f32 %v1523, %v1524
    %v1526 = vrot.slane %v1525, 2
    %v1527 = vadd.f32 %v1525, %v1526
    %v1528 = vrot.slane %v1527, 1
    %v1529 = vadd.f32 %v1527, %v1528
    %v1530 = vsel %vm223, %v1454, 0.0
    %v1531 = vrot.slane %v1530, 4
    %v1532 = vadd.f32 %v1530, %v1531
    %v1533 = vrot.slane %v1532, 2
    %v1534 = vadd.f32 %v1532, %v1533
    %v1535 = vrot.slane %v1534, 1
    %v1536 = vadd.f32 %v1534, %v1535
    %v1537 = vsel %vm223, %v1455, 0.0
    %v1538 = vrot.slane %v1537, 4
    %v1539 = vadd.f32 %v1537, %v1538
    %v1540 = vrot.slane %v1539, 2
    %v1541 = vadd.f32 %v1539, %v1540
    %v1542 = vrot.slane %v1541, 1
    %v1543 = vadd.f32 %v1541, %v1542
    %v1544 = vsel %vm223, %v1456, 0.0
    %v1545 = vrot.slane %v1544, 4
    %v1546 = vadd.f32 %v1544, %v1545
    %v1547 = vrot.slane %v1546, 2
    %v1548 = vadd.f32 %v1546, %v1547
    %v1549 = vrot.slane %v1548, 1
    %v1550 = vadd.f32 %v1548, %v1549
    %v1551 = vsel %vm223, %v1457, 0.0
    %v1552 = vrot.slane %v1551, 4
    %v1553 = vadd.f32 %v1551, %v1552
    %v1554 = vrot.slane %v1553, 2
    %v1555 = vadd.f32 %v1553, %v1554
    %v1556 = vrot.slane %v1555, 1
    %v1557 = vadd.f32 %v1555, %v1556
    %v1558 = vsel %vm223, %v1458, 0.0
    %v1559 = vrot.slane %v1558, 4
    %v1560 = vadd.f32 %v1558, %v1559
    %v1561 = vrot.slane %v1560, 2
    %v1562 = vadd.f32 %v1560, %v1561
    %v1563 = vrot.slane %v1562, 1
    %v1564 = vadd.f32 %v1562, %v1563
    %v1565 = vsel %vm223, %v1459, 0.0
    %v1566 = vrot.slane %v1565, 4
    %v1567 = vadd.f32 %v1565, %v1566
    %v1568 = vrot.slane %v1567, 2
    %v1569 = vadd.f32 %v1567, %v1568
    %v1570 = vrot.slane %v1569, 1
    %v1571 = vadd.f32 %v1569, %v1570
    %v1572 = vld [vmem:[%s10] sm:$0xff]
    %v1573 = vld [vmem:[%s10 + $0x8] sm:$0xff]
    %v1574 = vld [vmem:[%s10 + $0x10] sm:$0xff]
    %v1575 = vld [vmem:[%s10 + $0x18] sm:$0xff]
    %v1576 = vpack.c.bf16 %v1466, %v1466
    %v1577 = vpack.c.bf16 %v1473, %v1473
    %v1578 = vpack.c.bf16 %v1480, %v1480
    %v1579 = vpack.c.bf16 %v1487, %v1487
    %v1580 = vpack.c.bf16 %v1494, %v1494
    %v1581 = vpack.c.bf16 %v1501, %v1501
    %v1582 = vpack.c.bf16 %v1508, %v1508
    %v1583 = vpack.c.bf16 %v1515, %v1515
    %v1584 = vpack.c.bf16 %v1522, %v1522
    %v1585 = vpack.c.bf16 %v1529, %v1529
    %v1586 = vpack.c.bf16 %v1536, %v1536
    %v1587 = vpack.c.bf16 %v1543, %v1543
    %v1588 = vpack.c.bf16 %v1550, %v1550
    %v1589 = vpack.c.bf16 %v1557, %v1557
    %v1590 = vpack.c.bf16 %v1564, %v1564
    %v1591 = vpack.c.bf16 %v1571, %v1571
    %v1592 = vpack.c.bf16 %v1573, %v1572
    %v1593 = vpack.c.bf16 %v1575, %v1574
    %v1610 = vunpack.c.l.b16 %v1576
    %v1611 = vunpack.c.l.b16 %v1577
    %v1612 = vunpack.c.l.b16 %v1578
    %v1613 = vunpack.c.l.b16 %v1579
    %v1614 = vunpack.c.l.b16 %v1580
    %v1615 = vunpack.c.l.b16 %v1581
    %v1616 = vunpack.c.l.b16 %v1582
    %v1617 = vunpack.c.l.b16 %v1583
    %v1618 = vunpack.c.l.b16 %v1584
    %v1619 = vunpack.c.l.b16 %v1585
    %v1620 = vunpack.c.l.b16 %v1586
    %v1621 = vunpack.c.l.b16 %v1587
    %v1622 = vunpack.c.l.b16 %v1588
    %v1623 = vunpack.c.l.b16 %v1589
    %v1624 = vunpack.c.l.b16 %v1590
    %v1625 = vunpack.c.l.b16 %v1591
    %vm1626 = vcmask 1041409
    %v1627 = vsel %vm1626, %v1611, %v1610
    %vm1628 = vcmask 1042434
    %v1629 = vsel %vm1628, %v1612, %v1627
    %vm1630 = vcmask 1043459
    %v1631 = vsel %vm1630, %v1613, %v1629
    %vm1632 = vcmask 1044484
    %v1633 = vsel %vm1632, %v1614, %v1631
    %vm1634 = vcmask 1045509
    %v1635 = vsel %vm1634, %v1615, %v1633
    %vm1636 = vcmask 1046534
    %v1637 = vsel %vm1636, %v1616, %v1635
    %vm1638 = vcmask 1047559
    %v1639 = vsel %vm1638, %v1617, %v1637
    %v1640 = vsel %vm1626, %v1619, %v1618
    %v1641 = vsel %vm1628, %v1620, %v1640
    %v1642 = vsel %vm1630, %v1621, %v1641
    %v1643 = vsel %vm1632, %v1622, %v1642
    %v1644 = vsel %vm1634, %v1623, %v1643
    %v1645 = vsel %vm1636, %v1624, %v1644
    %v1646 = vsel %vm1638, %v1625, %v1645
    %v1647 = vpack.c.b16 %v1646, %v1639
    %v1649 = vsel %vm223, %v1647, 0
    %1651 = vmatprep.subr.bf16.mxu0 0
    %1652 = vmatpush1.bf16.msra.mxu0 %v1592
    %1653 = vmatprep.subr.bf16.mxu0 0
    %1654 = vmatpush1.bf16.msra.mxu0 %v1593
    %1655 = vmatprep.subr.bf16.mxu0 0
    %1656 = vmatpush1.bf16.msra.mxu0 0
    %1657 = vmatprep.subr.bf16.mxu0 0
    %1658 = vmatpush1.bf16.msra.mxu0 0
    %1659 = vmatprep.subr.bf16.mxu0 0
    %1660 = vmatpush1.bf16.msra.mxu0 0
    %1661 = vmatprep.subr.bf16.mxu0 0
    %1662 = vmatpush1.bf16.msra.mxu0 0
    %1663 = vmatprep.subr.bf16.mxu0 0
    %1664 = vmatpush1.bf16.msra.mxu0 0
    %1665 = vmatprep.subr.bf16.mxu0 0
    %1666 = vmatpush1.bf16.msra.mxu0 0
    %1667 = vmatprep.subr.bf16.mxu0 0
    %1668 = vmatpush1.bf16.msra.mxu0 0
    %1669 = vmatprep.subr.bf16.mxu0 0
    %1670 = vmatpush1.bf16.msra.mxu0 0
    %1671 = vmatprep.subr.bf16.mxu0 0
    %1672 = vmatpush1.bf16.msra.mxu0 0
    %1673 = vmatprep.subr.bf16.mxu0 0
    %1674 = vmatpush1.bf16.msra.mxu0 0
    %1675 = vmatprep.subr.bf16.mxu0 0
    %1676 = vmatpush1.bf16.msra.mxu0 0
    %1677 = vmatprep.subr.bf16.mxu0 0
    %1678 = vmatpush1.bf16.msra.mxu0 0
    %1679 = vmatprep.subr.bf16.mxu0 0
    %1680 = vmatpush1.bf16.msra.mxu0 0
    %1681 = vmatprep.subr.bf16.mxu0 0
    %1682 = vmatpush1.bf16.msra.mxu0 0
    %1683 = vmatprep.mubr.bf16.mxu0 0
    %1684 = vmatmul.mubr.bf16.gmra.mrb[0].mxu0 %v1649
    %v1685 = vpop.f32.mrb[0].mxu0
    %v1686 = vadd.f32 0.0, %v1685
    %v1687 = vpop.f32.mrb[0].mxu0
    %v1688 = vpop.f32.mrb[0].mxu0
    %v1689 = vadd.f32 0.0, %v1688
    %v1690 = vpop.f32.mrb[0].mxu0
    %1691 = vdwg.mxu0
    %v1692 = vmax.f32 %v1686, 0.0
    %v1693 = vmax.f32 %v1689, 0.0
    %v1694 = vld [vmem:[%s11] sm:$0xff]
    %v1695 = vld [vmem:[%s11 + $0x8] sm:$0xff]
    %v1696 = vld [vmem:[%s11 + $0x10] sm:$0xff]
    %v1697 = vld [vmem:[%s11 + $0x18] sm:$0xff]
    %v1698 = vpack.c.bf16 %v1429, %v1428
    %v1699 = vpack.c.bf16 %v1431, %v1430
    %v1700 = vpack.c.bf16 %v1433, %v1432
    %v1701 = vpack.c.bf16 %v1435, %v1434
    %v1702 = vpack.c.bf16 %v1437, %v1436
    %v1703 = vpack.c.bf16 %v1439, %v1438
    %v1704 = vpack.c.bf16 %v1441, %v1440
    %v1705 = vpack.c.bf16 %v1443, %v1442
    %v1706 = vpack.c.bf16 %v1695, %v1694
    %v1707 = vpack.c.bf16 %v1697, %v1696
    %v1709 = vsel %vm223, %v1698, 0
    %v1712 = vsel %vm223, %v1699, 0
    %v1715 = vsel %vm223, %v1700, 0
    %v1718 = vsel %vm223, %v1701, 0
    %v1721 = vsel %vm223, %v1702, 0
    %v1724 = vsel %vm223, %v1703, 0
    %v1727 = vsel %vm223, %v1704, 0
    %v1730 = vsel %vm223, %v1705, 0
    %1732 = vmatprep.subr.bf16.mxu0 0
    %1733 = vmatpush1.bf16.msra.mxu0 %v1706
    %1734 = vmatprep.subr.bf16.mxu0 0
    %1735 = vmatpush1.bf16.msra.mxu0 %v1707
    %1736 = vmatprep.subr.bf16.mxu0 0
    %1737 = vmatpush1.bf16.msra.mxu0 0
    %1738 = vmatprep.subr.bf16.mxu0 0
    %1739 = vmatpush1.bf16.msra.mxu0 0
    %1740 = vmatprep.subr.bf16.mxu0 0
    %1741 = vmatpush1.bf16.msra.mxu0 0
    %1742 = vmatprep.subr.bf16.mxu0 0
    %1743 = vmatpush1.bf16.msra.mxu0 0
    %1744 = vmatprep.subr.bf16.mxu0 0
    %1745 = vmatpush1.bf16.msra.mxu0 0
    %1746 = vmatprep.subr.bf16.mxu0 0
    %1747 = vmatpush1.bf16.msra.mxu0 0
    %1748 = vmatprep.subr.bf16.mxu0 0
    %1749 = vmatpush1.bf16.msra.mxu0 0
    %1750 = vmatprep.subr.bf16.mxu0 0
    %1751 = vmatpush1.bf16.msra.mxu0 0
    %1752 = vmatprep.subr.bf16.mxu0 0
    %1753 = vmatpush1.bf16.msra.mxu0 0
    %1754 = vmatprep.subr.bf16.mxu0 0
    %1755 = vmatpush1.bf16.msra.mxu0 0
    %1756 = vmatprep.subr.bf16.mxu0 0
    %1757 = vmatpush1.bf16.msra.mxu0 0
    %1758 = vmatprep.subr.bf16.mxu0 0
    %1759 = vmatpush1.bf16.msra.mxu0 0
    %1760 = vmatprep.subr.bf16.mxu0 0
    %1761 = vmatpush1.bf16.msra.mxu0 0
    %1762 = vmatprep.subr.bf16.mxu0 0
    %1763 = vmatpush1.bf16.msra.mxu0 0
    %1764 = vmatprep.mubr.bf16.mxu0 0
    %1765 = vmatmul.mubr.bf16.gmra.mrb[0].mxu0 %v1709
    %v1766 = vpop.f32.mrb[0].mxu0
    %v1767 = vadd.f32 0.0, %v1766
    %v1768 = vpop.f32.mrb[0].mxu0
    %v1769 = vpop.f32.mrb[0].mxu0
    %v1770 = vadd.f32 0.0, %v1769
    %v1771 = vpop.f32.mrb[0].mxu0
    %1772 = vmatprep.mubr.bf16.mxu0 0
    %1773 = vmatmul.mubr.bf16.gmra.mrb[0].mxu0 %v1712
    %v1774 = vpop.f32.mrb[0].mxu0
    %v1775 = vadd.f32 0.0, %v1774
    %v1776 = vpop.f32.mrb[0].mxu0
    %v1777 = vpop.f32.mrb[0].mxu0
    %v1778 = vadd.f32 0.0, %v1777
    %v1779 = vpop.f32.mrb[0].mxu0
    %1780 = vmatprep.mubr.bf16.mxu0 0
    %1781 = vmatmul.mubr.bf16.gmra.mrb[0].mxu0 %v1715
    %v1782 = vpop.f32.mrb[0].mxu0
    %v1783 = vadd.f32 0.0, %v1782
    %v1784 = vpop.f32.mrb[0].mxu0
    %v1785 = vpop.f32.mrb[0].mxu0
    %v1786 = vadd.f32 0.0, %v1785
    %v1787 = vpop.f32.mrb[0].mxu0
    %1788 = vmatprep.mubr.bf16.mxu0 0
    %1789 = vmatmul.mubr.bf16.gmra.mrb[0].mxu0 %v1718
    %v1790 = vpop.f32.mrb[0].mxu0
    %v1791 = vadd.f32 0.0, %v1790
    %v1792 = vpop.f32.mrb[0].mxu0
    %v1793 = vpop.f32.mrb[0].mxu0
    %v1794 = vadd.f32 0.0, %v1793
    %v1795 = vpop.f32.mrb[0].mxu0
    %1796 = vmatprep.mubr.bf16.mxu0 0
    %1797 = vmatmul.mubr.bf16.gmra.mrb[0].mxu0 %v1721
    %v1798 = vpop.f32.mrb[0].mxu0
    %v1799 = vadd.f32 0.0, %v1798
    %v1800 = vpop.f32.mrb[0].mxu0
    %v1801 = vpop.f32.mrb[0].mxu0
    %v1802 = vadd.f32 0.0, %v1801
    %v1803 = vpop.f32.mrb[0].mxu0
    %1804 = vmatprep.mubr.bf16.mxu0 0
    %1805 = vmatmul.mubr.bf16.gmra.mrb[0].mxu0 %v1724
    %v1806 = vpop.f32.mrb[0].mxu0
    %v1807 = vadd.f32 0.0, %v1806
    %v1808 = vpop.f32.mrb[0].mxu0
    %v1809 = vpop.f32.mrb[0].mxu0
    %v1810 = vadd.f32 0.0, %v1809
    %v1811 = vpop.f32.mrb[0].mxu0
    %1812 = vmatprep.mubr.bf16.mxu0 0
    %1813 = vmatmul.mubr.bf16.gmra.mrb[0].mxu0 %v1727
    %v1814 = vpop.f32.mrb[0].mxu0
    %v1815 = vadd.f32 0.0, %v1814
    %v1816 = vpop.f32.mrb[0].mxu0
    %v1817 = vpop.f32.mrb[0].mxu0
    %v1818 = vadd.f32 0.0, %v1817
    %v1819 = vpop.f32.mrb[0].mxu0
    %1820 = vmatprep.mubr.bf16.mxu0 0
    %1821 = vmatmul.mubr.bf16.gmra.mrb[0].mxu0 %v1730
    %v1822 = vpop.f32.mrb[0].mxu0
    %v1823 = vadd.f32 0.0, %v1822
    %v1824 = vpop.f32.mrb[0].mxu0
    %v1825 = vpop.f32.mrb[0].mxu0
    %v1826 = vadd.f32 0.0, %v1825
    %v1827 = vpop.f32.mrb[0].mxu0
    %1828 = vdwg.mxu0
    %v1829 = vmax.f32 %v1767, 0.0
    %v1830 = vmax.f32 %v1770, 0.0
    %v1831 = vmax.f32 %v1775, 0.0
    %v1832 = vmax.f32 %v1778, 0.0
    %v1833 = vmax.f32 %v1783, 0.0
    %v1834 = vmax.f32 %v1786, 0.0
    %v1835 = vmax.f32 %v1791, 0.0
    %v1836 = vmax.f32 %v1794, 0.0
    %v1837 = vmax.f32 %v1799, 0.0
    %v1838 = vmax.f32 %v1802, 0.0
    %v1839 = vmax.f32 %v1807, 0.0
    %v1840 = vmax.f32 %v1810, 0.0
    %v1841 = vmax.f32 %v1815, 0.0
    %v1842 = vmax.f32 %v1818, 0.0
    %v1843 = vmax.f32 %v1823, 0.0
    %v1844 = vmax.f32 %v1826, 0.0
    %v1845 = vld [vmem:[%s12] sm:$0xff]
    %v1846 = vld [vmem:[%s12 + $0x8] sm:$0xff]
    %v1847 = vpack.c.bf16 %v1693, %v1692
    %v1848 = vpack.c.bf16 %v1846, %v1845
    %vm1849 = vcmask 130048
    %v1851 = vsel %vm1849, %v1847, 0
    %1853 = vmatprep.subr.bf16.mxu0 0
    %1854 = vmatpush1.bf16.msra.mxu0 %v1848
    %1855 = vmatprep.subr.bf16.mxu0 0
    %1856 = vmatpush1.bf16.msra.mxu0 0
    %1857 = vmatprep.subr.bf16.mxu0 0
    %1858 = vmatpush1.bf16.msra.mxu0 0
    %1859 = vmatprep.subr.bf16.mxu0 0
    %1860 = vmatpush1.bf16.msra.mxu0 0
    %1861 = vmatprep.subr.bf16.mxu0 0
    %1862 = vmatpush1.bf16.msra.mxu0 0
    %1863 = vmatprep.subr.bf16.mxu0 0
    %1864 = vmatpush1.bf16.msra.mxu0 0
    %1865 = vmatprep.subr.bf16.mxu0 0
    %1866 = vmatpush1.bf16.msra.mxu0 0
    %1867 = vmatprep.subr.bf16.mxu0 0
    %1868 = vmatpush1.bf16.msra.mxu0 0
    %1869 = vmatprep.subr.bf16.mxu0 0
    %1870 = vmatpush1.bf16.msra.mxu0 0
    %1871 = vmatprep.subr.bf16.mxu0 0
    %1872 = vmatpush1.bf16.msra.mxu0 0
    %1873 = vmatprep.subr.bf16.mxu0 0
    %1874 = vmatpush1.bf16.msra.mxu0 0
    %1875 = vmatprep.subr.bf16.mxu0 0
    %1876 = vmatpush1.bf16.msra.mxu0 0
    %1877 = vmatprep.subr.bf16.mxu0 0
    %1878 = vmatpush1.bf16.msra.mxu0 0
    %1879 = vmatprep.subr.bf16.mxu0 0
    %1880 = vmatpush1.bf16.msra.mxu0 0
    %1881 = vmatprep.subr.bf16.mxu0 0
    %1882 = vmatpush1.bf16.msra.mxu0 0
    %1883 = vmatprep.subr.bf16.mxu0 0
    %1884 = vmatpush1.bf16.msra.mxu0 0
    %1885 = vmatprep.mubr.bf16.mxu0 0
    %1886 = vmatmul.mubr.bf16.gmra.mrb[0].mxu0 %v1851
    %v1887 = vpop.f32.mrb[0].mxu0
    %v1888 = vadd.f32 0.0, %v1887
    %v1889 = vpop.f32.mrb[0].mxu0
    %v1890 = vpop.f32.mrb[0].mxu0
    %v1891 = vadd.f32 0.0, %v1890
    %v1892 = vpop.f32.mrb[0].mxu0
    %1893 = vdwg.mxu0
    %v1894 = vld [vmem:[%s13] sm:$0xff]
    %v1895 = vld [vmem:[%s13 + $0x8] sm:$0xff]
    %v1896 = vpack.c.bf16 %v1895, %v1894
    %1897 = vmatprep.subr.bf16.mxu0 0
    %1898 = vmatpush1.bf16.msra.mxu0 %v1896
    %1899 = vmatprep.subr.bf16.mxu0 0
    %1900 = vmatpush1.bf16.msra.mxu0 0
    %1901 = vmatprep.subr.bf16.mxu0 0
    %1902 = vmatpush1.bf16.msra.mxu0 0
    %1903 = vmatprep.subr.bf16.mxu0 0
    %1904 = vmatpush1.bf16.msra.mxu0 0
    %1905 = vmatprep.subr.bf16.mxu0 0
    %1906 = vmatpush1.bf16.msra.mxu0 0
    %1907 = vmatprep.subr.bf16.mxu0 0
    %1908 = vmatpush1.bf16.msra.mxu0 0
    %1909 = vmatprep.subr.bf16.mxu0 0
    %1910 = vmatpush1.bf16.msra.mxu0 0
    %1911 = vmatprep.subr.bf16.mxu0 0
    %1912 = vmatpush1.bf16.msra.mxu0 0
    %1913 = vmatprep.subr.bf16.mxu0 0
    %1914 = vmatpush1.bf16.msra.mxu0 0
    %1915 = vmatprep.subr.bf16.mxu0 0
    %1916 = vmatpush1.bf16.msra.mxu0 0
    %1917 = vmatprep.subr.bf16.mxu0 0
    %1918 = vmatpush1.bf16.msra.mxu0 0
    %1919 = vmatprep.subr.bf16.mxu0 0
    %1920 = vmatpush1.bf16.msra.mxu0 0
    %1921 = vmatprep.subr.bf16.mxu0 0
    %1922 = vmatpush1.bf16.msra.mxu0 0
    %1923 = vmatprep.subr.bf16.mxu0 0
    %1924 = vmatpush1.bf16.msra.mxu0 0
    %1925 = vmatprep.subr.bf16.mxu0 0
    %1926 = vmatpush1.bf16.msra.mxu0 0
    %1927 = vmatprep.subr.bf16.mxu0 0
    %1928 = vmatpush1.bf16.msra.mxu0 0
    %1929 = vmatprep.mubr.bf16.mxu0 0
    %1930 = vmatmul.mubr.bf16.gmra.mrb[0].mxu0 %v1851
    %v1931 = vpop.f32.mrb[0].mxu0
    %v1932 = vadd.f32 0.0, %v1931
    %v1933 = vpop.f32.mrb[0].mxu0
    %v1934 = vpop.f32.mrb[0].mxu0
    %v1935 = vadd.f32 0.0, %v1934
    %v1936 = vpop.f32.mrb[0].mxu0
    %1937 = vdwg.mxu0
    %v1940 = vcombine.high %v1888, %v1888
    %v1942 = vunpack.c.l.s4 1966171168
    %v1943 = vunpack.c.0.s8 %v1942
    %v1944 = vlaneseq
    %v1945 = vshrl.u32 %v1944, 7
    %v1946 = vsub.s32 %v1943, %v1945
    %v1947 = vrot.slane %v1888, %v1946
    %v1949 = vunpack.c.l.s4 1966171168
    %v1950 = vunpack.c.0.s8 %v1949
    %v1951 = vlaneseq
    %v1952 = vshrl.u32 %v1951, 7
    %v1953 = vsub.s32 %v1950, %v1952
    %v1954 = vrot.slane %v1940, %v1953
    %v1955 = vcombine.high %v1947, %v1947
    %v1956 = vcombine.high %v1954, %v1954
    %v1958 = vunpack.c.l.s4 1966171168
    %v1959 = vunpack.c.0.s8 %v1958
    %v1960 = vlaneseq
    %v1961 = vshrl.u32 %v1960, 7
    %v1962 = vsub.s32 %v1959, %v1961
    %v1963 = vrot.slane %v1947, %v1962
    %v1965 = vunpack.c.l.s4 1966171168
    %v1966 = vunpack.c.0.s8 %v1965
    %v1967 = vlaneseq
    %v1968 = vshrl.u32 %v1967, 7
    %v1969 = vsub.s32 %v1966, %v1968
    %v1970 = vrot.slane %v1954, %v1969
    %v1972 = vunpack.c.l.s4 1966171168
    %v1973 = vunpack.c.0.s8 %v1972
    %v1974 = vlaneseq
    %v1975 = vshrl.u32 %v1974, 7
    %v1976 = vsub.s32 %v1973, %v1975
    %v1977 = vrot.slane %v1955, %v1976
    %v1979 = vunpack.c.l.s4 1966171168
    %v1980 = vunpack.c.0.s8 %v1979
    %v1981 = vlaneseq
    %v1982 = vshrl.u32 %v1981, 7
    %v1983 = vsub.s32 %v1980, %v1982
    %v1984 = vrot.slane %v1956, %v1983
    %v1985 = vcombine.high %v1963, %v1963
    %v1986 = vcombine.high %v1970, %v1970
    %v1987 = vcombine.high %v1977, %v1977
    %v1988 = vcombine.high %v1984, %v1984
    %v1989 = vcombine.high %v1891, %v1891
    %v1991 = vunpack.c.l.s4 1966171168
    %v1992 = vunpack.c.0.s8 %v1991
    %v1993 = vlaneseq
    %v1994 = vshrl.u32 %v1993, 7
    %v1995 = vsub.s32 %v1992, %v1994
    %v1996 = vrot.slane %v1891, %v1995
    %v1998 = vunpack.c.l.s4 1966171168
    %v1999 = vunpack.c.0.s8 %v1998
    %v2000 = vlaneseq
    %v2001 = vshrl.u32 %v2000, 7
    %v2002 = vsub.s32 %v1999, %v2001
    %v2003 = vrot.slane %v1989, %v2002
    %v2004 = vcombine.high %v1996, %v1996
    %v2005 = vcombine.high %v2003, %v2003
    %v2007 = vunpack.c.l.s4 1966171168
    %v2008 = vunpack.c.0.s8 %v2007
    %v2009 = vlaneseq
    %v2010 = vshrl.u32 %v2009, 7
    %v2011 = vsub.s32 %v2008, %v2010
    %v2012 = vrot.slane %v1996, %v2011
    %v2014 = vunpack.c.l.s4 1966171168
    %v2015 = vunpack.c.0.s8 %v2014
    %v2016 = vlaneseq
    %v2017 = vshrl.u32 %v2016, 7
    %v2018 = vsub.s32 %v2015, %v2017
    %v2019 = vrot.slane %v2003, %v2018
    %v2021 = vunpack.c.l.s4 1966171168
    %v2022 = vunpack.c.0.s8 %v2021
    %v2023 = vlaneseq
    %v2024 = vshrl.u32 %v2023, 7
    %v2025 = vsub.s32 %v2022, %v2024
    %v2026 = vrot.slane %v2004, %v2025
    %v2028 = vunpack.c.l.s4 1966171168
    %v2029 = vunpack.c.0.s8 %v2028
    %v2030 = vlaneseq
    %v2031 = vshrl.u32 %v2030, 7
    %v2032 = vsub.s32 %v2029, %v2031
    %v2033 = vrot.slane %v2005, %v2032
    %v2034 = vcombine.high %v2012, %v2012
    %v2035 = vcombine.high %v2019, %v2019
    %v2036 = vcombine.high %v2026, %v2026
    %v2037 = vcombine.high %v2033, %v2033
    %v2038 = vlaneseq
    %v2039 = vshrl.u32 %v2038, 7
    %v2040 = vsub.s32 0, %v2039
    %v2041 = vrot.slane %v1963, %v2040
    %v2042 = vlaneseq
    %v2043 = vshrl.u32 %v2042, 7
    %v2044 = vsub.s32 0, %v2043
    %v2045 = vrot.slane %v1977, %v2044
    %v2046 = vlaneseq
    %v2047 = vshrl.u32 %v2046, 7
    %v2048 = vsub.s32 0, %v2047
    %v2049 = vrot.slane %v1985, %v2048
    %v2050 = vlaneseq
    %v2051 = vshrl.u32 %v2050, 7
    %v2052 = vsub.s32 0, %v2051
    %v2053 = vrot.slane %v1987, %v2052
    %v2054 = vlaneseq
    %v2055 = vshrl.u32 %v2054, 7
    %v2056 = vsub.s32 0, %v2055
    %v2057 = vrot.slane %v1970, %v2056
    %v2058 = vlaneseq
    %v2059 = vshrl.u32 %v2058, 7
    %v2060 = vsub.s32 0, %v2059
    %v2061 = vrot.slane %v1984, %v2060
    %v2062 = vlaneseq
    %v2063 = vshrl.u32 %v2062, 7
    %v2064 = vsub.s32 0, %v2063
    %v2065 = vrot.slane %v1986, %v2064
    %v2066 = vlaneseq
    %v2067 = vshrl.u32 %v2066, 7
    %v2068 = vsub.s32 0, %v2067
    %v2069 = vrot.slane %v1988, %v2068
    %v2070 = vlaneseq
    %v2071 = vshrl.u32 %v2070, 7
    %v2072 = vsub.s32 0, %v2071
    %v2073 = vrot.slane %v2012, %v2072
    %v2074 = vlaneseq
    %v2075 = vshrl.u32 %v2074, 7
    %v2076 = vsub.s32 0, %v2075
    %v2077 = vrot.slane %v2026, %v2076
    %v2078 = vlaneseq
    %v2079 = vshrl.u32 %v2078, 7
    %v2080 = vsub.s32 0, %v2079
    %v2081 = vrot.slane %v2034, %v2080
    %v2082 = vlaneseq
    %v2083 = vshrl.u32 %v2082, 7
    %v2084 = vsub.s32 0, %v2083
    %v2085 = vrot.slane %v2036, %v2084
    %v2086 = vlaneseq
    %v2087 = vshrl.u32 %v2086, 7
    %v2088 = vsub.s32 0, %v2087
    %v2089 = vrot.slane %v2019, %v2088
    %v2090 = vlaneseq
    %v2091 = vshrl.u32 %v2090, 7
    %v2092 = vsub.s32 0, %v2091
    %v2093 = vrot.slane %v2033, %v2092
    %v2094 = vlaneseq
    %v2095 = vshrl.u32 %v2094, 7
    %v2096 = vsub.s32 0, %v2095
    %v2097 = vrot.slane %v2035, %v2096
    %v2098 = vlaneseq
    %v2099 = vshrl.u32 %v2098, 7
    %v2100 = vsub.s32 0, %v2099
    %v2101 = vrot.slane %v2037, %v2100
    %v2118 = vadd.f32 %v2041, %v1932
    %v2119 = vadd.f32 %v2045, %v1932
    %v2120 = vadd.f32 %v2049, %v1932
    %v2121 = vadd.f32 %v2053, %v1932
    %v2122 = vadd.f32 %v2057, %v1932
    %v2123 = vadd.f32 %v2061, %v1932
    %v2124 = vadd.f32 %v2065, %v1932
    %v2125 = vadd.f32 %v2069, %v1932
    %v2126 = vadd.f32 %v2073, %v1935
    %v2127 = vadd.f32 %v2077, %v1935
    %v2128 = vadd.f32 %v2081, %v1935
    %v2129 = vadd.f32 %v2085, %v1935
    %v2130 = vadd.f32 %v2089, %v1935
    %v2131 = vadd.f32 %v2093, %v1935
    %v2132 = vadd.f32 %v2097, %v1935
    %v2133 = vadd.f32 %v2101, %v1935
    %v2134 = vadd.f32 %v2118, %v1829
    %v2135 = vadd.f32 %v2119, %v1830
    %v2136 = vadd.f32 %v2120, %v1831
    %v2137 = vadd.f32 %v2121, %v1832
    %v2138 = vadd.f32 %v2122, %v1833
    %v2139 = vadd.f32 %v2123, %v1834
    %v2140 = vadd.f32 %v2124, %v1835
    %v2141 = vadd.f32 %v2125, %v1836
    %v2142 = vadd.f32 %v2126, %v1837
    %v2143 = vadd.f32 %v2127, %v1838
    %v2144 = vadd.f32 %v2128, %v1839
    %v2145 = vadd.f32 %v2129, %v1840
    %v2146 = vadd.f32 %v2130, %v1841
    %v2147 = vadd.f32 %v2131, %v1842
    %v2148 = vadd.f32 %v2132, %v1843
    %v2149 = vadd.f32 %v2133, %v1844
    %v2150 = vld [vmem:[%s14] sm:$0x1]
    %v2152 = vlaneseq
    %v2153 = vshrl.u32 %v2152, 7
    %v2154 = vsub.s32 0, %v2153
    %v2155 = vrot.slane %v2150, %v2154
    %v2157 = vadd.f32 %v2134, %v2155
    %v2158 = vadd.f32 %v2135, %v2155
    %v2159 = vadd.f32 %v2136, %v2155
    %v2160 = vadd.f32 %v2137, %v2155
    %v2161 = vadd.f32 %v2138, %v2155
    %v2162 = vadd.f32 %v2139, %v2155
    %v2163 = vadd.f32 %v2140, %v2155
    %v2164 = vadd.f32 %v2141, %v2155
    %v2165 = vadd.f32 %v2142, %v2155
    %v2166 = vadd.f32 %v2143, %v2155
    %v2167 = vadd.f32 %v2144, %v2155
    %v2168 = vadd.f32 %v2145, %v2155
    %v2169 = vadd.f32 %v2146, %v2155
    %v2170 = vadd.f32 %v2147, %v2155
    %v2171 = vadd.f32 %v2148, %v2155
    %v2172 = vadd.f32 %v2149, %v2155
    %v2173 = vmax.f32 %v2157, 0.0
    %v2174 = vmax.f32 %v2158, 0.0
    %v2175 = vmax.f32 %v2159, 0.0
    %v2176 = vmax.f32 %v2160, 0.0
    %v2177 = vmax.f32 %v2161, 0.0
    %v2178 = vmax.f32 %v2162, 0.0
    %v2179 = vmax.f32 %v2163, 0.0
    %v2180 = vmax.f32 %v2164, 0.0
    %v2181 = vmax.f32 %v2165, 0.0
    %v2182 = vmax.f32 %v2166, 0.0
    %v2183 = vmax.f32 %v2167, 0.0
    %v2184 = vmax.f32 %v2168, 0.0
    %v2185 = vmax.f32 %v2169, 0.0
    %v2186 = vmax.f32 %v2170, 0.0
    %v2187 = vmax.f32 %v2171, 0.0
    %v2188 = vmax.f32 %v2172, 0.0
    %v2189 = vmul.f32 %v989, %v2173
    %v2190 = vmul.f32 %v996, %v2174
    %v2191 = vmul.f32 %v1003, %v2175
    %v2192 = vmul.f32 %v1010, %v2176
    %v2193 = vmul.f32 %v1017, %v2177
    %v2194 = vmul.f32 %v1024, %v2178
    %v2195 = vmul.f32 %v1031, %v2179
    %v2196 = vmul.f32 %v1038, %v2180
    %v2197 = vmul.f32 %v1045, %v2181
    %v2198 = vmul.f32 %v1052, %v2182
    %v2199 = vmul.f32 %v1059, %v2183
    %v2200 = vmul.f32 %v1066, %v2184
    %v2201 = vmul.f32 %v1073, %v2185
    %v2202 = vmul.f32 %v1080, %v2186
    %v2203 = vmul.f32 %v1087, %v2187
    %v2204 = vmul.f32 %v1094, %v2188
    %v2205 = vsel %vm1849, %v2189, 0.0
    %v2206 = vrot.slane %v2205, 4
    %v2207 = vadd.f32 %v2205, %v2206
    %v2208 = vrot.slane %v2207, 2
    %v2209 = vadd.f32 %v2207, %v2208
    %v2210 = vrot.slane %v2209, 1
    %v2211 = vadd.f32 %v2209, %v2210
    %v2212 = vsel %vm1849, %v2190, 0.0
    %v2213 = vrot.slane %v2212, 4
    %v2214 = vadd.f32 %v2212, %v2213
    %v2215 = vrot.slane %v2214, 2
    %v2216 = vadd.f32 %v2214, %v2215
    %v2217 = vrot.slane %v2216, 1
    %v2218 = vadd.f32 %v2216, %v2217
    %v2219 = vsel %vm1849, %v2191, 0.0
    %v2220 = vrot.slane %v2219, 4
    %v2221 = vadd.f32 %v2219, %v2220
    %v2222 = vrot.slane %v2221, 2
    %v2223 = vadd.f32 %v2221, %v2222
    %v2224 = vrot.slane %v2223, 1
    %v2225 = vadd.f32 %v2223, %v2224
    %v2226 = vsel %vm1849, %v2192, 0.0
    %v2227 = vrot.slane %v2226, 4
    %v2228 = vadd.f32 %v2226, %v2227
    %v2229 = vrot.slane %v2228, 2
    %v2230 = vadd.f32 %v2228, %v2229
    %v2231 = vrot.slane %v2230, 1
    %v2232 = vadd.f32 %v2230, %v2231
    %v2233 = vsel %vm1849, %v2193, 0.0
    %v2234 = vrot.slane %v2233, 4
    %v2235 = vadd.f32 %v2233, %v2234
    %v2236 = vrot.slane %v2235, 2
    %v2237 = vadd.f32 %v2235, %v2236
    %v2238 = vrot.slane %v2237, 1
    %v2239 = vadd.f32 %v2237, %v2238
    %v2240 = vsel %vm1849, %v2194, 0.0
    %v2241 = vrot.slane %v2240, 4
    %v2242 = vadd.f32 %v2240, %v2241
    %v2243 = vrot.slane %v2242, 2
    %v2244 = vadd.f32 %v2242, %v2243
    %v2245 = vrot.slane %v2244, 1
    %v2246 = vadd.f32 %v2244, %v2245
    %v2247 = vsel %vm1849, %v2195, 0.0
    %v2248 = vrot.slane %v2247, 4
    %v2249 = vadd.f32 %v2247, %v2248
    %v2250 = vrot.slane %v2249, 2
    %v2251 = vadd.f32 %v2249, %v2250
    %v2252 = vrot.slane %v2251, 1
    %v2253 = vadd.f32 %v2251, %v2252
    %v2254 = vsel %vm1849, %v2196, 0.0
    %v2255 = vrot.slane %v2254, 4
    %v2256 = vadd.f32 %v2254, %v2255
    %v2257 = vrot.slane %v2256, 2
    %v2258 = vadd.f32 %v2256, %v2257
    %v2259 = vrot.slane %v2258, 1
    %v2260 = vadd.f32 %v2258, %v2259
    %v2261 = vsel %vm1849, %v2197, 0.0
    %v2262 = vrot.slane %v2261, 4
    %v2263 = vadd.f32 %v2261, %v2262
    %v2264 = vrot.slane %v2263, 2
    %v2265 = vadd.f32 %v2263, %v2264
    %v2266 = vrot.slane %v2265, 1
    %v2267 = vadd.f32 %v2265, %v2266
    %v2268 = vsel %vm1849, %v2198, 0.0
    %v2269 = vrot.slane %v2268, 4
    %v2270 = vadd.f32 %v2268, %v2269
    %v2271 = vrot.slane %v2270, 2
    %v2272 = vadd.f32 %v2270, %v2271
    %v2273 = vrot.slane %v2272, 1
    %v2274 = vadd.f32 %v2272, %v2273
    %v2275 = vsel %vm1849, %v2199, 0.0
    %v2276 = vrot.slane %v2275, 4
    %v2277 = vadd.f32 %v2275, %v2276
    %v2278 = vrot.slane %v2277, 2
    %v2279 = vadd.f32 %v2277, %v2278
    %v2280 = vrot.slane %v2279, 1
    %v2281 = vadd.f32 %v2279, %v2280
    %v2282 = vsel %vm1849, %v2200, 0.0
    %v2283 = vrot.slane %v2282, 4
    %v2284 = vadd.f32 %v2282, %v2283
    %v2285 = vrot.slane %v2284, 2
    %v2286 = vadd.f32 %v2284, %v2285
    %v2287 = vrot.slane %v2286, 1
    %v2288 = vadd.f32 %v2286, %v2287
    %v2289 = vsel %vm1849, %v2201, 0.0
    %v2290 = vrot.slane %v2289, 4
    %v2291 = vadd.f32 %v2289, %v2290
    %v2292 = vrot.slane %v2291, 2
    %v2293 = vadd.f32 %v2291, %v2292
    %v2294 = vrot.slane %v2293, 1
    %v2295 = vadd.f32 %v2293, %v2294
    %v2296 = vsel %vm1849, %v2202, 0.0
    %v2297 = vrot.slane %v2296, 4
    %v2298 = vadd.f32 %v2296, %v2297
    %v2299 = vrot.slane %v2298, 2
    %v2300 = vadd.f32 %v2298, %v2299
    %v2301 = vrot.slane %v2300, 1
    %v2302 = vadd.f32 %v2300, %v2301
    %v2303 = vsel %vm1849, %v2203, 0.0
    %v2304 = vrot.slane %v2303, 4
    %v2305 = vadd.f32 %v2303, %v2304
    %v2306 = vrot.slane %v2305, 2
    %v2307 = vadd.f32 %v2305, %v2306
    %v2308 = vrot.slane %v2307, 1
    %v2309 = vadd.f32 %v2307, %v2308
    %v2310 = vsel %vm1849, %v2204, 0.0
    %v2311 = vrot.slane %v2310, 4
    %v2312 = vadd.f32 %v2310, %v2311
    %v2313 = vrot.slane %v2312, 2
    %v2314 = vadd.f32 %v2312, %v2313
    %v2315 = vrot.slane %v2314, 1
    %v2316 = vadd.f32 %v2314, %v2315
    %v2317 = vld [vmem:[%s15] sm:$0xff]
    %v2318 = vld [vmem:[%s15 + $0x8] sm:$0xff]
    %v2319 = vpack.c.bf16 %v2211, %v2211
    %v2320 = vpack.c.bf16 %v2218, %v2218
    %v2321 = vpack.c.bf16 %v2225, %v2225
    %v2322 = vpack.c.bf16 %v2232, %v2232
    %v2323 = vpack.c.bf16 %v2239, %v2239
    %v2324 = vpack.c.bf16 %v2246, %v2246
    %v2325 = vpack.c.bf16 %v2253, %v2253
    %v2326 = vpack.c.bf16 %v2260, %v2260
    %v2327 = vpack.c.bf16 %v2267, %v2267
    %v2328 = vpack.c.bf16 %v2274, %v2274
    %v2329 = vpack.c.bf16 %v2281, %v2281
    %v2330 = vpack.c.bf16 %v2288, %v2288
    %v2331 = vpack.c.bf16 %v2295, %v2295
    %v2332 = vpack.c.bf16 %v2302, %v2302
    %v2333 = vpack.c.bf16 %v2309, %v2309
    %v2334 = vpack.c.bf16 %v2316, %v2316
    %v2335 = vpack.c.bf16 %v2318, %v2317
    %v2352 = vunpack.c.l.b16 %v2319
    %v2353 = vunpack.c.l.b16 %v2320
    %v2354 = vunpack.c.l.b16 %v2321
    %v2355 = vunpack.c.l.b16 %v2322
    %v2356 = vunpack.c.l.b16 %v2323
    %v2357 = vunpack.c.l.b16 %v2324
    %v2358 = vunpack.c.l.b16 %v2325
    %v2359 = vunpack.c.l.b16 %v2326
    %v2360 = vunpack.c.l.b16 %v2327
    %v2361 = vunpack.c.l.b16 %v2328
    %v2362 = vunpack.c.l.b16 %v2329
    %v2363 = vunpack.c.l.b16 %v2330
    %v2364 = vunpack.c.l.b16 %v2331
    %v2365 = vunpack.c.l.b16 %v2332
    %v2366 = vunpack.c.l.b16 %v2333
    %v2367 = vunpack.c.l.b16 %v2334
    %v2368 = vsel %vm1626, %v2353, %v2352
    %v2369 = vsel %vm1628, %v2354, %v2368
    %v2370 = vsel %vm1630, %v2355, %v2369
    %v2371 = vsel %vm1632, %v2356, %v2370
    %v2372 = vsel %vm1634, %v2357, %v2371
    %v2373 = vsel %vm1636, %v2358, %v2372
    %v2374 = vsel %vm1638, %v2359, %v2373
    %v2375 = vsel %vm1626, %v2361, %v2360
    %v2376 = vsel %vm1628, %v2362, %v2375
    %v2377 = vsel %vm1630, %v2363, %v2376
    %v2378 = vsel %vm1632, %v2364, %v2377
    %v2379 = vsel %vm1634, %v2365, %v2378
    %v2380 = vsel %vm1636, %v2366, %v2379
    %v2381 = vsel %vm1638, %v2367, %v2380
    %v2382 = vpack.c.b16 %v2381, %v2374
    %v2384 = vsel %vm1849, %v2382, 0
    %2386 = vmatprep.subr.bf16.mxu0 0
    %2387 = vmatpush1.bf16.msra.mxu0 %v2335
    %2388 = vmatprep.subr.bf16.mxu0 0
    %2389 = vmatpush1.bf16.msra.mxu0 0
    %2390 = vmatprep.subr.bf16.mxu0 0
    %2391 = vmatpush1.bf16.msra.mxu0 0
    %2392 = vmatprep.subr.bf16.mxu0 0
    %2393 = vmatpush1.bf16.msra.mxu0 0
    %2394 = vmatprep.subr.bf16.mxu0 0
    %2395 = vmatpush1.bf16.msra.mxu0 0
    %2396 = vmatprep.subr.bf16.mxu0 0
    %2397 = vmatpush1.bf16.msra.mxu0 0
    %2398 = vmatprep.subr.bf16.mxu0 0
    %2399 = vmatpush1.bf16.msra.mxu0 0
    %2400 = vmatprep.subr.bf16.mxu0 0
    %2401 = vmatpush1.bf16.msra.mxu0 0
    %2402 = vmatprep.subr.bf16.mxu0 0
    %2403 = vmatpush1.bf16.msra.mxu0 0
    %2404 = vmatprep.subr.bf16.mxu0 0
    %2405 = vmatpush1.bf16.msra.mxu0 0
    %2406 = vmatprep.subr.bf16.mxu0 0
    %2407 = vmatpush1.bf16.msra.mxu0 0
    %2408 = vmatprep.subr.bf16.mxu0 0
    %2409 = vmatpush1.bf16.msra.mxu0 0
    %2410 = vmatprep.subr.bf16.mxu0 0
    %2411 = vmatpush1.bf16.msra.mxu0 0
    %2412 = vmatprep.subr.bf16.mxu0 0
    %2413 = vmatpush1.bf16.msra.mxu0 0
    %2414 = vmatprep.subr.bf16.mxu0 0
    %2415 = vmatpush1.bf16.msra.mxu0 0
    %2416 = vmatprep.subr.bf16.mxu0 0
    %2417 = vmatpush1.bf16.msra.mxu0 0
    %2418 = vmatprep.mubr.bf16.mxu0 0
    %2419 = vmatmul.mubr.bf16.gmra.mrb[0].mxu0 %v2384
    %v2420 = vpop.f32.mrb[0].mxu0
    %v2421 = vadd.f32 0.0, %v2420
    %v2422 = vpop.f32.mrb[0].mxu0
    %v2423 = vpop.f32.mrb[0].mxu0
    %v2424 = vadd.f32 0.0, %v2423
    %v2425 = vpop.f32.mrb[0].mxu0
    %2426 = vdwg.mxu0
    %v2427 = vmax.f32 %v2421, 0.0
    %v2428 = vmax.f32 %v2424, 0.0
    %2429 = vst.msk [vmem:[#allocation4] sm:$0xff] %vm1849, %v2427
    %2430 = vst.msk [vmem:[#allocation4 + $0x8] sm:$0xff] %vm1849, %v2428
    // Predicated region
    $region66: #{tpu_custom_call.1} parent=1 // pred_check
      _
    $region67: #{tpu_custom_call.1} parent=1 // pred_check_branch
      %2432 = sbr.rel (0) target = $region69
    $region68: #{tpu_custom_call.1} parent=1 // pred_region
      %s2434 = ssub.s32 256, 256
      %2435 = vsyncadd [#allocation5], %s2434
      %s2436 = sshll.u32 [#allocation4], 4
      %s2437 = int_to_ptr.vmem [resolvable:$true] %s2436
      %2442 = dma.vmem_to_hbm [thread:$0]  %s2437, 256, %s17, [#allocation5], 128, 128, 8
    $region69: #{tpu_custom_call.1} parent=1 // pred_fallthru
      _
    // Predicated region
    $region70: #{tpu_custom_call.1} parent=1 // pred_check
      _
    $region71: #{tpu_custom_call.1} parent=1 // pred_check_branch
      %2444 = sbr.rel (0) target = $region73
    $region72: #{tpu_custom_call.1} parent=1 // pred_region
      %s2446 = ssub.s32 256, 256
      %2447 = vsyncadd [#allocation7], %s2446
      %s2448 = sshll.u32 [#allocation6], 4
      %s2449 = int_to_ptr.vmem [resolvable:$true] %s2448
      %2454 = dma.vmem_to_hbm [thread:$0]  %s2449, 256, %s18, [#allocation7], 128, 128, 8
    $region73: #{tpu_custom_call.1} parent=1 // pred_fallthru
      _
    // Predicated region
    $region74: #{tpu_custom_call.1} parent=1 // pred_check
      _
    $region75: #{tpu_custom_call.1} parent=1 // pred_check_branch
      %2456 = sbr.rel (0) target = $region77
    $region76: #{tpu_custom_call.1} parent=1 // pred_region
      %2457 = dma.done [#allocation5], 256
    $region77: #{tpu_custom_call.1} parent=1 // pred_fallthru
      _
    // Predicated region
    $region78: #{tpu_custom_call.1} parent=1 // pred_check
      _
    $region79: #{tpu_custom_call.1} parent=1 // pred_check_branch
      %2459 = sbr.rel (0) target = $region81
    $region80: #{tpu_custom_call.1} parent=1 // pred_region
      %2460 = dma.done [#allocation7], 256
    $region81: #{tpu_custom_call.1} parent=1 // pred_fallthru
      _
    %2461 = vsyncpa [#allocation5], 1
    %2462 = vsyncpa [#allocation7], 1

</llo_original>
